<compile_context>
chip_gen: v7x
topology: tpu7x:2x2x1
jax: 0.10.0
libtpu: 0.0.40
codegen_flags: <defaults>
</compile_context>

<pallas_src>
import jax
import jax.numpy as jnp
from jax.experimental import pallas as pl
from jax.experimental.pallas import tpu as pltpu

H = 7          # spatial height of the module's input
W = 7          # spatial width
X_OFF = 8      # sublane-aligned scratch column where the real data starts
PAD_W = 16     # scratch width: cols 0..6 unused, 7 = left halo, 8..14 = data, 15 = right halo


def dwconv3x3_kernel(x_ref, w_ref, o_ref, xpad_ref):
    """x_ref:    (H, W, TC)       input tile, channels on the lane axis
       w_ref:    (9, TC)          per-channel 3x3 taps, row-major kh*3+kw
       o_ref:    (H, W, TC)       output tile
       xpad_ref: (H, PAD_W, TC)   VMEM scratch holding W-padded rows (f32)
    """
    tc = o_ref.shape[-1]

    # Build the zero-padded rows in VMEM (no HBM traffic for the padding).
    # Only columns 7..15 are ever read; zeroing the whole (small) scratch costs
    # the same number of store ops as zeroing just the two halo columns.
    xpad_ref[...] = jnp.zeros_like(xpad_ref)
    xpad_ref[:, X_OFF:X_OFF + W, :] = x_ref[...].astype(jnp.float32)

    # Hoist the weight reads: one (9, TC) load per grid step.
    taps = w_ref[...].astype(jnp.float32)

    # Per-output-row accumulation keeps live vregs small regardless of TC.
    for h in range(H):
        acc = None
        for kh in range(3):
            r = h + kh - 1
            if r < 0 or r >= H:
                continue                      # zero-padded rows contribute nothing
            for kw in range(3):
                # out col w <- input col (w + kw - 1) <- scratch col (X_OFF - 1 + kw + w)
                c0 = X_OFF - 1 + kw
                patch = xpad_ref[r, c0:c0 + W, :]            # (W, TC) f32
                k = kh * 3 + kw
                term = patch * taps[k:k + 1, :]              # (1, TC) broadcast
                acc = term if acc is None else acc + term
        o_ref[h, :, :] = acc.astype(o_ref.dtype)


def _pick_tc(C):
    # Prefer a 2-step grid (one step per TensorCore on megacore parts); a
    # full-channel single step is the fallback (a full-dim block is always
    # legal even when C is not a multiple of 128).
    half = C // 2
    if C % 2 == 0 and half % 128 == 0:
        return half
    return C


@jax.jit
def depthwise_conv3x3(x_nchw, weight):
    """x_nchw: (1, C, H, W) float32; weight: (C, 1, 3, 3) float32 (OIHW depthwise)."""
    N, C, Hx, Wx = x_nchw.shape
    assert N == 1, "kernel written for batch=1 (as in the reference module)"
    assert (Hx, Wx) == (H, W)
    tc = _pick_tc(C)

    # Layout glue (a single fused XLA pass each under jit): channels-last
    # activation, taps flattened to (9, C).
    x_hwc = jnp.transpose(x_nchw[0], (1, 2, 0))               # (H, W, C)
    w_taps = jnp.transpose(weight.reshape(C, 9), (1, 0))      # (9, C)

    out = pl.pallas_call(
        dwconv3x3_kernel,
        out_shape=jax.ShapeDtypeStruct((H, W, C), x_nchw.dtype),
        grid=(C // tc,),
        in_specs=[
            pl.BlockSpec((H, W, tc), lambda c: (0, 0, c)),
            pl.BlockSpec((9, tc), lambda c: (0, c)),
        ],
        out_specs=pl.BlockSpec((H, W, tc), lambda c: (0, 0, c)),
        scratch_shapes=[pltpu.VMEM((H, PAD_W, tc), jnp.float32)],
        compiler_params=pltpu.CompilerParams(
            dimension_semantics=("parallel",)),
    )(x_hwc, w_taps)

    # Back to NCHW; no crop needed (output width is exactly W).
    return jnp.transpose(out, (2, 0, 1))[None]


if __name__ == "__main__":
    C = 2304

    key = jax.random.PRNGKey(0)
    kx, kw = jax.random.split(key)
    x = jax.random.normal(kx, (1, C, H, W), dtype=jnp.float32)
    # Deterministic weight init (kaiming-uniform-like scale for fan_in = 9).
    bound = 1.0 / 3.0
    weight = jax.random.uniform(kw, (C, 1, 3, 3), dtype=jnp.float32,
                                minval=-bound, maxval=bound)

    y = depthwise_conv3x3(x, weight)
    y = jax.block_until_ready(y)

    # Reference check against XLA's grouped conv.
    ref = jax.lax.conv_general_dilated(
        x, weight, window_strides=(1, 1), padding=((1, 1), (1, 1)),
        feature_group_count=C, dimension_numbers=("NCHW", "OIHW", "NCHW"))
    assert y.shape == (1, C, H, W)
    assert jnp.allclose(y, ref, atol=1e-5, rtol=1e-5)

    print("KERNEL_OK")
</pallas_src>

<mosaic_0001>
module attributes {stable_mosaic.version = 11 : i64} {
  func.func @dwconv3x3_kernel(%arg0: i32, %arg1: memref<7x7x1152xf32, #tpu.memory_space<vmem>>, %arg2: memref<9x1152xf32, #tpu.memory_space<vmem>>, %arg3: memref<7x7x1152xf32, #tpu.memory_space<vmem>>, %arg4: memref<7x16x1152xf32, #tpu.memory_space<vmem>>) attributes {dimension_semantics = [#tpu.dimension_semantics<parallel>], iteration_bounds = array<i64: 2>, scalar_prefetch = 0 : i64, scratch_operands = 1 : i64, tpu.core_type = #tpu.core_type<tc>, window_params = [{transform_indices = @transform_0, window_bounds = array<i64: 7, 7, 1152>}, {transform_indices = @transform_1, window_bounds = array<i64: 9, 1152>}, {transform_indices = @transform_2, window_bounds = array<i64: 7, 7, 1152>}]} {
    %cst = arith.constant 0.000000e+00 : f32
    %0 = vector.broadcast %cst : f32 to vector<7x16x1152xf32>
    %c0 = arith.constant 0 : index
    %c0_0 = arith.constant 0 : index
    %c0_1 = arith.constant 0 : index
    %1 = vector.load %arg4[%c0, %c0_0, %c0_1] : memref<7x16x1152xf32, #tpu.memory_space<vmem>>, vector<7x16x1152xf32>
    tpu.vector_store %arg4[%c0, %c0_0, %c0_1], %0 {strides = array<i32>} : memref<7x16x1152xf32, #tpu.memory_space<vmem>>, vector<7x16x1152xf32>,
    %c0_2 = arith.constant 0 : index
    %c0_3 = arith.constant 0 : index
    %c0_4 = arith.constant 0 : index
    %2 = vector.load %arg1[%c0_2, %c0_3, %c0_4] : memref<7x7x1152xf32, #tpu.memory_space<vmem>>, vector<7x7x1152xf32>
    %c0_5 = arith.constant 0 : index
    %c8 = arith.constant 8 : index
    %c0_6 = arith.constant 0 : index
    %3 = vector.load %arg4[%c0_5, %c8, %c0_6] : memref<7x16x1152xf32, #tpu.memory_space<vmem>>, vector<7x7x1152xf32>
    tpu.vector_store %arg4[%c0_5, %c8, %c0_6], %2 {strides = array<i32>} : memref<7x16x1152xf32, #tpu.memory_space<vmem>>, vector<7x7x1152xf32>,
    %c0_7 = arith.constant 0 : index
    %c0_8 = arith.constant 0 : index
    %4 = vector.load %arg2[%c0_7, %c0_8] : memref<9x1152xf32, #tpu.memory_space<vmem>>, vector<9x1152xf32>
    %c0_9 = arith.constant 0 : index
    %c7 = arith.constant 7 : index
    %c0_10 = arith.constant 0 : index
    %5 = vector.load %arg4[%c0_9, %c7, %c0_10] : memref<7x16x1152xf32, #tpu.memory_space<vmem>>, vector<1x7x1152xf32>
    %6 = vector.shape_cast %5 : vector<1x7x1152xf32> to vector<7x1152xf32>
    %7 = vector.extract_strided_slice %4 {offsets = [3, 0], sizes = [1, 1152], strides = [1, 1]} : vector<9x1152xf32> to vector<1x1152xf32>
    %8 = vector.broadcast %7 : vector<1x1152xf32> to vector<7x1152xf32>
    %9 = arith.mulf %6, %8 : vector<7x1152xf32>
    %c0_11 = arith.constant 0 : index
    %c8_12 = arith.constant 8 : index
    %c0_13 = arith.constant 0 : index
    %10 = vector.load %arg4[%c0_11, %c8_12, %c0_13] : memref<7x16x1152xf32, #tpu.memory_space<vmem>>, vector<1x7x1152xf32>
    %11 = vector.shape_cast %10 : vector<1x7x1152xf32> to vector<7x1152xf32>
    %12 = vector.extract_strided_slice %4 {offsets = [4, 0], sizes = [1, 1152], strides = [1, 1]} : vector<9x1152xf32> to vector<1x1152xf32>
    %13 = vector.broadcast %12 : vector<1x1152xf32> to vector<7x1152xf32>
    %14 = arith.mulf %11, %13 : vector<7x1152xf32>
    %15 = arith.addf %9, %14 : vector<7x1152xf32>
    %c0_14 = arith.constant 0 : index
    %c9 = arith.constant 9 : index
    %c0_15 = arith.constant 0 : index
    %16 = vector.load %arg4[%c0_14, %c9, %c0_15] : memref<7x16x1152xf32, #tpu.memory_space<vmem>>, vector<1x7x1152xf32>
    %17 = vector.shape_cast %16 : vector<1x7x1152xf32> to vector<7x1152xf32>
    %18 = vector.extract_strided_slice %4 {offsets = [5, 0], sizes = [1, 1152], strides = [1, 1]} : vector<9x1152xf32> to vector<1x1152xf32>
    %19 = vector.broadcast %18 : vector<1x1152xf32> to vector<7x1152xf32>
    %20 = arith.mulf %17, %19 : vector<7x1152xf32>
    %21 = arith.addf %15, %20 : vector<7x1152xf32>
    %c1 = arith.constant 1 : index
    %c7_16 = arith.constant 7 : index
    %c0_17 = arith.constant 0 : index
    %22 = vector.load %arg4[%c1, %c7_16, %c0_17] : memref<7x16x1152xf32, #tpu.memory_space<vmem>>, vector<1x7x1152xf32>
    %23 = vector.shape_cast %22 : vector<1x7x1152xf32> to vector<7x1152xf32>
    %24 = vector.extract_strided_slice %4 {offsets = [6, 0], sizes = [1, 1152], strides = [1, 1]} : vector<9x1152xf32> to vector<1x1152xf32>
    %25 = vector.broadcast %24 : vector<1x1152xf32> to vector<7x1152xf32>
    %26 = arith.mulf %23, %25 : vector<7x1152xf32>
    %27 = arith.addf %21, %26 : vector<7x1152xf32>
    %c1_18 = arith.constant 1 : index
    %c8_19 = arith.constant 8 : index
    %c0_20 = arith.constant 0 : index
    %28 = vector.load %arg4[%c1_18, %c8_19, %c0_20] : memref<7x16x1152xf32, #tpu.memory_space<vmem>>, vector<1x7x1152xf32>
    %29 = vector.shape_cast %28 : vector<1x7x1152xf32> to vector<7x1152xf32>
    %30 = vector.extract_strided_slice %4 {offsets = [7, 0], sizes = [1, 1152], strides = [1, 1]} : vector<9x1152xf32> to vector<1x1152xf32>
    %31 = vector.broadcast %30 : vector<1x1152xf32> to vector<7x1152xf32>
    %32 = arith.mulf %29, %31 : vector<7x1152xf32>
    %33 = arith.addf %27, %32 : vector<7x1152xf32>
    %c1_21 = arith.constant 1 : index
    %c9_22 = arith.constant 9 : index
    %c0_23 = arith.constant 0 : index
    %34 = vector.load %arg4[%c1_21, %c9_22, %c0_23] : memref<7x16x1152xf32, #tpu.memory_space<vmem>>, vector<1x7x1152xf32>
    %35 = vector.shape_cast %34 : vector<1x7x1152xf32> to vector<7x1152xf32>
    %36 = vector.extract_strided_slice %4 {offsets = [8, 0], sizes = [1, 1152], strides = [1, 1]} : vector<9x1152xf32> to vector<1x1152xf32>
    %37 = vector.broadcast %36 : vector<1x1152xf32> to vector<7x1152xf32>
    %38 = arith.mulf %35, %37 : vector<7x1152xf32>
    %39 = arith.addf %33, %38 : vector<7x1152xf32>
    %c0_24 = arith.constant 0 : index
    %c0_25 = arith.constant 0 : index
    %c0_26 = arith.constant 0 : index
    %40 = vector.load %arg3[%c0_24, %c0_25, %c0_26] : memref<7x7x1152xf32, #tpu.memory_space<vmem>>, vector<1x7x1152xf32>
    %41 = vector.shape_cast %40 : vector<1x7x1152xf32> to vector<7x1152xf32>
    %42 = vector.shape_cast %39 : vector<7x1152xf32> to vector<1x7x1152xf32>
    tpu.vector_store %arg3[%c0_24, %c0_25, %c0_26], %42 {strides = array<i32>} : memref<7x7x1152xf32, #tpu.memory_space<vmem>>, vector<1x7x1152xf32>,
    %c0_27 = arith.constant 0 : index
    %c7_28 = arith.constant 7 : index
    %c0_29 = arith.constant 0 : index
    %43 = vector.load %arg4[%c0_27, %c7_28, %c0_29] : memref<7x16x1152xf32, #tpu.memory_space<vmem>>, vector<1x7x1152xf32>
    %44 = vector.shape_cast %43 : vector<1x7x1152xf32> to vector<7x1152xf32>
    %45 = vector.extract_strided_slice %4 {offsets = [0, 0], sizes = [1, 1152], strides = [1, 1]} : vector<9x1152xf32> to vector<1x1152xf32>
    %46 = vector.broadcast %45 : vector<1x1152xf32> to vector<7x1152xf32>
    %47 = arith.mulf %44, %46 : vector<7x1152xf32>
    %c0_30 = arith.constant 0 : index
    %c8_31 = arith.constant 8 : index
    %c0_32 = arith.constant 0 : index
    %48 = vector.load %arg4[%c0_30, %c8_31, %c0_32] : memref<7x16x1152xf32, #tpu.memory_space<vmem>>, vector<1x7x1152xf32>
    %49 = vector.shape_cast %48 : vector<1x7x1152xf32> to vector<7x1152xf32>
    %50 = vector.extract_strided_slice %4 {offsets = [1, 0], sizes = [1, 1152], strides = [1, 1]} : vector<9x1152xf32> to vector<1x1152xf32>
    %51 = vector.broadcast %50 : vector<1x1152xf32> to vector<7x1152xf32>
    %52 = arith.mulf %49, %51 : vector<7x1152xf32>
    %53 = arith.addf %47, %52 : vector<7x1152xf32>
    %c0_33 = arith.constant 0 : index
    %c9_34 = arith.constant 9 : index
    %c0_35 = arith.constant 0 : index
    %54 = vector.load %arg4[%c0_33, %c9_34, %c0_35] : memref<7x16x1152xf32, #tpu.memory_space<vmem>>, vector<1x7x1152xf32>
    %55 = vector.shape_cast %54 : vector<1x7x1152xf32> to vector<7x1152xf32>
    %56 = vector.extract_strided_slice %4 {offsets = [2, 0], sizes = [1, 1152], strides = [1, 1]} : vector<9x1152xf32> to vector<1x1152xf32>
    %57 = vector.broadcast %56 : vector<1x1152xf32> to vector<7x1152xf32>
    %58 = arith.mulf %55, %57 : vector<7x1152xf32>
    %59 = arith.addf %53, %58 : vector<7x1152xf32>
    %c1_36 = arith.constant 1 : index
    %c7_37 = arith.constant 7 : index
    %c0_38 = arith.constant 0 : index
    %60 = vector.load %arg4[%c1_36, %c7_37, %c0_38] : memref<7x16x1152xf32, #tpu.memory_space<vmem>>, vector<1x7x1152xf32>
    %61 = vector.shape_cast %60 : vector<1x7x1152xf32> to vector<7x1152xf32>
    %62 = vector.extract_strided_slice %4 {offsets = [3, 0], sizes = [1, 1152], strides = [1, 1]} : vector<9x1152xf32> to vector<1x1152xf32>
    %63 = vector.broadcast %62 : vector<1x1152xf32> to vector<7x1152xf32>
    %64 = arith.mulf %61, %63 : vector<7x1152xf32>
    %65 = arith.addf %59, %64 : vector<7x1152xf32>
    %c1_39 = arith.constant 1 : index
    %c8_40 = arith.constant 8 : index
    %c0_41 = arith.constant 0 : index
    %66 = vector.load %arg4[%c1_39, %c8_40, %c0_41] : memref<7x16x1152xf32, #tpu.memory_space<vmem>>, vector<1x7x1152xf32>
    %67 = vector.shape_cast %66 : vector<1x7x1152xf32> to vector<7x1152xf32>
    %68 = vector.extract_strided_slice %4 {offsets = [4, 0], sizes = [1, 1152], strides = [1, 1]} : vector<9x1152xf32> to vector<1x1152xf32>
    %69 = vector.broadcast %68 : vector<1x1152xf32> to vector<7x1152xf32>
    %70 = arith.mulf %67, %69 : vector<7x1152xf32>
    %71 = arith.addf %65, %70 : vector<7x1152xf32>
    %c1_42 = arith.constant 1 : index
    %c9_43 = arith.constant 9 : index
    %c0_44 = arith.constant 0 : index
    %72 = vector.load %arg4[%c1_42, %c9_43, %c0_44] : memref<7x16x1152xf32, #tpu.memory_space<vmem>>, vector<1x7x1152xf32>
    %73 = vector.shape_cast %72 : vector<1x7x1152xf32> to vector<7x1152xf32>
    %74 = vector.extract_strided_slice %4 {offsets = [5, 0], sizes = [1, 1152], strides = [1, 1]} : vector<9x1152xf32> to vector<1x1152xf32>
    %75 = vector.broadcast %74 : vector<1x1152xf32> to vector<7x1152xf32>
    %76 = arith.mulf %73, %75 : vector<7x1152xf32>
    %77 = arith.addf %71, %76 : vector<7x1152xf32>
    %c2 = arith.constant 2 : index
    %c7_45 = arith.constant 7 : index
    %c0_46 = arith.constant 0 : index
    %78 = vector.load %arg4[%c2, %c7_45, %c0_46] : memref<7x16x1152xf32, #tpu.memory_space<vmem>>, vector<1x7x1152xf32>
    %79 = vector.shape_cast %78 : vector<1x7x1152xf32> to vector<7x1152xf32>
    %80 = vector.extract_strided_slice %4 {offsets = [6, 0], sizes = [1, 1152], strides = [1, 1]} : vector<9x1152xf32> to vector<1x1152xf32>
    %81 = vector.broadcast %80 : vector<1x1152xf32> to vector<7x1152xf32>
    %82 = arith.mulf %79, %81 : vector<7x1152xf32>
    %83 = arith.addf %77, %82 : vector<7x1152xf32>
    %c2_47 = arith.constant 2 : index
    %c8_48 = arith.constant 8 : index
    %c0_49 = arith.constant 0 : index
    %84 = vector.load %arg4[%c2_47, %c8_48, %c0_49] : memref<7x16x1152xf32, #tpu.memory_space<vmem>>, vector<1x7x1152xf32>
    %85 = vector.shape_cast %84 : vector<1x7x1152xf32> to vector<7x1152xf32>
    %86 = vector.extract_strided_slice %4 {offsets = [7, 0], sizes = [1, 1152], strides = [1, 1]} : vector<9x1152xf32> to vector<1x1152xf32>
    %87 = vector.broadcast %86 : vector<1x1152xf32> to vector<7x1152xf32>
    %88 = arith.mulf %85, %87 : vector<7x1152xf32>
    %89 = arith.addf %83, %88 : vector<7x1152xf32>
    %c2_50 = arith.constant 2 : index
    %c9_51 = arith.constant 9 : index
    %c0_52 = arith.constant 0 : index
    %90 = vector.load %arg4[%c2_50, %c9_51, %c0_52] : memref<7x16x1152xf32, #tpu.memory_space<vmem>>, vector<1x7x1152xf32>
    %91 = vector.shape_cast %90 : vector<1x7x1152xf32> to vector<7x1152xf32>
    %92 = vector.extract_strided_slice %4 {offsets = [8, 0], sizes = [1, 1152], strides = [1, 1]} : vector<9x1152xf32> to vector<1x1152xf32>
    %93 = vector.broadcast %92 : vector<1x1152xf32> to vector<7x1152xf32>
    %94 = arith.mulf %91, %93 : vector<7x1152xf32>
    %95 = arith.addf %89, %94 : vector<7x1152xf32>
    %c1_53 = arith.constant 1 : index
    %c0_54 = arith.constant 0 : index
    %c0_55 = arith.constant 0 : index
    %96 = vector.load %arg3[%c1_53, %c0_54, %c0_55] : memref<7x7x1152xf32, #tpu.memory_space<vmem>>, vector<1x7x1152xf32>
    %97 = vector.shape_cast %96 : vector<1x7x1152xf32> to vector<7x1152xf32>
    %98 = vector.shape_cast %95 : vector<7x1152xf32> to vector<1x7x1152xf32>
    tpu.vector_store %arg3[%c1_53, %c0_54, %c0_55], %98 {strides = array<i32>} : memref<7x7x1152xf32, #tpu.memory_space<vmem>>, vector<1x7x1152xf32>,
    %c1_56 = arith.constant 1 : index
    %c7_57 = arith.constant 7 : index
    %c0_58 = arith.constant 0 : index
    %99 = vector.load %arg4[%c1_56, %c7_57, %c0_58] : memref<7x16x1152xf32, #tpu.memory_space<vmem>>, vector<1x7x1152xf32>
    %100 = vector.shape_cast %99 : vector<1x7x1152xf32> to vector<7x1152xf32>
    %101 = vector.extract_strided_slice %4 {offsets = [0, 0], sizes = [1, 1152], strides = [1, 1]} : vector<9x1152xf32> to vector<1x1152xf32>
    %102 = vector.broadcast %101 : vector<1x1152xf32> to vector<7x1152xf32>
    %103 = arith.mulf %100, %102 : vector<7x1152xf32>
    %c1_59 = arith.constant 1 : index
    %c8_60 = arith.constant 8 : index
    %c0_61 = arith.constant 0 : index
    %104 = vector.load %arg4[%c1_59, %c8_60, %c0_61] : memref<7x16x1152xf32, #tpu.memory_space<vmem>>, vector<1x7x1152xf32>
    %105 = vector.shape_cast %104 : vector<1x7x1152xf32> to vector<7x1152xf32>
    %106 = vector.extract_strided_slice %4 {offsets = [1, 0], sizes = [1, 1152], strides = [1, 1]} : vector<9x1152xf32> to vector<1x1152xf32>
    %107 = vector.broadcast %106 : vector<1x1152xf32> to vector<7x1152xf32>
    %108 = arith.mulf %105, %107 : vector<7x1152xf32>
    %109 = arith.addf %103, %108 : vector<7x1152xf32>
    %c1_62 = arith.constant 1 : index
    %c9_63 = arith.constant 9 : index
    %c0_64 = arith.constant 0 : index
    %110 = vector.load %arg4[%c1_62, %c9_63, %c0_64] : memref<7x16x1152xf32, #tpu.memory_space<vmem>>, vector<1x7x1152xf32>
    %111 = vector.shape_cast %110 : vector<1x7x1152xf32> to vector<7x1152xf32>
    %112 = vector.extract_strided_slice %4 {offsets = [2, 0], sizes = [1, 1152], strides = [1, 1]} : vector<9x1152xf32> to vector<1x1152xf32>
    %113 = vector.broadcast %112 : vector<1x1152xf32> to vector<7x1152xf32>
    %114 = arith.mulf %111, %113 : vector<7x1152xf32>
    %115 = arith.addf %109, %114 : vector<7x1152xf32>
    %c2_65 = arith.constant 2 : index
    %c7_66 = arith.constant 7 : index
    %c0_67 = arith.constant 0 : index
    %116 = vector.load %arg4[%c2_65, %c7_66, %c0_67] : memref<7x16x1152xf32, #tpu.memory_space<vmem>>, vector<1x7x1152xf32>
    %117 = vector.shape_cast %116 : vector<1x7x1152xf32> to vector<7x1152xf32>
    %118 = vector.extract_strided_slice %4 {offsets = [3, 0], sizes = [1, 1152], strides = [1, 1]} : vector<9x1152xf32> to vector<1x1152xf32>
    %119 = vector.broadcast %118 : vector<1x1152xf32> to vector<7x1152xf32>
    %120 = arith.mulf %117, %119 : vector<7x1152xf32>
    %121 = arith.addf %115, %120 : vector<7x1152xf32>
    %c2_68 = arith.constant 2 : index
    %c8_69 = arith.constant 8 : index
    %c0_70 = arith.constant 0 : index
    %122 = vector.load %arg4[%c2_68, %c8_69, %c0_70] : memref<7x16x1152xf32, #tpu.memory_space<vmem>>, vector<1x7x1152xf32>
    %123 = vector.shape_cast %122 : vector<1x7x1152xf32> to vector<7x1152xf32>
    %124 = vector.extract_strided_slice %4 {offsets = [4, 0], sizes = [1, 1152], strides = [1, 1]} : vector<9x1152xf32> to vector<1x1152xf32>
    %125 = vector.broadcast %124 : vector<1x1152xf32> to vector<7x1152xf32>
    %126 = arith.mulf %123, %125 : vector<7x1152xf32>
    %127 = arith.addf %121, %126 : vector<7x1152xf32>
    %c2_71 = arith.constant 2 : index
    %c9_72 = arith.constant 9 : index
    %c0_73 = arith.constant 0 : index
    %128 = vector.load %arg4[%c2_71, %c9_72, %c0_73] : memref<7x16x1152xf32, #tpu.memory_space<vmem>>, vector<1x7x1152xf32>
    %129 = vector.shape_cast %128 : vector<1x7x1152xf32> to vector<7x1152xf32>
    %130 = vector.extract_strided_slice %4 {offsets = [5, 0], sizes = [1, 1152], strides = [1, 1]} : vector<9x1152xf32> to vector<1x1152xf32>
    %131 = vector.broadcast %130 : vector<1x1152xf32> to vector<7x1152xf32>
    %132 = arith.mulf %129, %131 : vector<7x1152xf32>
    %133 = arith.addf %127, %132 : vector<7x1152xf32>
    %c3 = arith.constant 3 : index
    %c7_74 = arith.constant 7 : index
    %c0_75 = arith.constant 0 : index
    %134 = vector.load %arg4[%c3, %c7_74, %c0_75] : memref<7x16x1152xf32, #tpu.memory_space<vmem>>, vector<1x7x1152xf32>
    %135 = vector.shape_cast %134 : vector<1x7x1152xf32> to vector<7x1152xf32>
    %136 = vector.extract_strided_slice %4 {offsets = [6, 0], sizes = [1, 1152], strides = [1, 1]} : vector<9x1152xf32> to vector<1x1152xf32>
    %137 = vector.broadcast %136 : vector<1x1152xf32> to vector<7x1152xf32>
    %138 = arith.mulf %135, %137 : vector<7x1152xf32>
    %139 = arith.addf %133, %138 : vector<7x1152xf32>
    %c3_76 = arith.constant 3 : index
    %c8_77 = arith.constant 8 : index
    %c0_78 = arith.constant 0 : index
    %140 = vector.load %arg4[%c3_76, %c8_77, %c0_78] : memref<7x16x1152xf32, #tpu.memory_space<vmem>>, vector<1x7x1152xf32>
    %141 = vector.shape_cast %140 : vector<1x7x1152xf32> to vector<7x1152xf32>
    %142 = vector.extract_strided_slice %4 {offsets = [7, 0], sizes = [1, 1152], strides = [1, 1]} : vector<9x1152xf32> to vector<1x1152xf32>
    %143 = vector.broadcast %142 : vector<1x1152xf32> to vector<7x1152xf32>
    %144 = arith.mulf %141, %143 : vector<7x1152xf32>
    %145 = arith.addf %139, %144 : vector<7x1152xf32>
    %c3_79 = arith.constant 3 : index
    %c9_80 = arith.constant 9 : index
    %c0_81 = arith.constant 0 : index
    %146 = vector.load %arg4[%c3_79, %c9_80, %c0_81] : memref<7x16x1152xf32, #tpu.memory_space<vmem>>, vector<1x7x1152xf32>
    %147 = vector.shape_cast %146 : vector<1x7x1152xf32> to vector<7x1152xf32>
    %148 = vector.extract_strided_slice %4 {offsets = [8, 0], sizes = [1, 1152], strides = [1, 1]} : vector<9x1152xf32> to vector<1x1152xf32>
    %149 = vector.broadcast %148 : vector<1x1152xf32> to vector<7x1152xf32>
    %150 = arith.mulf %147, %149 : vector<7x1152xf32>
    %151 = arith.addf %145, %150 : vector<7x1152xf32>
    %c2_82 = arith.constant 2 : index
    %c0_83 = arith.constant 0 : index
    %c0_84 = arith.constant 0 : index
    %152 = vector.load %arg3[%c2_82, %c0_83, %c0_84] : memref<7x7x1152xf32, #tpu.memory_space<vmem>>, vector<1x7x1152xf32>
    %153 = vector.shape_cast %152 : vector<1x7x1152xf32> to vector<7x1152xf32>
    %154 = vector.shape_cast %151 : vector<7x1152xf32> to vector<1x7x1152xf32>
    tpu.vector_store %arg3[%c2_82, %c0_83, %c0_84], %154 {strides = array<i32>} : memref<7x7x1152xf32, #tpu.memory_space<vmem>>, vector<1x7x1152xf32>,
    %c2_85 = arith.constant 2 : index
    %c7_86 = arith.constant 7 : index
    %c0_87 = arith.constant 0 : index
    %155 = vector.load %arg4[%c2_85, %c7_86, %c0_87] : memref<7x16x1152xf32, #tpu.memory_space<vmem>>, vector<1x7x1152xf32>
    %156 = vector.shape_cast %155 : vector<1x7x1152xf32> to vector<7x1152xf32>
    %157 = vector.extract_strided_slice %4 {offsets = [0, 0], sizes = [1, 1152], strides = [1, 1]} : vector<9x1152xf32> to vector<1x1152xf32>
    %158 = vector.broadcast %157 : vector<1x1152xf32> to vector<7x1152xf32>
    %159 = arith.mulf %156, %158 : vector<7x1152xf32>
    %c2_88 = arith.constant 2 : index
    %c8_89 = arith.constant 8 : index
    %c0_90 = arith.constant 0 : index
    %160 = vector.load %arg4[%c2_88, %c8_89, %c0_90] : memref<7x16x1152xf32, #tpu.memory_space<vmem>>, vector<1x7x1152xf32>
    %161 = vector.shape_cast %160 : vector<1x7x1152xf32> to vector<7x1152xf32>
    %162 = vector.extract_strided_slice %4 {offsets = [1, 0], sizes = [1, 1152], strides = [1, 1]} : vector<9x1152xf32> to vector<1x1152xf32>
    %163 = vector.broadcast %162 : vector<1x1152xf32> to vector<7x1152xf32>
    %164 = arith.mulf %161, %163 : vector<7x1152xf32>
    %165 = arith.addf %159, %164 : vector<7x1152xf32>
    %c2_91 = arith.constant 2 : index
    %c9_92 = arith.constant 9 : index
    %c0_93 = arith.constant 0 : index
    %166 = vector.load %arg4[%c2_91, %c9_92, %c0_93] : memref<7x16x1152xf32, #tpu.memory_space<vmem>>, vector<1x7x1152xf32>
    %167 = vector.shape_cast %166 : vector<1x7x1152xf32> to vector<7x1152xf32>
    %168 = vector.extract_strided_slice %4 {offsets = [2, 0], sizes = [1, 1152], strides = [1, 1]} : vector<9x1152xf32> to vector<1x1152xf32>
    %169 = vector.broadcast %168 : vector<1x1152xf32> to vector<7x1152xf32>
    %170 = arith.mulf %167, %169 : vector<7x1152xf32>
    %171 = arith.addf %165, %170 : vector<7x1152xf32>
    %c3_94 = arith.constant 3 : index
    %c7_95 = arith.constant 7 : index
    %c0_96 = arith.constant 0 : index
    %172 = vector.load %arg4[%c3_94, %c7_95, %c0_96] : memref<7x16x1152xf32, #tpu.memory_space<vmem>>, vector<1x7x1152xf32>
    %173 = vector.shape_cast %172 : vector<1x7x1152xf32> to vector<7x1152xf32>
    %174 = vector.extract_strided_slice %4 {offsets = [3, 0], sizes = [1, 1152], strides = [1, 1]} : vector<9x1152xf32> to vector<1x1152xf32>
    %175 = vector.broadcast %174 : vector<1x1152xf32> to vector<7x1152xf32>
    %176 = arith.mulf %173, %175 : vector<7x1152xf32>
    %177 = arith.addf %171, %176 : vector<7x1152xf32>
    %c3_97 = arith.constant 3 : index
    %c8_98 = arith.constant 8 : index
    %c0_99 = arith.constant 0 : index
    %178 = vector.load %arg4[%c3_97, %c8_98, %c0_99] : memref<7x16x1152xf32, #tpu.memory_space<vmem>>, vector<1x7x1152xf32>
    %179 = vector.shape_cast %178 : vector<1x7x1152xf32> to vector<7x1152xf32>
    %180 = vector.extract_strided_slice %4 {offsets = [4, 0], sizes = [1, 1152], strides = [1, 1]} : vector<9x1152xf32> to vector<1x1152xf32>
    %181 = vector.broadcast %180 : vector<1x1152xf32> to vector<7x1152xf32>
    %182 = arith.mulf %179, %181 : vector<7x1152xf32>
    %183 = arith.addf %177, %182 : vector<7x1152xf32>
    %c3_100 = arith.constant 3 : index
    %c9_101 = arith.constant 9 : index
    %c0_102 = arith.constant 0 : index
    %184 = vector.load %arg4[%c3_100, %c9_101, %c0_102] : memref<7x16x1152xf32, #tpu.memory_space<vmem>>, vector<1x7x1152xf32>
    %185 = vector.shape_cast %184 : vector<1x7x1152xf32> to vector<7x1152xf32>
    %186 = vector.extract_strided_slice %4 {offsets = [5, 0], sizes = [1, 1152], strides = [1, 1]} : vector<9x1152xf32> to vector<1x1152xf32>
    %187 = vector.broadcast %186 : vector<1x1152xf32> to vector<7x1152xf32>
    %188 = arith.mulf %185, %187 : vector<7x1152xf32>
    %189 = arith.addf %183, %188 : vector<7x1152xf32>
    %c4 = arith.constant 4 : index
    %c7_103 = arith.constant 7 : index
    %c0_104 = arith.constant 0 : index
    %190 = vector.load %arg4[%c4, %c7_103, %c0_104] : memref<7x16x1152xf32, #tpu.memory_space<vmem>>, vector<1x7x1152xf32>
    %191 = vector.shape_cast %190 : vector<1x7x1152xf32> to vector<7x1152xf32>
    %192 = vector.extract_strided_slice %4 {offsets = [6, 0], sizes = [1, 1152], strides = [1, 1]} : vector<9x1152xf32> to vector<1x1152xf32>
    %193 = vector.broadcast %192 : vector<1x1152xf32> to vector<7x1152xf32>
    %194 = arith.mulf %191, %193 : vector<7x1152xf32>
    %195 = arith.addf %189, %194 : vector<7x1152xf32>
    %c4_105 = arith.constant 4 : index
    %c8_106 = arith.constant 8 : index
    %c0_107 = arith.constant 0 : index
    %196 = vector.load %arg4[%c4_105, %c8_106, %c0_107] : memref<7x16x1152xf32, #tpu.memory_space<vmem>>, vector<1x7x1152xf32>
    %197 = vector.shape_cast %196 : vector<1x7x1152xf32> to vector<7x1152xf32>
    %198 = vector.extract_strided_slice %4 {offsets = [7, 0], sizes = [1, 1152], strides = [1, 1]} : vector<9x1152xf32> to vector<1x1152xf32>
    %199 = vector.broadcast %198 : vector<1x1152xf32> to vector<7x1152xf32>
    %200 = arith.mulf %197, %199 : vector<7x1152xf32>
    %201 = arith.addf %195, %200 : vector<7x1152xf32>
    %c4_108 = arith.constant 4 : index
    %c9_109 = arith.constant 9 : index
    %c0_110 = arith.constant 0 : index
    %202 = vector.load %arg4[%c4_108, %c9_109, %c0_110] : memref<7x16x1152xf32, #tpu.memory_space<vmem>>, vector<1x7x1152xf32>
    %203 = vector.shape_cast %202 : vector<1x7x1152xf32> to vector<7x1152xf32>
    %204 = vector.extract_strided_slice %4 {offsets = [8, 0], sizes = [1, 1152], strides = [1, 1]} : vector<9x1152xf32> to vector<1x1152xf32>
    %205 = vector.broadcast %204 : vector<1x1152xf32> to vector<7x1152xf32>
    %206 = arith.mulf %203, %205 : vector<7x1152xf32>
    %207 = arith.addf %201, %206 : vector<7x1152xf32>
    %c3_111 = arith.constant 3 : index
    %c0_112 = arith.constant 0 : index
    %c0_113 = arith.constant 0 : index
    %208 = vector.load %arg3[%c3_111, %c0_112, %c0_113] : memref<7x7x1152xf32, #tpu.memory_space<vmem>>, vector<1x7x1152xf32>
    %209 = vector.shape_cast %208 : vector<1x7x1152xf32> to vector<7x1152xf32>
    %210 = vector.shape_cast %207 : vector<7x1152xf32> to vector<1x7x1152xf32>
    tpu.vector_store %arg3[%c3_111, %c0_112, %c0_113], %210 {strides = array<i32>} : memref<7x7x1152xf32, #tpu.memory_space<vmem>>, vector<1x7x1152xf32>,
    %c3_114 = arith.constant 3 : index
    %c7_115 = arith.constant 7 : index
    %c0_116 = arith.constant 0 : index
    %211 = vector.load %arg4[%c3_114, %c7_115, %c0_116] : memref<7x16x1152xf32, #tpu.memory_space<vmem>>, vector<1x7x1152xf32>
    %212 = vector.shape_cast %211 : vector<1x7x1152xf32> to vector<7x1152xf32>
    %213 = vector.extract_strided_slice %4 {offsets = [0, 0], sizes = [1, 1152], strides = [1, 1]} : vector<9x1152xf32> to vector<1x1152xf32>
    %214 = vector.broadcast %213 : vector<1x1152xf32> to vector<7x1152xf32>
    %215 = arith.mulf %212, %214 : vector<7x1152xf32>
    %c3_117 = arith.constant 3 : index
    %c8_118 = arith.constant 8 : index
    %c0_119 = arith.constant 0 : index
    %216 = vector.load %arg4[%c3_117, %c8_118, %c0_119] : memref<7x16x1152xf32, #tpu.memory_space<vmem>>, vector<1x7x1152xf32>
    %217 = vector.shape_cast %216 : vector<1x7x1152xf32> to vector<7x1152xf32>
    %218 = vector.extract_strided_slice %4 {offsets = [1, 0], sizes = [1, 1152], strides = [1, 1]} : vector<9x1152xf32> to vector<1x1152xf32>
    %219 = vector.broadcast %218 : vector<1x1152xf32> to vector<7x1152xf32>
    %220 = arith.mulf %217, %219 : vector<7x1152xf32>
    %221 = arith.addf %215, %220 : vector<7x1152xf32>
    %c3_120 = arith.constant 3 : index
    %c9_121 = arith.constant 9 : index
    %c0_122 = arith.constant 0 : index
    %222 = vector.load %arg4[%c3_120, %c9_121, %c0_122] : memref<7x16x1152xf32, #tpu.memory_space<vmem>>, vector<1x7x1152xf32>
    %223 = vector.shape_cast %222 : vector<1x7x1152xf32> to vector<7x1152xf32>
    %224 = vector.extract_strided_slice %4 {offsets = [2, 0], sizes = [1, 1152], strides = [1, 1]} : vector<9x1152xf32> to vector<1x1152xf32>
    %225 = vector.broadcast %224 : vector<1x1152xf32> to vector<7x1152xf32>
    %226 = arith.mulf %223, %225 : vector<7x1152xf32>
    %227 = arith.addf %221, %226 : vector<7x1152xf32>
    %c4_123 = arith.constant 4 : index
    %c7_124 = arith.constant 7 : index
    %c0_125 = arith.constant 0 : index
    %228 = vector.load %arg4[%c4_123, %c7_124, %c0_125] : memref<7x16x1152xf32, #tpu.memory_space<vmem>>, vector<1x7x1152xf32>
    %229 = vector.shape_cast %228 : vector<1x7x1152xf32> to vector<7x1152xf32>
    %230 = vector.extract_strided_slice %4 {offsets = [3, 0], sizes = [1, 1152], strides = [1, 1]} : vector<9x1152xf32> to vector<1x1152xf32>
    %231 = vector.broadcast %230 : vector<1x1152xf32> to vector<7x1152xf32>
    %232 = arith.mulf %229, %231 : vector<7x1152xf32>
    %233 = arith.addf %227, %232 : vector<7x1152xf32>
    %c4_126 = arith.constant 4 : index
    %c8_127 = arith.constant 8 : index
    %c0_128 = arith.constant 0 : index
    %234 = vector.load %arg4[%c4_126, %c8_127, %c0_128] : memref<7x16x1152xf32, #tpu.memory_space<vmem>>, vector<1x7x1152xf32>
    %235 = vector.shape_cast %234 : vector<1x7x1152xf32> to vector<7x1152xf32>
    %236 = vector.extract_strided_slice %4 {offsets = [4, 0], sizes = [1, 1152], strides = [1, 1]} : vector<9x1152xf32> to vector<1x1152xf32>
    %237 = vector.broadcast %236 : vector<1x1152xf32> to vector<7x1152xf32>
    %238 = arith.mulf %235, %237 : vector<7x1152xf32>
    %239 = arith.addf %233, %238 : vector<7x1152xf32>
    %c4_129 = arith.constant 4 : index
    %c9_130 = arith.constant 9 : index
    %c0_131 = arith.constant 0 : index
    %240 = vector.load %arg4[%c4_129, %c9_130, %c0_131] : memref<7x16x1152xf32, #tpu.memory_space<vmem>>, vector<1x7x1152xf32>
    %241 = vector.shape_cast %240 : vector<1x7x1152xf32> to vector<7x1152xf32>
    %242 = vector.extract_strided_slice %4 {offsets = [5, 0], sizes = [1, 1152], strides = [1, 1]} : vector<9x1152xf32> to vector<1x1152xf32>
    %243 = vector.broadcast %242 : vector<1x1152xf32> to vector<7x1152xf32>
    %244 = arith.mulf %241, %243 : vector<7x1152xf32>
    %245 = arith.addf %239, %244 : vector<7x1152xf32>
    %c5 = arith.constant 5 : index
    %c7_132 = arith.constant 7 : index
    %c0_133 = arith.constant 0 : index
    %246 = vector.load %arg4[%c5, %c7_132, %c0_133] : memref<7x16x1152xf32, #tpu.memory_space<vmem>>, vector<1x7x1152xf32>
    %247 = vector.shape_cast %246 : vector<1x7x1152xf32> to vector<7x1152xf32>
    %248 = vector.extract_strided_slice %4 {offsets = [6, 0], sizes = [1, 1152], strides = [1, 1]} : vector<9x1152xf32> to vector<1x1152xf32>
    %249 = vector.broadcast %248 : vector<1x1152xf32> to vector<7x1152xf32>
    %250 = arith.mulf %247, %249 : vector<7x1152xf32>
    %251 = arith.addf %245, %250 : vector<7x1152xf32>
    %c5_134 = arith.constant 5 : index
    %c8_135 = arith.constant 8 : index
    %c0_136 = arith.constant 0 : index
    %252 = vector.load %arg4[%c5_134, %c8_135, %c0_136] : memref<7x16x1152xf32, #tpu.memory_space<vmem>>, vector<1x7x1152xf32>
    %253 = vector.shape_cast %252 : vector<1x7x1152xf32> to vector<7x1152xf32>
    %254 = vector.extract_strided_slice %4 {offsets = [7, 0], sizes = [1, 1152], strides = [1, 1]} : vector<9x1152xf32> to vector<1x1152xf32>
    %255 = vector.broadcast %254 : vector<1x1152xf32> to vector<7x1152xf32>
    %256 = arith.mulf %253, %255 : vector<7x1152xf32>
    %257 = arith.addf %251, %256 : vector<7x1152xf32>
    %c5_137 = arith.constant 5 : index
    %c9_138 = arith.constant 9 : index
    %c0_139 = arith.constant 0 : index
    %258 = vector.load %arg4[%c5_137, %c9_138, %c0_139] : memref<7x16x1152xf32, #tpu.memory_space<vmem>>, vector<1x7x1152xf32>
    %259 = vector.shape_cast %258 : vector<1x7x1152xf32> to vector<7x1152xf32>
    %260 = vector.extract_strided_slice %4 {offsets = [8, 0], sizes = [1, 1152], strides = [1, 1]} : vector<9x1152xf32> to vector<1x1152xf32>
    %261 = vector.broadcast %260 : vector<1x1152xf32> to vector<7x1152xf32>
    %262 = arith.mulf %259, %261 : vector<7x1152xf32>
    %263 = arith.addf %257, %262 : vector<7x1152xf32>
    %c4_140 = arith.constant 4 : index
    %c0_141 = arith.constant 0 : index
    %c0_142 = arith.constant 0 : index
    %264 = vector.load %arg3[%c4_140, %c0_141, %c0_142] : memref<7x7x1152xf32, #tpu.memory_space<vmem>>, vector<1x7x1152xf32>
    %265 = vector.shape_cast %264 : vector<1x7x1152xf32> to vector<7x1152xf32>
    %266 = vector.shape_cast %263 : vector<7x1152xf32> to vector<1x7x1152xf32>
    tpu.vector_store %arg3[%c4_140, %c0_141, %c0_142], %266 {strides = array<i32>} : memref<7x7x1152xf32, #tpu.memory_space<vmem>>, vector<1x7x1152xf32>,
    %c4_143 = arith.constant 4 : index
    %c7_144 = arith.constant 7 : index
    %c0_145 = arith.constant 0 : index
    %267 = vector.load %arg4[%c4_143, %c7_144, %c0_145] : memref<7x16x1152xf32, #tpu.memory_space<vmem>>, vector<1x7x1152xf32>
    %268 = vector.shape_cast %267 : vector<1x7x1152xf32> to vector<7x1152xf32>
    %269 = vector.extract_strided_slice %4 {offsets = [0, 0], sizes = [1, 1152], strides = [1, 1]} : vector<9x1152xf32> to vector<1x1152xf32>
    %270 = vector.broadcast %269 : vector<1x1152xf32> to vector<7x1152xf32>
    %271 = arith.mulf %268, %270 : vector<7x1152xf32>
    %c4_146 = arith.constant 4 : index
    %c8_147 = arith.constant 8 : index
    %c0_148 = arith.constant 0 : index
    %272 = vector.load %arg4[%c4_146, %c8_147, %c0_148] : memref<7x16x1152xf32, #tpu.memory_space<vmem>>, vector<1x7x1152xf32>
    %273 = vector.shape_cast %272 : vector<1x7x1152xf32> to vector<7x1152xf32>
    %274 = vector.extract_strided_slice %4 {offsets = [1, 0], sizes = [1, 1152], strides = [1, 1]} : vector<9x1152xf32> to vector<1x1152xf32>
    %275 = vector.broadcast %274 : vector<1x1152xf32> to vector<7x1152xf32>
    %276 = arith.mulf %273, %275 : vector<7x1152xf32>
    %277 = arith.addf %271, %276 : vector<7x1152xf32>
    %c4_149 = arith.constant 4 : index
    %c9_150 = arith.constant 9 : index
    %c0_151 = arith.constant 0 : index
    %278 = vector.load %arg4[%c4_149, %c9_150, %c0_151] : memref<7x16x1152xf32, #tpu.memory_space<vmem>>, vector<1x7x1152xf32>
    %279 = vector.shape_cast %278 : vector<1x7x1152xf32> to vector<7x1152xf32>
    %280 = vector.extract_strided_slice %4 {offsets = [2, 0], sizes = [1, 1152], strides = [1, 1]} : vector<9x1152xf32> to vector<1x1152xf32>
    %281 = vector.broadcast %280 : vector<1x1152xf32> to vector<7x1152xf32>
    %282 = arith.mulf %279, %281 : vector<7x1152xf32>
    %283 = arith.addf %277, %282 : vector<7x1152xf32>
    %c5_152 = arith.constant 5 : index
    %c7_153 = arith.constant 7 : index
    %c0_154 = arith.constant 0 : index
    %284 = vector.load %arg4[%c5_152, %c7_153, %c0_154] : memref<7x16x1152xf32, #tpu.memory_space<vmem>>, vector<1x7x1152xf32>
    %285 = vector.shape_cast %284 : vector<1x7x1152xf32> to vector<7x1152xf32>
    %286 = vector.extract_strided_slice %4 {offsets = [3, 0], sizes = [1, 1152], strides = [1, 1]} : vector<9x1152xf32> to vector<1x1152xf32>
    %287 = vector.broadcast %286 : vector<1x1152xf32> to vector<7x1152xf32>
    %288 = arith.mulf %285, %287 : vector<7x1152xf32>
    %289 = arith.addf %283, %288 : vector<7x1152xf32>
    %c5_155 = arith.constant 5 : index
    %c8_156 = arith.constant 8 : index
    %c0_157 = arith.constant 0 : index
    %290 = vector.load %arg4[%c5_155, %c8_156, %c0_157] : memref<7x16x1152xf32, #tpu.memory_space<vmem>>, vector<1x7x1152xf32>
    %291 = vector.shape_cast %290 : vector<1x7x1152xf32> to vector<7x1152xf32>
    %292 = vector.extract_strided_slice %4 {offsets = [4, 0], sizes = [1, 1152], strides = [1, 1]} : vector<9x1152xf32> to vector<1x1152xf32>
    %293 = vector.broadcast %292 : vector<1x1152xf32> to vector<7x1152xf32>
    %294 = arith.mulf %291, %293 : vector<7x1152xf32>
    %295 = arith.addf %289, %294 : vector<7x1152xf32>
    %c5_158 = arith.constant 5 : index
    %c9_159 = arith.constant 9 : index
    %c0_160 = arith.constant 0 : index
    %296 = vector.load %arg4[%c5_158, %c9_159, %c0_160] : memref<7x16x1152xf32, #tpu.memory_space<vmem>>, vector<1x7x1152xf32>
    %297 = vector.shape_cast %296 : vector<1x7x1152xf32> to vector<7x1152xf32>
    %298 = vector.extract_strided_slice %4 {offsets = [5, 0], sizes = [1, 1152], strides = [1, 1]} : vector<9x1152xf32> to vector<1x1152xf32>
    %299 = vector.broadcast %298 : vector<1x1152xf32> to vector<7x1152xf32>
    %300 = arith.mulf %297, %299 : vector<7x1152xf32>
    %301 = arith.addf %295, %300 : vector<7x1152xf32>
    %c6 = arith.constant 6 : index
    %c7_161 = arith.constant 7 : index
    %c0_162 = arith.constant 0 : index
    %302 = vector.load %arg4[%c6, %c7_161, %c0_162] : memref<7x16x1152xf32, #tpu.memory_space<vmem>>, vector<1x7x1152xf32>
    %303 = vector.shape_cast %302 : vector<1x7x1152xf32> to vector<7x1152xf32>
    %304 = vector.extract_strided_slice %4 {offsets = [6, 0], sizes = [1, 1152], strides = [1, 1]} : vector<9x1152xf32> to vector<1x1152xf32>
    %305 = vector.broadcast %304 : vector<1x1152xf32> to vector<7x1152xf32>
    %306 = arith.mulf %303, %305 : vector<7x1152xf32>
    %307 = arith.addf %301, %306 : vector<7x1152xf32>
    %c6_163 = arith.constant 6 : index
    %c8_164 = arith.constant 8 : index
    %c0_165 = arith.constant 0 : index
    %308 = vector.load %arg4[%c6_163, %c8_164, %c0_165] : memref<7x16x1152xf32, #tpu.memory_space<vmem>>, vector<1x7x1152xf32>
    %309 = vector.shape_cast %308 : vector<1x7x1152xf32> to vector<7x1152xf32>
    %310 = vector.extract_strided_slice %4 {offsets = [7, 0], sizes = [1, 1152], strides = [1, 1]} : vector<9x1152xf32> to vector<1x1152xf32>
    %311 = vector.broadcast %310 : vector<1x1152xf32> to vector<7x1152xf32>
    %312 = arith.mulf %309, %311 : vector<7x1152xf32>
    %313 = arith.addf %307, %312 : vector<7x1152xf32>
    %c6_166 = arith.constant 6 : index
    %c9_167 = arith.constant 9 : index
    %c0_168 = arith.constant 0 : index
    %314 = vector.load %arg4[%c6_166, %c9_167, %c0_168] : memref<7x16x1152xf32, #tpu.memory_space<vmem>>, vector<1x7x1152xf32>
    %315 = vector.shape_cast %314 : vector<1x7x1152xf32> to vector<7x1152xf32>
    %316 = vector.extract_strided_slice %4 {offsets = [8, 0], sizes = [1, 1152], strides = [1, 1]} : vector<9x1152xf32> to vector<1x1152xf32>
    %317 = vector.broadcast %316 : vector<1x1152xf32> to vector<7x1152xf32>
    %318 = arith.mulf %315, %317 : vector<7x1152xf32>
    %319 = arith.addf %313, %318 : vector<7x1152xf32>
    %c5_169 = arith.constant 5 : index
    %c0_170 = arith.constant 0 : index
    %c0_171 = arith.constant 0 : index
    %320 = vector.load %arg3[%c5_169, %c0_170, %c0_171] : memref<7x7x1152xf32, #tpu.memory_space<vmem>>, vector<1x7x1152xf32>
    %321 = vector.shape_cast %320 : vector<1x7x1152xf32> to vector<7x1152xf32>
    %322 = vector.shape_cast %319 : vector<7x1152xf32> to vector<1x7x1152xf32>
    tpu.vector_store %arg3[%c5_169, %c0_170, %c0_171], %322 {strides = array<i32>} : memref<7x7x1152xf32, #tpu.memory_space<vmem>>, vector<1x7x1152xf32>,
    %c5_172 = arith.constant 5 : index
    %c7_173 = arith.constant 7 : index
    %c0_174 = arith.constant 0 : index
    %323 = vector.load %arg4[%c5_172, %c7_173, %c0_174] : memref<7x16x1152xf32, #tpu.memory_space<vmem>>, vector<1x7x1152xf32>
    %324 = vector.shape_cast %323 : vector<1x7x1152xf32> to vector<7x1152xf32>
    %325 = vector.extract_strided_slice %4 {offsets = [0, 0], sizes = [1, 1152], strides = [1, 1]} : vector<9x1152xf32> to vector<1x1152xf32>
    %326 = vector.broadcast %325 : vector<1x1152xf32> to vector<7x1152xf32>
    %327 = arith.mulf %324, %326 : vector<7x1152xf32>
    %c5_175 = arith.constant 5 : index
    %c8_176 = arith.constant 8 : index
    %c0_177 = arith.constant 0 : index
    %328 = vector.load %arg4[%c5_175, %c8_176, %c0_177] : memref<7x16x1152xf32, #tpu.memory_space<vmem>>, vector<1x7x1152xf32>
    %329 = vector.shape_cast %328 : vector<1x7x1152xf32> to vector<7x1152xf32>
    %330 = vector.extract_strided_slice %4 {offsets = [1, 0], sizes = [1, 1152], strides = [1, 1]} : vector<9x1152xf32> to vector<1x1152xf32>
    %331 = vector.broadcast %330 : vector<1x1152xf32> to vector<7x1152xf32>
    %332 = arith.mulf %329, %331 : vector<7x1152xf32>
    %333 = arith.addf %327, %332 : vector<7x1152xf32>
    %c5_178 = arith.constant 5 : index
    %c9_179 = arith.constant 9 : index
    %c0_180 = arith.constant 0 : index
    %334 = vector.load %arg4[%c5_178, %c9_179, %c0_180] : memref<7x16x1152xf32, #tpu.memory_space<vmem>>, vector<1x7x1152xf32>
    %335 = vector.shape_cast %334 : vector<1x7x1152xf32> to vector<7x1152xf32>
    %336 = vector.extract_strided_slice %4 {offsets = [2, 0], sizes = [1, 1152], strides = [1, 1]} : vector<9x1152xf32> to vector<1x1152xf32>
    %337 = vector.broadcast %336 : vector<1x1152xf32> to vector<7x1152xf32>
    %338 = arith.mulf %335, %337 : vector<7x1152xf32>
    %339 = arith.addf %333, %338 : vector<7x1152xf32>
    %c6_181 = arith.constant 6 : index
    %c7_182 = arith.constant 7 : index
    %c0_183 = arith.constant 0 : index
    %340 = vector.load %arg4[%c6_181, %c7_182, %c0_183] : memref<7x16x1152xf32, #tpu.memory_space<vmem>>, vector<1x7x1152xf32>
    %341 = vector.shape_cast %340 : vector<1x7x1152xf32> to vector<7x1152xf32>
    %342 = vector.extract_strided_slice %4 {offsets = [3, 0], sizes = [1, 1152], strides = [1, 1]} : vector<9x1152xf32> to vector<1x1152xf32>
    %343 = vector.broadcast %342 : vector<1x1152xf32> to vector<7x1152xf32>
    %344 = arith.mulf %341, %343 : vector<7x1152xf32>
    %345 = arith.addf %339, %344 : vector<7x1152xf32>
    %c6_184 = arith.constant 6 : index
    %c8_185 = arith.constant 8 : index
    %c0_186 = arith.constant 0 : index
    %346 = vector.load %arg4[%c6_184, %c8_185, %c0_186] : memref<7x16x1152xf32, #tpu.memory_space<vmem>>, vector<1x7x1152xf32>
    %347 = vector.shape_cast %346 : vector<1x7x1152xf32> to vector<7x1152xf32>
    %348 = vector.extract_strided_slice %4 {offsets = [4, 0], sizes = [1, 1152], strides = [1, 1]} : vector<9x1152xf32> to vector<1x1152xf32>
    %349 = vector.broadcast %348 : vector<1x1152xf32> to vector<7x1152xf32>
    %350 = arith.mulf %347, %349 : vector<7x1152xf32>
    %351 = arith.addf %345, %350 : vector<7x1152xf32>
    %c6_187 = arith.constant 6 : index
    %c9_188 = arith.constant 9 : index
    %c0_189 = arith.constant 0 : index
    %352 = vector.load %arg4[%c6_187, %c9_188, %c0_189] : memref<7x16x1152xf32, #tpu.memory_space<vmem>>, vector<1x7x1152xf32>
    %353 = vector.shape_cast %352 : vector<1x7x1152xf32> to vector<7x1152xf32>
    %354 = vector.extract_strided_slice %4 {offsets = [5, 0], sizes = [1, 1152], strides = [1, 1]} : vector<9x1152xf32> to vector<1x1152xf32>
    %355 = vector.broadcast %354 : vector<1x1152xf32> to vector<7x1152xf32>
    %356 = arith.mulf %353, %355 : vector<7x1152xf32>
    %357 = arith.addf %351, %356 : vector<7x1152xf32>
    %c6_190 = arith.constant 6 : index
    %c0_191 = arith.constant 0 : index
    %c0_192 = arith.constant 0 : index
    %358 = vector.load %arg3[%c6_190, %c0_191, %c0_192] : memref<7x7x1152xf32, #tpu.memory_space<vmem>>, vector<1x7x1152xf32>
    %359 = vector.shape_cast %358 : vector<1x7x1152xf32> to vector<7x1152xf32>
    %360 = vector.shape_cast %357 : vector<7x1152xf32> to vector<1x7x1152xf32>
    tpu.vector_store %arg3[%c6_190, %c0_191, %c0_192], %360 {strides = array<i32>} : memref<7x7x1152xf32, #tpu.memory_space<vmem>>, vector<1x7x1152xf32>,
    return
  }
  func.func @transform_0(%arg0: i32) -> (i32, i32, i32) {
    %c0_i32 = arith.constant 0 : i32
    %c0_i32_0 = arith.constant 0 : i32
    %c0_i32_1 = arith.constant 0 : i32
    return %c0_i32, %c0_i32_0, %arg0 : i32, i32, i32
  }
  func.func @transform_1(%arg0: i32) -> (i32, i32) {
    %c0_i32 = arith.constant 0 : i32
    %c0_i32_0 = arith.constant 0 : i32
    return %c0_i32, %arg0 : i32, i32
  }
  func.func @transform_2(%arg0: i32) -> (i32, i32, i32) {
    %c0_i32 = arith.constant 0 : i32
    %c0_i32_0 = arith.constant 0 : i32
    %c0_i32_1 = arith.constant 0 : i32
    return %c0_i32, %c0_i32_0, %arg0 : i32, i32, i32
  }
}

</mosaic_0001>

<llo_original>
// kernel: depthwise_conv3x3.1
$region0: #{depthwise_conv3x3.1}
  #allocation0 [shape = 'u32[]', space=smem, size = 0x4, offset = 0x4, fixed_abs, tag = 'smem constant byte address 0x4 - core index']
  #allocation1 [shape = 'u32[144,128]{1,0:T(1,128)}', space=vmem, size = 0x12000, scoped, tag = 'internal scratch']
  #allocation2 [shape = 'f32[7,16,1152]{2,1,0:T(8,128)}', space=vmem, size = 0x7e000, scoped, tag = 'scratch operand']
  %s0 = inlined_call_operand.vmem [shape: f32[7,7,2304], index: 0, kind: input, shape index: {}]
  %s1 = inlined_call_operand.vmem [shape: f32[9,2304], index: 1, kind: input, shape index: {}]
  %s2 = inlined_call_operand.vmem [shape: f32[7,7,2304], index: 2, kind: output, shape index: {}]
  %s3 = sld [smem:[#allocation0]]
  $region106: #{depthwise_conv3x3.1} parent=0
    _
  %s5 = ssub.s32 1, %s3
  %s6 = scalar_select 0, %s5, %s3
  $region1: #{depthwise_conv3x3.1} parent=0
    #allocation3 [shape = 'u8[516096]{0}', space=vmem, size = 0x7e000, scoped, tag = 'input window, operand 0']
    #allocation4 [shape = 'u8[147456]{0}', space=vmem, size = 0x24000, scoped, tag = 'input window, operand 1']
    #allocation5 [shape = 'u8[516096]{0}', space=vmem, size = 0x7e000, scoped, tag = 'output window, operand 0']
    loop: start=0, step=1, limit=4
    $region2: #{depthwise_conv3x3.1} parent=1 // loop_pre_header
      _
    $region3: #{depthwise_conv3x3.1} parent=1 // loop_header
      %s8 = sphi 0, %s12
      %p9 = scmp.ge.s32.totalorder %s8, 4
      %s18 = sphi 0, %s20
      %s21 = sphi 0, %s18
      %s22 = sphi 0, %s21
      %s38 = sphi 0, %s22
      %s44 = sphi 0, %s46
      %s47 = sphi 0, %s44
      %s48 = sphi 0, %s47
      %s64 = sphi 0, %s48
      %s70 = sphi 0, %s72
      %s73 = sphi 0, %s70
      %s74 = sphi 0, %s73
      %s90 = sphi 0, %s74
    $region4: #{depthwise_conv3x3.1} parent=1 // loop_header_branch
      %11 = sbr.rel (%p9) target = $region8
    $region5: #{depthwise_conv3x3.1} parent=1 // loop_body
      %s13 = ssub.s32 %s8, 1
      %s14 = ssub.s32 %s8, 2
      %s15 = sadd.s32 %s8, 1
      %s16 = ssub.s32 %s8, %s15
      %p17 = scmp.eq.s32.totalorder %s16, 0
      %s19 = sadd.s32 %s18, 1
      %s20 = scalar_select %p17, %s18, %s19
      %p23 = pneg %p17
      %p24 = scmp.eq.s32.totalorder %s8, 1
      %p25 = por %p23, %p24
      %p26 = scmp.ne.s32.totalorder %s18, %s21
      %p27 = scmp.eq.s32.totalorder %s8, 0
      %p28 = por %p26, %p27
      %p29 = scmp.ne.s32.totalorder %s18, %s21
      %p30 = scmp.eq.s32.totalorder %s13, 1
      %p31 = por %p29, %p30
      %p32 = scmp.ne.s32.totalorder %s21, %s22
      %p33 = scmp.eq.s32.totalorder %s13, 0
      %p34 = por %p32, %p33
      %p35 = scmp.ne.s32.totalorder %s21, %s22
      %p36 = scmp.eq.s32.totalorder %s14, 1
      %p37 = por %p35, %p36
      %p39 = scmp.ne.s32.totalorder %s22, %s38
      %p40 = scmp.eq.s32.totalorder %s14, 0
      %p41 = por %p39, %p40
      %s42 = ssub.s32 %s8, %s15
      %p43 = scmp.eq.s32.totalorder %s42, 0
      %s45 = sadd.s32 %s44, 1
      %s46 = scalar_select %p43, %s44, %s45
      %p49 = pneg %p43
      %p50 = scmp.eq.s32.totalorder %s8, 1
      %p51 = por %p49, %p50
      %p52 = scmp.ne.s32.totalorder %s44, %s47
      %p53 = scmp.eq.s32.totalorder %s8, 0
      %p54 = por %p52, %p53
      %p55 = scmp.ne.s32.totalorder %s44, %s47
      %p56 = scmp.eq.s32.totalorder %s13, 1
      %p57 = por %p55, %p56
      %p58 = scmp.ne.s32.totalorder %s47, %s48
      %p59 = scmp.eq.s32.totalorder %s13, 0
      %p60 = por %p58, %p59
      %p61 = scmp.ne.s32.totalorder %s47, %s48
      %p62 = scmp.eq.s32.totalorder %s14, 1
      %p63 = por %p61, %p62
      %p65 = scmp.ne.s32.totalorder %s48, %s64
      %p66 = scmp.eq.s32.totalorder %s14, 0
      %p67 = por %p65, %p66
      %s68 = ssub.s32 %s8, %s15
      %p69 = scmp.eq.s32.totalorder %s68, 0
      %s71 = sadd.s32 %s70, 1
      %s72 = scalar_select %p69, %s70, %s71
      %p75 = pneg %p69
      %p76 = scmp.eq.s32.totalorder %s8, 1
      %p77 = por %p75, %p76
      %p78 = scmp.ne.s32.totalorder %s70, %s73
      %p79 = scmp.eq.s32.totalorder %s8, 0
      %p80 = por %p78, %p79
      %p81 = scmp.ne.s32.totalorder %s70, %s73
      %p82 = scmp.eq.s32.totalorder %s13, 1
      %p83 = por %p81, %p82
      %p84 = scmp.ne.s32.totalorder %s73, %s74
      %p85 = scmp.eq.s32.totalorder %s13, 0
      %p86 = por %p84, %p85
      %p87 = scmp.ne.s32.totalorder %s73, %s74
      %p88 = scmp.eq.s32.totalorder %s14, 1
      %p89 = por %p87, %p88
      %p91 = scmp.ne.s32.totalorder %s74, %s90
      %p92 = scmp.eq.s32.totalorder %s14, 0
      %p93 = por %p91, %p92
      %p94 = scmp.le.s32.totalorder 1, %s8
      %p95 = scmp.lt.s32.totalorder %s8, 3
      %p96 = pnand %p94, %p95
      %p97 = pneg %p96
      // Predicated region
      $region9: #{depthwise_conv3x3.1} parent=5 // pred_check
        _
      $region10: #{depthwise_conv3x3.1} parent=5 // pred_check_branch
        %99 = sbr.rel (%p96) target = $region12
      $region11: #{depthwise_conv3x3.1} parent=5 // pred_region
        %s100 = ssub.s32 %s8, 1
      $region12: #{depthwise_conv3x3.1} parent=5 // pred_fallthru
        _
      %p101 = scmp.lt.s32.totalorder %s8, 2
      // Predicated region
      $region13: #{depthwise_conv3x3.1} parent=5 // pred_check
        %p102 = pneg %p101
      $region14: #{depthwise_conv3x3.1} parent=5 // pred_check_branch
        %104 = sbr.rel (%p102) target = $region16
      $region15: #{depthwise_conv3x3.1} parent=5 // pred_region
        // Predicated region
        $region17: #{depthwise_conv3x3.1} parent=15 // pred_check
          %p105 = pneg %p28
        $region18: #{depthwise_conv3x3.1} parent=15 // pred_check_branch
          %107 = sbr.rel (%p105) target = $region20
        $region19: #{depthwise_conv3x3.1} parent=15 // pred_region
          %s108 = sand.u32 %s18, 1
          %s109 = sand.u32 %s18, 1
          %s110 = smul.addr %s109, 504
          %s111 = scalar_lea.vmem [#allocation3], %s110
          %s112 = smul.u32 9, %s8
          %s113 = smul.addr %s112, 8
          %s114 = scalar_lea.vmem %s0, %s113
          // Predicated region
          $region21: #{depthwise_conv3x3.1} parent=19 // pred_check
            _
          $region22: #{depthwise_conv3x3.1} parent=19 // pred_check_branch
            %116 = sbr.rel (0) target = $region24
          $region23: #{depthwise_conv3x3.1} parent=19 // pred_region
            // Predicated region
            $region25: #{depthwise_conv3x3.1} parent=23 // pred_check
              _
            $region26: #{depthwise_conv3x3.1} parent=23 // pred_check_branch
              %118 = sbr.rel (0) target = $region28
            $region27: #{depthwise_conv3x3.1} parent=23 // pred_region
              loop: start=0, step=1, limit=1
              $region29: #{depthwise_conv3x3.1} parent=27 // loop_pre_header
                _
              $region30: #{depthwise_conv3x3.1} parent=27 // loop_header
                %s120 = sphi 0, %s124
                %p121 = scmp.ge.s32.totalorder %s120, 1
                %s125 = sphi %s114, %s114
                %s126 = sphi %s111, %s111
              $region31: #{depthwise_conv3x3.1} parent=27 // loop_header_branch
                %123 = sbr.rel (%p121) target = $region35
              $region32: #{depthwise_conv3x3.1} parent=27 // loop_body
                %v127 = vld [vmem:[%s125] sm:$0xff]
                %128 = vst [vmem:[%s126] sm:$0xff] %v127
                %v129 = vld [vmem:[%s125 + $0x8] sm:$0xff]
                %130 = vst [vmem:[%s126 + $0x8] sm:$0xff] %v129
                %v131 = vld [vmem:[%s125 + $0x10] sm:$0xff]
                %132 = vst [vmem:[%s126 + $0x10] sm:$0xff] %v131
                %v133 = vld [vmem:[%s125 + $0x18] sm:$0xff]
                %134 = vst [vmem:[%s126 + $0x18] sm:$0xff] %v133
                %v135 = vld [vmem:[%s125 + $0x20] sm:$0xff]
                %136 = vst [vmem:[%s126 + $0x20] sm:$0xff] %v135
                %v137 = vld [vmem:[%s125 + $0x28] sm:$0xff]
                %138 = vst [vmem:[%s126 + $0x28] sm:$0xff] %v137
                %v139 = vld [vmem:[%s125 + $0x30] sm:$0xff]
                %140 = vst [vmem:[%s126 + $0x30] sm:$0xff] %v139
                %v141 = vld [vmem:[%s125 + $0x38] sm:$0xff]
                %142 = vst [vmem:[%s126 + $0x38] sm:$0xff] %v141
                %v143 = vld [vmem:[%s125 + $0x40] sm:$0xff]
                %144 = vst [vmem:[%s126 + $0x40] sm:$0xff] %v143
                %v145 = vld [vmem:[%s125 + $0x90] sm:$0xff]
                %146 = vst [vmem:[%s126 + $0x48] sm:$0xff] %v145
                %v147 = vld [vmem:[%s125 + $0x98] sm:$0xff]
                %148 = vst [vmem:[%s126 + $0x50] sm:$0xff] %v147
                %v149 = vld [vmem:[%s125 + $0xa0] sm:$0xff]
                %150 = vst [vmem:[%s126 + $0x58] sm:$0xff] %v149
                %v151 = vld [vmem:[%s125 + $0xa8] sm:$0xff]
                %152 = vst [vmem:[%s126 + $0x60] sm:$0xff] %v151
                %v153 = vld [vmem:[%s125 + $0xb0] sm:$0xff]
                %154 = vst [vmem:[%s126 + $0x68] sm:$0xff] %v153
                %v155 = vld [vmem:[%s125 + $0xb8] sm:$0xff]
                %156 = vst [vmem:[%s126 + $0x70] sm:$0xff] %v155
                %v157 = vld [vmem:[%s125 + $0xc0] sm:$0xff]
                %158 = vst [vmem:[%s126 + $0x78] sm:$0xff] %v157
                %v159 = vld [vmem:[%s125 + $0xc8] sm:$0xff]
                %160 = vst [vmem:[%s126 + $0x80] sm:$0xff] %v159
                %v161 = vld [vmem:[%s125 + $0xd0] sm:$0xff]
                %162 = vst [vmem:[%s126 + $0x88] sm:$0xff] %v161
                %v163 = vld [vmem:[%s125 + $0x120] sm:$0xff]
                %164 = vst [vmem:[%s126 + $0x90] sm:$0xff] %v163
                %v165 = vld [vmem:[%s125 + $0x128] sm:$0xff]
                %166 = vst [vmem:[%s126 + $0x98] sm:$0xff] %v165
                %v167 = vld [vmem:[%s125 + $0x130] sm:$0xff]
                %168 = vst [vmem:[%s126 + $0xa0] sm:$0xff] %v167
                %v169 = vld [vmem:[%s125 + $0x138] sm:$0xff]
                %170 = vst [vmem:[%s126 + $0xa8] sm:$0xff] %v169
                %v171 = vld [vmem:[%s125 + $0x140] sm:$0xff]
                %172 = vst [vmem:[%s126 + $0xb0] sm:$0xff] %v171
                %v173 = vld [vmem:[%s125 + $0x148] sm:$0xff]
                %174 = vst [vmem:[%s126 + $0xb8] sm:$0xff] %v173
                %v175 = vld [vmem:[%s125 + $0x150] sm:$0xff]
                %176 = vst [vmem:[%s126 + $0xc0] sm:$0xff] %v175
                %v177 = vld [vmem:[%s125 + $0x158] sm:$0xff]
                %178 = vst [vmem:[%s126 + $0xc8] sm:$0xff] %v177
                %v179 = vld [vmem:[%s125 + $0x160] sm:$0xff]
                %180 = vst [vmem:[%s126 + $0xd0] sm:$0xff] %v179
                %v181 = vld [vmem:[%s125 + $0x1b0] sm:$0xff]
                %182 = vst [vmem:[%s126 + $0xd8] sm:$0xff] %v181
                %v183 = vld [vmem:[%s125 + $0x1b8] sm:$0xff]
                %184 = vst [vmem:[%s126 + $0xe0] sm:$0xff] %v183
                %v185 = vld [vmem:[%s125 + $0x1c0] sm:$0xff]
                %186 = vst [vmem:[%s126 + $0xe8] sm:$0xff] %v185
                %v187 = vld [vmem:[%s125 + $0x1c8] sm:$0xff]
                %188 = vst [vmem:[%s126 + $0xf0] sm:$0xff] %v187
                %v189 = vld [vmem:[%s125 + $0x1d0] sm:$0xff]
                %190 = vst [vmem:[%s126 + $0xf8] sm:$0xff] %v189
                %v191 = vld [vmem:[%s125 + $0x1d8] sm:$0xff]
                %192 = vst [vmem:[%s126 + $0x100] sm:$0xff] %v191
                %v193 = vld [vmem:[%s125 + $0x1e0] sm:$0xff]
                %194 = vst [vmem:[%s126 + $0x108] sm:$0xff] %v193
                %v195 = vld [vmem:[%s125 + $0x1e8] sm:$0xff]
                %196 = vst [vmem:[%s126 + $0x110] sm:$0xff] %v195
                %v197 = vld [vmem:[%s125 + $0x1f0] sm:$0xff]
                %198 = vst [vmem:[%s126 + $0x118] sm:$0xff] %v197
                %v199 = vld [vmem:[%s125 + $0x240] sm:$0xff]
                %200 = vst [vmem:[%s126 + $0x120] sm:$0xff] %v199
                %v201 = vld [vmem:[%s125 + $0x248] sm:$0xff]
                %202 = vst [vmem:[%s126 + $0x128] sm:$0xff] %v201
                %v203 = vld [vmem:[%s125 + $0x250] sm:$0xff]
                %204 = vst [vmem:[%s126 + $0x130] sm:$0xff] %v203
                %v205 = vld [vmem:[%s125 + $0x258] sm:$0xff]
                %206 = vst [vmem:[%s126 + $0x138] sm:$0xff] %v205
                %v207 = vld [vmem:[%s125 + $0x260] sm:$0xff]
                %208 = vst [vmem:[%s126 + $0x140] sm:$0xff] %v207
                %v209 = vld [vmem:[%s125 + $0x268] sm:$0xff]
                %210 = vst [vmem:[%s126 + $0x148] sm:$0xff] %v209
                %v211 = vld [vmem:[%s125 + $0x270] sm:$0xff]
                %212 = vst [vmem:[%s126 + $0x150] sm:$0xff] %v211
                %v213 = vld [vmem:[%s125 + $0x278] sm:$0xff]
                %214 = vst [vmem:[%s126 + $0x158] sm:$0xff] %v213
                %v215 = vld [vmem:[%s125 + $0x280] sm:$0xff]
                %216 = vst [vmem:[%s126 + $0x160] sm:$0xff] %v215
                %v217 = vld [vmem:[%s125 + $0x2d0] sm:$0xff]
                %218 = vst [vmem:[%s126 + $0x168] sm:$0xff] %v217
                %v219 = vld [vmem:[%s125 + $0x2d8] sm:$0xff]
                %220 = vst [vmem:[%s126 + $0x170] sm:$0xff] %v219
                %v221 = vld [vmem:[%s125 + $0x2e0] sm:$0xff]
                %222 = vst [vmem:[%s126 + $0x178] sm:$0xff] %v221
                %v223 = vld [vmem:[%s125 + $0x2e8] sm:$0xff]
                %224 = vst [vmem:[%s126 + $0x180] sm:$0xff] %v223
                %v225 = vld [vmem:[%s125 + $0x2f0] sm:$0xff]
                %226 = vst [vmem:[%s126 + $0x188] sm:$0xff] %v225
                %v227 = vld [vmem:[%s125 + $0x2f8] sm:$0xff]
                %228 = vst [vmem:[%s126 + $0x190] sm:$0xff] %v227
                %v229 = vld [vmem:[%s125 + $0x300] sm:$0xff]
                %230 = vst [vmem:[%s126 + $0x198] sm:$0xff] %v229
                %v231 = vld [vmem:[%s125 + $0x308] sm:$0xff]
                %232 = vst [vmem:[%s126 + $0x1a0] sm:$0xff] %v231
                %v233 = vld [vmem:[%s125 + $0x310] sm:$0xff]
                %234 = vst [vmem:[%s126 + $0x1a8] sm:$0xff] %v233
                %v235 = vld [vmem:[%s125 + $0x360] sm:$0xff]
                %236 = vst [vmem:[%s126 + $0x1b0] sm:$0xff] %v235
                %v237 = vld [vmem:[%s125 + $0x368] sm:$0xff]
                %238 = vst [vmem:[%s126 + $0x1b8] sm:$0xff] %v237
                %v239 = vld [vmem:[%s125 + $0x370] sm:$0xff]
                %240 = vst [vmem:[%s126 + $0x1c0] sm:$0xff] %v239
                %v241 = vld [vmem:[%s125 + $0x378] sm:$0xff]
                %242 = vst [vmem:[%s126 + $0x1c8] sm:$0xff] %v241
                %v243 = vld [vmem:[%s125 + $0x380] sm:$0xff]
                %244 = vst [vmem:[%s126 + $0x1d0] sm:$0xff] %v243
                %v245 = vld [vmem:[%s125 + $0x388] sm:$0xff]
                %246 = vst [vmem:[%s126 + $0x1d8] sm:$0xff] %v245
                %v247 = vld [vmem:[%s125 + $0x390] sm:$0xff]
                %248 = vst [vmem:[%s126 + $0x1e0] sm:$0xff] %v247
                %v249 = vld [vmem:[%s125 + $0x398] sm:$0xff]
                %250 = vst [vmem:[%s126 + $0x1e8] sm:$0xff] %v249
                %v251 = vld [vmem:[%s125 + $0x3a0] sm:$0xff]
                %252 = vst [vmem:[%s126 + $0x1f0] sm:$0xff] %v251
              $region33: #{depthwise_conv3x3.1} parent=27 // loop_footer
                %s124 = sadd.s32 1, %s120
              $region34: #{depthwise_conv3x3.1} parent=27 // loop_footer_branch
                %119 = sbr.rel target = $region30
              $region35: #{depthwise_conv3x3.1} parent=27 // loop_exit
                _
            $region28: #{depthwise_conv3x3.1} parent=23 // pred_fallthru
              _
            // Predicated region
            $region36: #{depthwise_conv3x3.1} parent=23 // pred_check
              _
            $region37: #{depthwise_conv3x3.1} parent=23 // pred_check_branch
              %254 = sbr.rel target = $region39
            $region38: #{depthwise_conv3x3.1} parent=23 // pred_region
              _
            $region39: #{depthwise_conv3x3.1} parent=23 // pred_fallthru
              _
          $region24: #{depthwise_conv3x3.1} parent=19 // pred_fallthru
            _
          %255 = vnop
        $region20: #{depthwise_conv3x3.1} parent=15 // pred_fallthru
          _
        // Predicated region
        $region40: #{depthwise_conv3x3.1} parent=15 // pred_check
          %p256 = pneg %p54
        $region41: #{depthwise_conv3x3.1} parent=15 // pred_check_branch
          %258 = sbr.rel (%p256) target = $region43
        $region42: #{depthwise_conv3x3.1} parent=15 // pred_region
          %s259 = sand.u32 %s44, 1
          %s260 = sand.u32 %s44, 1
          %s261 = smul.addr %s260, 144
          %s262 = scalar_lea.vmem [#allocation4], %s261
          %s263 = smul.u32 9, %s8
          %s264 = smul.addr %s263, 8
          %s265 = scalar_lea.vmem %s1, %s264
          // Predicated region
          $region44: #{depthwise_conv3x3.1} parent=42 // pred_check
            _
          $region45: #{depthwise_conv3x3.1} parent=42 // pred_check_branch
            %267 = sbr.rel (0) target = $region47
          $region46: #{depthwise_conv3x3.1} parent=42 // pred_region
            // Predicated region
            $region48: #{depthwise_conv3x3.1} parent=46 // pred_check
              _
            $region49: #{depthwise_conv3x3.1} parent=46 // pred_check_branch
              %269 = sbr.rel (0) target = $region51
            $region50: #{depthwise_conv3x3.1} parent=46 // pred_region
              loop: start=0, step=1, limit=1
              $region52: #{depthwise_conv3x3.1} parent=50 // loop_pre_header
                _
              $region53: #{depthwise_conv3x3.1} parent=50 // loop_header
                %s271 = sphi 0, %s275
                %p272 = scmp.ge.s32.totalorder %s271, 1
                %s276 = sphi %s265, %s265
                %s277 = sphi %s262, %s262
              $region54: #{depthwise_conv3x3.1} parent=50 // loop_header_branch
                %274 = sbr.rel (%p272) target = $region58
              $region55: #{depthwise_conv3x3.1} parent=50 // loop_body
                %v278 = vld [vmem:[%s276] sm:$0xff]
                %279 = vst [vmem:[%s277] sm:$0xff] %v278
                %v280 = vld [vmem:[%s276 + $0x8] sm:$0xff]
                %281 = vst [vmem:[%s277 + $0x8] sm:$0xff] %v280
                %v282 = vld [vmem:[%s276 + $0x10] sm:$0xff]
                %283 = vst [vmem:[%s277 + $0x10] sm:$0xff] %v282
                %v284 = vld [vmem:[%s276 + $0x18] sm:$0xff]
                %285 = vst [vmem:[%s277 + $0x18] sm:$0xff] %v284
                %v286 = vld [vmem:[%s276 + $0x20] sm:$0xff]
                %287 = vst [vmem:[%s277 + $0x20] sm:$0xff] %v286
                %v288 = vld [vmem:[%s276 + $0x28] sm:$0xff]
                %289 = vst [vmem:[%s277 + $0x28] sm:$0xff] %v288
                %v290 = vld [vmem:[%s276 + $0x30] sm:$0xff]
                %291 = vst [vmem:[%s277 + $0x30] sm:$0xff] %v290
                %v292 = vld [vmem:[%s276 + $0x38] sm:$0xff]
                %293 = vst [vmem:[%s277 + $0x38] sm:$0xff] %v292
                %v294 = vld [vmem:[%s276 + $0x40] sm:$0xff]
                %295 = vst [vmem:[%s277 + $0x40] sm:$0xff] %v294
                %v296 = vld [vmem:[%s276 + $0x90] sm:$0xff]
                %297 = vst [vmem:[%s277 + $0x48] sm:$0xff] %v296
                %v298 = vld [vmem:[%s276 + $0x98] sm:$0xff]
                %299 = vst [vmem:[%s277 + $0x50] sm:$0xff] %v298
                %v300 = vld [vmem:[%s276 + $0xa0] sm:$0xff]
                %301 = vst [vmem:[%s277 + $0x58] sm:$0xff] %v300
                %v302 = vld [vmem:[%s276 + $0xa8] sm:$0xff]
                %303 = vst [vmem:[%s277 + $0x60] sm:$0xff] %v302
                %v304 = vld [vmem:[%s276 + $0xb0] sm:$0xff]
                %305 = vst [vmem:[%s277 + $0x68] sm:$0xff] %v304
                %v306 = vld [vmem:[%s276 + $0xb8] sm:$0xff]
                %307 = vst [vmem:[%s277 + $0x70] sm:$0xff] %v306
                %v308 = vld [vmem:[%s276 + $0xc0] sm:$0xff]
                %309 = vst [vmem:[%s277 + $0x78] sm:$0xff] %v308
                %v310 = vld [vmem:[%s276 + $0xc8] sm:$0xff]
                %311 = vst [vmem:[%s277 + $0x80] sm:$0xff] %v310
                %v312 = vld [vmem:[%s276 + $0xd0] sm:$0xff]
                %313 = vst [vmem:[%s277 + $0x88] sm:$0xff] %v312
              $region56: #{depthwise_conv3x3.1} parent=50 // loop_footer
                %s275 = sadd.s32 1, %s271
              $region57: #{depthwise_conv3x3.1} parent=50 // loop_footer_branch
                %270 = sbr.rel target = $region53
              $region58: #{depthwise_conv3x3.1} parent=50 // loop_exit
                _
            $region51: #{depthwise_conv3x3.1} parent=46 // pred_fallthru
              _
            // Predicated region
            $region59: #{depthwise_conv3x3.1} parent=46 // pred_check
              _
            $region60: #{depthwise_conv3x3.1} parent=46 // pred_check_branch
              %315 = sbr.rel target = $region62
            $region61: #{depthwise_conv3x3.1} parent=46 // pred_region
              _
            $region62: #{depthwise_conv3x3.1} parent=46 // pred_fallthru
              _
          $region47: #{depthwise_conv3x3.1} parent=42 // pred_fallthru
            _
          %316 = vnop
        $region43: #{depthwise_conv3x3.1} parent=15 // pred_fallthru
          _
      $region16: #{depthwise_conv3x3.1} parent=5 // pred_fallthru
        _
      %p317 = scmp.le.s32.totalorder 1, %s8
      %p318 = scmp.lt.s32.totalorder %s8, 3
      %p319 = pnand %p317, %p318
      %p320 = pneg %p319
      // Predicated region
      $region63: #{depthwise_conv3x3.1} parent=5 // pred_check
        _
      $region64: #{depthwise_conv3x3.1} parent=5 // pred_check_branch
        %322 = sbr.rel (%p319) target = $region66
      $region65: #{depthwise_conv3x3.1} parent=5 // pred_region
        %s323 = ssub.s32 %s8, 1
        %s324 = sand.u32 %s21, 1
        %s325 = sand.u32 %s21, 1
        %s326 = smul.addr %s325, 504
        %s327 = scalar_lea.vmem [#allocation3], %s326
        // Predicated region
        $region67: #{depthwise_conv3x3.1} parent=65 // pred_check
          %p328 = pneg %p34
        $region68: #{depthwise_conv3x3.1} parent=65 // pred_check_branch
          %330 = sbr.rel (%p328) target = $region70
        $region69: #{depthwise_conv3x3.1} parent=65 // pred_region
          _
        $region70: #{depthwise_conv3x3.1} parent=65 // pred_fallthru
          _
        %s331 = sand.u32 %s47, 1
        %s332 = sand.u32 %s47, 1
        %s333 = smul.addr %s332, 144
        %s334 = scalar_lea.vmem [#allocation4], %s333
        // Predicated region
        $region71: #{depthwise_conv3x3.1} parent=65 // pred_check
          %p335 = pneg %p60
        $region72: #{depthwise_conv3x3.1} parent=65 // pred_check_branch
          %337 = sbr.rel (%p335) target = $region74
        $region73: #{depthwise_conv3x3.1} parent=65 // pred_region
          _
        $region74: #{depthwise_conv3x3.1} parent=65 // pred_fallthru
          _
        %s338 = sand.u32 %s21, 1
        %s339 = sand.u32 %s21, 1
        %s340 = smul.addr %s339, 504
        %s341 = scalar_lea.vmem [#allocation3], %s340
        %p342 = pneg %p34
        %p343 = pneg %p31
        %s344 = sand.u32 %s47, 1
        %s345 = sand.u32 %s47, 1
        %s346 = smul.addr %s345, 144
        %s347 = scalar_lea.vmem [#allocation4], %s346
        %p348 = pneg %p60
        %p349 = pneg %p57
        %p350 = pneg %p86
        %p351 = pneg %p83
        %s352 = sand.u32 %s73, 1
        %s353 = sand.u32 %s73, 1
        %s354 = smul.addr %s353, 504
        %s355 = scalar_lea.vmem [#allocation5], %s354
        %s356 = smul.u32 9, %s13
        %s357 = smul.u32 9, %s13
        %s358 = smul.u32 9, %s13
        %359 = vst [vmem:[#allocation2] sm:$0xff] 0.0
        %360 = vst [vmem:[#allocation2 + $0x8] sm:$0xff] 0.0
        %361 = vst [vmem:[#allocation2 + $0x10] sm:$0xff] 0.0
        %362 = vst [vmem:[#allocation2 + $0x18] sm:$0xff] 0.0
        %363 = vst [vmem:[#allocation2 + $0x20] sm:$0xff] 0.0
        %364 = vst [vmem:[#allocation2 + $0x28] sm:$0xff] 0.0
        %365 = vst [vmem:[#allocation2 + $0x30] sm:$0xff] 0.0
        %366 = vst [vmem:[#allocation2 + $0x38] sm:$0xff] 0.0
        %367 = vst [vmem:[#allocation2 + $0x40] sm:$0xff] 0.0
        %368 = vst [vmem:[#allocation2 + $0x48] sm:$0xff] 0.0
        %369 = vst [vmem:[#allocation2 + $0x50] sm:$0xff] 0.0
        %370 = vst [vmem:[#allocation2 + $0x58] sm:$0xff] 0.0
        %371 = vst [vmem:[#allocation2 + $0x60] sm:$0xff] 0.0
        %372 = vst [vmem:[#allocation2 + $0x68] sm:$0xff] 0.0
        %373 = vst [vmem:[#allocation2 + $0x70] sm:$0xff] 0.0
        %374 = vst [vmem:[#allocation2 + $0x78] sm:$0xff] 0.0
        %375 = vst [vmem:[#allocation2 + $0x80] sm:$0xff] 0.0
        %376 = vst [vmem:[#allocation2 + $0x88] sm:$0xff] 0.0
        %377 = vst [vmem:[#allocation2 + $0x90] sm:$0xff] 0.0
        %378 = vst [vmem:[#allocation2 + $0x98] sm:$0xff] 0.0
        %379 = vst [vmem:[#allocation2 + $0xa0] sm:$0xff] 0.0
        %380 = vst [vmem:[#allocation2 + $0xa8] sm:$0xff] 0.0
        %381 = vst [vmem:[#allocation2 + $0xb0] sm:$0xff] 0.0
        %382 = vst [vmem:[#allocation2 + $0xb8] sm:$0xff] 0.0
        %383 = vst [vmem:[#allocation2 + $0xc0] sm:$0xff] 0.0
        %384 = vst [vmem:[#allocation2 + $0xc8] sm:$0xff] 0.0
        %385 = vst [vmem:[#allocation2 + $0xd0] sm:$0xff] 0.0
        %386 = vst [vmem:[#allocation2 + $0xd8] sm:$0xff] 0.0
        %387 = vst [vmem:[#allocation2 + $0xe0] sm:$0xff] 0.0
        %388 = vst [vmem:[#allocation2 + $0xe8] sm:$0xff] 0.0
        %389 = vst [vmem:[#allocation2 + $0xf0] sm:$0xff] 0.0
        %390 = vst [vmem:[#allocation2 + $0xf8] sm:$0xff] 0.0
        %391 = vst [vmem:[#allocation2 + $0x100] sm:$0xff] 0.0
        %392 = vst [vmem:[#allocation2 + $0x108] sm:$0xff] 0.0
        %393 = vst [vmem:[#allocation2 + $0x110] sm:$0xff] 0.0
        %394 = vst [vmem:[#allocation2 + $0x118] sm:$0xff] 0.0
        %395 = vst [vmem:[#allocation2 + $0x120] sm:$0xff] 0.0
        %396 = vst [vmem:[#allocation2 + $0x128] sm:$0xff] 0.0
        %397 = vst [vmem:[#allocation2 + $0x130] sm:$0xff] 0.0
        %398 = vst [vmem:[#allocation2 + $0x138] sm:$0xff] 0.0
        %399 = vst [vmem:[#allocation2 + $0x140] sm:$0xff] 0.0
        %400 = vst [vmem:[#allocation2 + $0x148] sm:$0xff] 0.0
        %401 = vst [vmem:[#allocation2 + $0x150] sm:$0xff] 0.0
        %402 = vst [vmem:[#allocation2 + $0x158] sm:$0xff] 0.0
        %403 = vst [vmem:[#allocation2 + $0x160] sm:$0xff] 0.0
        %404 = vst [vmem:[#allocation2 + $0x168] sm:$0xff] 0.0
        %405 = vst [vmem:[#allocation2 + $0x170] sm:$0xff] 0.0
        %406 = vst [vmem:[#allocation2 + $0x178] sm:$0xff] 0.0
        %407 = vst [vmem:[#allocation2 + $0x180] sm:$0xff] 0.0
        %408 = vst [vmem:[#allocation2 + $0x188] sm:$0xff] 0.0
        %409 = vst [vmem:[#allocation2 + $0x190] sm:$0xff] 0.0
        %410 = vst [vmem:[#allocation2 + $0x198] sm:$0xff] 0.0
        %411 = vst [vmem:[#allocation2 + $0x1a0] sm:$0xff] 0.0
        %412 = vst [vmem:[#allocation2 + $0x1a8] sm:$0xff] 0.0
        %413 = vst [vmem:[#allocation2 + $0x1b0] sm:$0xff] 0.0
        %414 = vst [vmem:[#allocation2 + $0x1b8] sm:$0xff] 0.0
        %415 = vst [vmem:[#allocation2 + $0x1c0] sm:$0xff] 0.0
        %416 = vst [vmem:[#allocation2 + $0x1c8] sm:$0xff] 0.0
        %417 = vst [vmem:[#allocation2 + $0x1d0] sm:$0xff] 0.0
        %418 = vst [vmem:[#allocation2 + $0x1d8] sm:$0xff] 0.0
        %419 = vst [vmem:[#allocation2 + $0x1e0] sm:$0xff] 0.0
        %420 = vst [vmem:[#allocation2 + $0x1e8] sm:$0xff] 0.0
        %421 = vst [vmem:[#allocation2 + $0x1f0] sm:$0xff] 0.0
        %422 = vst [vmem:[#allocation2 + $0x1f8] sm:$0xff] 0.0
        %423 = vst [vmem:[#allocation2 + $0x200] sm:$0xff] 0.0
        %424 = vst [vmem:[#allocation2 + $0x208] sm:$0xff] 0.0
        %425 = vst [vmem:[#allocation2 + $0x210] sm:$0xff] 0.0
        %426 = vst [vmem:[#allocation2 + $0x218] sm:$0xff] 0.0
        %427 = vst [vmem:[#allocation2 + $0x220] sm:$0xff] 0.0
        %428 = vst [vmem:[#allocation2 + $0x228] sm:$0xff] 0.0
        %429 = vst [vmem:[#allocation2 + $0x230] sm:$0xff] 0.0
        %430 = vst [vmem:[#allocation2 + $0x238] sm:$0xff] 0.0
        %431 = vst [vmem:[#allocation2 + $0x240] sm:$0xff] 0.0
        %432 = vst [vmem:[#allocation2 + $0x248] sm:$0xff] 0.0
        %433 = vst [vmem:[#allocation2 + $0x250] sm:$0xff] 0.0
        %434 = vst [vmem:[#allocation2 + $0x258] sm:$0xff] 0.0
        %435 = vst [vmem:[#allocation2 + $0x260] sm:$0xff] 0.0
        %436 = vst [vmem:[#allocation2 + $0x268] sm:$0xff] 0.0
        %437 = vst [vmem:[#allocation2 + $0x270] sm:$0xff] 0.0
        %438 = vst [vmem:[#allocation2 + $0x278] sm:$0xff] 0.0
        %439 = vst [vmem:[#allocation2 + $0x280] sm:$0xff] 0.0
        %440 = vst [vmem:[#allocation2 + $0x288] sm:$0xff] 0.0
        %441 = vst [vmem:[#allocation2 + $0x290] sm:$0xff] 0.0
        %442 = vst [vmem:[#allocation2 + $0x298] sm:$0xff] 0.0
        %443 = vst [vmem:[#allocation2 + $0x2a0] sm:$0xff] 0.0
        %444 = vst [vmem:[#allocation2 + $0x2a8] sm:$0xff] 0.0
        %445 = vst [vmem:[#allocation2 + $0x2b0] sm:$0xff] 0.0
        %446 = vst [vmem:[#allocation2 + $0x2b8] sm:$0xff] 0.0
        %447 = vst [vmem:[#allocation2 + $0x2c0] sm:$0xff] 0.0
        %448 = vst [vmem:[#allocation2 + $0x2c8] sm:$0xff] 0.0
        %449 = vst [vmem:[#allocation2 + $0x2d0] sm:$0xff] 0.0
        %450 = vst [vmem:[#allocation2 + $0x2d8] sm:$0xff] 0.0
        %451 = vst [vmem:[#allocation2 + $0x2e0] sm:$0xff] 0.0
        %452 = vst [vmem:[#allocation2 + $0x2e8] sm:$0xff] 0.0
        %453 = vst [vmem:[#allocation2 + $0x2f0] sm:$0xff] 0.0
        %454 = vst [vmem:[#allocation2 + $0x2f8] sm:$0xff] 0.0
        %455 = vst [vmem:[#allocation2 + $0x300] sm:$0xff] 0.0
        %456 = vst [vmem:[#allocation2 + $0x308] sm:$0xff] 0.0
        %457 = vst [vmem:[#allocation2 + $0x310] sm:$0xff] 0.0
        %458 = vst [vmem:[#allocation2 + $0x318] sm:$0xff] 0.0
        %459 = vst [vmem:[#allocation2 + $0x320] sm:$0xff] 0.0
        %460 = vst [vmem:[#allocation2 + $0x328] sm:$0xff] 0.0
        %461 = vst [vmem:[#allocation2 + $0x330] sm:$0xff] 0.0
        %462 = vst [vmem:[#allocation2 + $0x338] sm:$0xff] 0.0
        %463 = vst [vmem:[#allocation2 + $0x340] sm:$0xff] 0.0
        %464 = vst [vmem:[#allocation2 + $0x348] sm:$0xff] 0.0
        %465 = vst [vmem:[#allocation2 + $0x350] sm:$0xff] 0.0
        %466 = vst [vmem:[#allocation2 + $0x358] sm:$0xff] 0.0
        %467 = vst [vmem:[#allocation2 + $0x360] sm:$0xff] 0.0
        %468 = vst [vmem:[#allocation2 + $0x368] sm:$0xff] 0.0
        %469 = vst [vmem:[#allocation2 + $0x370] sm:$0xff] 0.0
        %470 = vst [vmem:[#allocation2 + $0x378] sm:$0xff] 0.0
        %471 = vst [vmem:[#allocation2 + $0x380] sm:$0xff] 0.0
        %472 = vst [vmem:[#allocation2 + $0x388] sm:$0xff] 0.0
        %473 = vst [vmem:[#allocation2 + $0x390] sm:$0xff] 0.0
        %474 = vst [vmem:[#allocation2 + $0x398] sm:$0xff] 0.0
        %475 = vst [vmem:[#allocation2 + $0x3a0] sm:$0xff] 0.0
        %476 = vst [vmem:[#allocation2 + $0x3a8] sm:$0xff] 0.0
        %477 = vst [vmem:[#allocation2 + $0x3b0] sm:$0xff] 0.0
        %478 = vst [vmem:[#allocation2 + $0x3b8] sm:$0xff] 0.0
        %479 = vst [vmem:[#allocation2 + $0x3c0] sm:$0xff] 0.0
        %480 = vst [vmem:[#allocation2 + $0x3c8] sm:$0xff] 0.0
        %481 = vst [vmem:[#allocation2 + $0x3d0] sm:$0xff] 0.0
        %482 = vst [vmem:[#allocation2 + $0x3d8] sm:$0xff] 0.0
        %483 = vst [vmem:[#allocation2 + $0x3e0] sm:$0xff] 0.0
        %484 = vst [vmem:[#allocation2 + $0x3e8] sm:$0xff] 0.0
        %v485 = vld [vmem:[%s327] sm:$0x7f]
        %v486 = vld [vmem:[%s327 + $0x8] sm:$0x7f]
        %v487 = vld [vmem:[%s327 + $0x10] sm:$0x7f]
        %v488 = vld [vmem:[%s327 + $0x18] sm:$0x7f]
        %v489 = vld [vmem:[%s327 + $0x20] sm:$0x7f]
        %v490 = vld [vmem:[%s327 + $0x28] sm:$0x7f]
        %v491 = vld [vmem:[%s327 + $0x30] sm:$0x7f]
        %v492 = vld [vmem:[%s327 + $0x38] sm:$0x7f]
        %v493 = vld [vmem:[%s327 + $0x40] sm:$0x7f]
        %v494 = vld [vmem:[%s327 + $0x48] sm:$0x7f]
        %v495 = vld [vmem:[%s327 + $0x50] sm:$0x7f]
        %v496 = vld [vmem:[%s327 + $0x58] sm:$0x7f]
        %v497 = vld [vmem:[%s327 + $0x60] sm:$0x7f]
        %v498 = vld [vmem:[%s327 + $0x68] sm:$0x7f]
        %v499 = vld [vmem:[%s327 + $0x70] sm:$0x7f]
        %v500 = vld [vmem:[%s327 + $0x78] sm:$0x7f]
        %v501 = vld [vmem:[%s327 + $0x80] sm:$0x7f]
        %v502 = vld [vmem:[%s327 + $0x88] sm:$0x7f]
        %v503 = vld [vmem:[%s327 + $0x90] sm:$0x7f]
        %v504 = vld [vmem:[%s327 + $0x98] sm:$0x7f]
        %v505 = vld [vmem:[%s327 + $0xa0] sm:$0x7f]
        %v506 = vld [vmem:[%s327 + $0xa8] sm:$0x7f]
        %v507 = vld [vmem:[%s327 + $0xb0] sm:$0x7f]
        %v508 = vld [vmem:[%s327 + $0xb8] sm:$0x7f]
        %v509 = vld [vmem:[%s327 + $0xc0] sm:$0x7f]
        %v510 = vld [vmem:[%s327 + $0xc8] sm:$0x7f]
        %v511 = vld [vmem:[%s327 + $0xd0] sm:$0x7f]
        %v512 = vld [vmem:[%s327 + $0xd8] sm:$0x7f]
        %v513 = vld [vmem:[%s327 + $0xe0] sm:$0x7f]
        %v514 = vld [vmem:[%s327 + $0xe8] sm:$0x7f]
        %v515 = vld [vmem:[%s327 + $0xf0] sm:$0x7f]
        %v516 = vld [vmem:[%s327 + $0xf8] sm:$0x7f]
        %v517 = vld [vmem:[%s327 + $0x100] sm:$0x7f]
        %v518 = vld [vmem:[%s327 + $0x108] sm:$0x7f]
        %v519 = vld [vmem:[%s327 + $0x110] sm:$0x7f]
        %v520 = vld [vmem:[%s327 + $0x118] sm:$0x7f]
        %v521 = vld [vmem:[%s327 + $0x120] sm:$0x7f]
        %v522 = vld [vmem:[%s327 + $0x128] sm:$0x7f]
        %v523 = vld [vmem:[%s327 + $0x130] sm:$0x7f]
        %v524 = vld [vmem:[%s327 + $0x138] sm:$0x7f]
        %v525 = vld [vmem:[%s327 + $0x140] sm:$0x7f]
        %v526 = vld [vmem:[%s327 + $0x148] sm:$0x7f]
        %v527 = vld [vmem:[%s327 + $0x150] sm:$0x7f]
        %v528 = vld [vmem:[%s327 + $0x158] sm:$0x7f]
        %v529 = vld [vmem:[%s327 + $0x160] sm:$0x7f]
        %v530 = vld [vmem:[%s327 + $0x168] sm:$0x7f]
        %v531 = vld [vmem:[%s327 + $0x170] sm:$0x7f]
        %v532 = vld [vmem:[%s327 + $0x178] sm:$0x7f]
        %v533 = vld [vmem:[%s327 + $0x180] sm:$0x7f]
        %v534 = vld [vmem:[%s327 + $0x188] sm:$0x7f]
        %v535 = vld [vmem:[%s327 + $0x190] sm:$0x7f]
        %v536 = vld [vmem:[%s327 + $0x198] sm:$0x7f]
        %v537 = vld [vmem:[%s327 + $0x1a0] sm:$0x7f]
        %v538 = vld [vmem:[%s327 + $0x1a8] sm:$0x7f]
        %v539 = vld [vmem:[%s327 + $0x1b0] sm:$0x7f]
        %v540 = vld [vmem:[%s327 + $0x1b8] sm:$0x7f]
        %v541 = vld [vmem:[%s327 + $0x1c0] sm:$0x7f]
        %v542 = vld [vmem:[%s327 + $0x1c8] sm:$0x7f]
        %v543 = vld [vmem:[%s327 + $0x1d0] sm:$0x7f]
        %v544 = vld [vmem:[%s327 + $0x1d8] sm:$0x7f]
        %v545 = vld [vmem:[%s327 + $0x1e0] sm:$0x7f]
        %v546 = vld [vmem:[%s327 + $0x1e8] sm:$0x7f]
        %v547 = vld [vmem:[%s327 + $0x1f0] sm:$0x7f]
        %548 = vst [vmem:[#allocation2 + $0x48] sm:$0x7f] %v485
        %549 = vst [vmem:[#allocation2 + $0x50] sm:$0x7f] %v486
        %550 = vst [vmem:[#allocation2 + $0x58] sm:$0x7f] %v487
        %551 = vst [vmem:[#allocation2 + $0x60] sm:$0x7f] %v488
        %552 = vst [vmem:[#allocation2 + $0x68] sm:$0x7f] %v489
        %553 = vst [vmem:[#allocation2 + $0x70] sm:$0x7f] %v490
        %554 = vst [vmem:[#allocation2 + $0x78] sm:$0x7f] %v491
        %555 = vst [vmem:[#allocation2 + $0x80] sm:$0x7f] %v492
        %556 = vst [vmem:[#allocation2 + $0x88] sm:$0x7f] %v493
        %557 = vst [vmem:[#allocation2 + $0xd8] sm:$0x7f] %v494
        %558 = vst [vmem:[#allocation2 + $0xe0] sm:$0x7f] %v495
        %559 = vst [vmem:[#allocation2 + $0xe8] sm:$0x7f] %v496
        %560 = vst [vmem:[#allocation2 + $0xf0] sm:$0x7f] %v497
        %561 = vst [vmem:[#allocation2 + $0xf8] sm:$0x7f] %v498
        %562 = vst [vmem:[#allocation2 + $0x100] sm:$0x7f] %v499
        %563 = vst [vmem:[#allocation2 + $0x108] sm:$0x7f] %v500
        %564 = vst [vmem:[#allocation2 + $0x110] sm:$0x7f] %v501
        %565 = vst [vmem:[#allocation2 + $0x118] sm:$0x7f] %v502
        %566 = vst [vmem:[#allocation2 + $0x168] sm:$0x7f] %v503
        %567 = vst [vmem:[#allocation2 + $0x170] sm:$0x7f] %v504
        %568 = vst [vmem:[#allocation2 + $0x178] sm:$0x7f] %v505
        %569 = vst [vmem:[#allocation2 + $0x180] sm:$0x7f] %v506
        %570 = vst [vmem:[#allocation2 + $0x188] sm:$0x7f] %v507
        %571 = vst [vmem:[#allocation2 + $0x190] sm:$0x7f] %v508
        %572 = vst [vmem:[#allocation2 + $0x198] sm:$0x7f] %v509
        %573 = vst [vmem:[#allocation2 + $0x1a0] sm:$0x7f] %v510
        %574 = vst [vmem:[#allocation2 + $0x1a8] sm:$0x7f] %v511
        %575 = vst [vmem:[#allocation2 + $0x1f8] sm:$0x7f] %v512
        %576 = vst [vmem:[#allocation2 + $0x200] sm:$0x7f] %v513
        %577 = vst [vmem:[#allocation2 + $0x208] sm:$0x7f] %v514
        %578 = vst [vmem:[#allocation2 + $0x210] sm:$0x7f] %v515
        %579 = vst [vmem:[#allocation2 + $0x218] sm:$0x7f] %v516
        %580 = vst [vmem:[#allocation2 + $0x220] sm:$0x7f] %v517
        %581 = vst [vmem:[#allocation2 + $0x228] sm:$0x7f] %v518
        %582 = vst [vmem:[#allocation2 + $0x230] sm:$0x7f] %v519
        %583 = vst [vmem:[#allocation2 + $0x238] sm:$0x7f] %v520
        %584 = vst [vmem:[#allocation2 + $0x288] sm:$0x7f] %v521
        %585 = vst [vmem:[#allocation2 + $0x290] sm:$0x7f] %v522
        %586 = vst [vmem:[#allocation2 + $0x298] sm:$0x7f] %v523
        %587 = vst [vmem:[#allocation2 + $0x2a0] sm:$0x7f] %v524
        %588 = vst [vmem:[#allocation2 + $0x2a8] sm:$0x7f] %v525
        %589 = vst [vmem:[#allocation2 + $0x2b0] sm:$0x7f] %v526
        %590 = vst [vmem:[#allocation2 + $0x2b8] sm:$0x7f] %v527
        %591 = vst [vmem:[#allocation2 + $0x2c0] sm:$0x7f] %v528
        %592 = vst [vmem:[#allocation2 + $0x2c8] sm:$0x7f] %v529
        %593 = vst [vmem:[#allocation2 + $0x318] sm:$0x7f] %v530
        %594 = vst [vmem:[#allocation2 + $0x320] sm:$0x7f] %v531
        %595 = vst [vmem:[#allocation2 + $0x328] sm:$0x7f] %v532
        %596 = vst [vmem:[#allocation2 + $0x330] sm:$0x7f] %v533
        %597 = vst [vmem:[#allocation2 + $0x338] sm:$0x7f] %v534
        %598 = vst [vmem:[#allocation2 + $0x340] sm:$0x7f] %v535
        %599 = vst [vmem:[#allocation2 + $0x348] sm:$0x7f] %v536
        %600 = vst [vmem:[#allocation2 + $0x350] sm:$0x7f] %v537
        %601 = vst [vmem:[#allocation2 + $0x358] sm:$0x7f] %v538
        %602 = vst [vmem:[#allocation2 + $0x3a8] sm:$0x7f] %v539
        %603 = vst [vmem:[#allocation2 + $0x3b0] sm:$0x7f] %v540
        %604 = vst [vmem:[#allocation2 + $0x3b8] sm:$0x7f] %v541
        %605 = vst [vmem:[#allocation2 + $0x3c0] sm:$0x7f] %v542
        %606 = vst [vmem:[#allocation2 + $0x3c8] sm:$0x7f] %v543
        %607 = vst [vmem:[#allocation2 + $0x3d0] sm:$0x7f] %v544
        %608 = vst [vmem:[#allocation2 + $0x3d8] sm:$0x7f] %v545
        %609 = vst [vmem:[#allocation2 + $0x3e0] sm:$0x7f] %v546
        %610 = vst [vmem:[#allocation2 + $0x3e8] sm:$0x7f] %v547
        %v611 = vld [vmem:[%s334] sm:$0xff]
        %v612 = vld [vmem:[%s334 + $0x8] sm:$0xff]
        %v613 = vld [vmem:[%s334 + $0x10] sm:$0xff]
        %v614 = vld [vmem:[%s334 + $0x18] sm:$0xff]
        %v615 = vld [vmem:[%s334 + $0x20] sm:$0xff]
        %v616 = vld [vmem:[%s334 + $0x28] sm:$0xff]
        %v617 = vld [vmem:[%s334 + $0x30] sm:$0xff]
        %v618 = vld [vmem:[%s334 + $0x38] sm:$0xff]
        %v619 = vld [vmem:[%s334 + $0x40] sm:$0xff]
        %v620 = vld [vmem:[%s334 + $0x48] sm:$0x1]
        %v621 = vld [vmem:[%s334 + $0x50] sm:$0x1]
        %v622 = vld [vmem:[%s334 + $0x58] sm:$0x1]
        %v623 = vld [vmem:[%s334 + $0x60] sm:$0x1]
        %v624 = vld [vmem:[%s334 + $0x68] sm:$0x1]
        %v625 = vld [vmem:[%s334 + $0x70] sm:$0x1]
        %v626 = vld [vmem:[%s334 + $0x78] sm:$0x1]
        %v627 = vld [vmem:[%s334 + $0x80] sm:$0x1]
        %v628 = vld [vmem:[%s334 + $0x88] sm:$0x1]
        %v629 = vld [vmem:[#allocation2] sm:$0x80]
        %v630 = vld [vmem:[#allocation2 + $0x8] sm:$0x80]
        %v631 = vld [vmem:[#allocation2 + $0x10] sm:$0x80]
        %v632 = vld [vmem:[#allocation2 + $0x18] sm:$0x80]
        %v633 = vld [vmem:[#allocation2 + $0x20] sm:$0x80]
        %v634 = vld [vmem:[#allocation2 + $0x28] sm:$0x80]
        %v635 = vld [vmem:[#allocation2 + $0x30] sm:$0x80]
        %v636 = vld [vmem:[#allocation2 + $0x38] sm:$0x80]
        %v637 = vld [vmem:[#allocation2 + $0x40] sm:$0x80]
        %v638 = vld [vmem:[#allocation2 + $0x48] sm:$0x3f]
        %v639 = vld [vmem:[#allocation2 + $0x50] sm:$0x3f]
        %v640 = vld [vmem:[#allocation2 + $0x58] sm:$0x3f]
        %v641 = vld [vmem:[#allocation2 + $0x60] sm:$0x3f]
        %v642 = vld [vmem:[#allocation2 + $0x68] sm:$0x3f]
        %v643 = vld [vmem:[#allocation2 + $0x70] sm:$0x3f]
        %v644 = vld [vmem:[#allocation2 + $0x78] sm:$0x3f]
        %v645 = vld [vmem:[#allocation2 + $0x80] sm:$0x3f]
        %v646 = vld [vmem:[#allocation2 + $0x88] sm:$0x3f]
        %v647 = vlaneseq
        %v648 = vshrl.u32 %v647, 7
        %v649 = vsub.s32 3, %v648
        %v650 = vrot.slane %v611, %v649
        %v651 = vlaneseq
        %v652 = vshrl.u32 %v651, 7
        %v653 = vsub.s32 3, %v652
        %v654 = vrot.slane %v612, %v653
        %v655 = vlaneseq
        %v656 = vshrl.u32 %v655, 7
        %v657 = vsub.s32 3, %v656
        %v658 = vrot.slane %v613, %v657
        %v659 = vlaneseq
        %v660 = vshrl.u32 %v659, 7
        %v661 = vsub.s32 3, %v660
        %v662 = vrot.slane %v614, %v661
        %v663 = vlaneseq
        %v664 = vshrl.u32 %v663, 7
        %v665 = vsub.s32 3, %v664
        %v666 = vrot.slane %v615, %v665
        %v667 = vlaneseq
        %v668 = vshrl.u32 %v667, 7
        %v669 = vsub.s32 3, %v668
        %v670 = vrot.slane %v616, %v669
        %v671 = vlaneseq
        %v672 = vshrl.u32 %v671, 7
        %v673 = vsub.s32 3, %v672
        %v674 = vrot.slane %v617, %v673
        %v675 = vlaneseq
        %v676 = vshrl.u32 %v675, 7
        %v677 = vsub.s32 3, %v676
        %v678 = vrot.slane %v618, %v677
        %v679 = vlaneseq
        %v680 = vshrl.u32 %v679, 7
        %v681 = vsub.s32 3, %v680
        %v682 = vrot.slane %v619, %v681
        %v683 = vmul.f32 %v629, %v650
        %v684 = vmul.f32 %v630, %v654
        %v685 = vmul.f32 %v631, %v658
        %v686 = vmul.f32 %v632, %v662
        %v687 = vmul.f32 %v633, %v666
        %v688 = vmul.f32 %v634, %v670
        %v689 = vmul.f32 %v635, %v674
        %v690 = vmul.f32 %v636, %v678
        %v691 = vmul.f32 %v637, %v682
        %v692 = vmul.f32 %v638, %v650
        %v693 = vmul.f32 %v639, %v654
        %v694 = vmul.f32 %v640, %v658
        %v695 = vmul.f32 %v641, %v662
        %v696 = vmul.f32 %v642, %v666
        %v697 = vmul.f32 %v643, %v670
        %v698 = vmul.f32 %v644, %v674
        %v699 = vmul.f32 %v645, %v678
        %v700 = vmul.f32 %v646, %v682
        %v701 = vld [vmem:[#allocation2 + $0x48] sm:$0x7f]
        %v702 = vld [vmem:[#allocation2 + $0x50] sm:$0x7f]
        %v703 = vld [vmem:[#allocation2 + $0x58] sm:$0x7f]
        %v704 = vld [vmem:[#allocation2 + $0x60] sm:$0x7f]
        %v705 = vld [vmem:[#allocation2 + $0x68] sm:$0x7f]
        %v706 = vld [vmem:[#allocation2 + $0x70] sm:$0x7f]
        %v707 = vld [vmem:[#allocation2 + $0x78] sm:$0x7f]
        %v708 = vld [vmem:[#allocation2 + $0x80] sm:$0x7f]
        %v709 = vld [vmem:[#allocation2 + $0x88] sm:$0x7f]
        %v710 = vlaneseq
        %v711 = vshrl.u32 %v710, 7
        %v712 = vsub.s32 4, %v711
        %v713 = vrot.slane %v611, %v712
        %v714 = vlaneseq
        %v715 = vshrl.u32 %v714, 7
        %v716 = vsub.s32 4, %v715
        %v717 = vrot.slane %v612, %v716
        %v718 = vlaneseq
        %v719 = vshrl.u32 %v718, 7
        %v720 = vsub.s32 4, %v719
        %v721 = vrot.slane %v613, %v720
        %v722 = vlaneseq
        %v723 = vshrl.u32 %v722, 7
        %v724 = vsub.s32 4, %v723
        %v725 = vrot.slane %v614, %v724
        %v726 = vlaneseq
        %v727 = vshrl.u32 %v726, 7
        %v728 = vsub.s32 4, %v727
        %v729 = vrot.slane %v615, %v728
        %v730 = vlaneseq
        %v731 = vshrl.u32 %v730, 7
        %v732 = vsub.s32 4, %v731
        %v733 = vrot.slane %v616, %v732
        %v734 = vlaneseq
        %v735 = vshrl.u32 %v734, 7
        %v736 = vsub.s32 4, %v735
        %v737 = vrot.slane %v617, %v736
        %v738 = vlaneseq
        %v739 = vshrl.u32 %v738, 7
        %v740 = vsub.s32 4, %v739
        %v741 = vrot.slane %v618, %v740
        %v742 = vlaneseq
        %v743 = vshrl.u32 %v742, 7
        %v744 = vsub.s32 4, %v743
        %v745 = vrot.slane %v619, %v744
        %v746 = vmul.f32 %v701, %v713
        %v747 = vmul.f32 %v702, %v717
        %v748 = vmul.f32 %v703, %v721
        %v749 = vmul.f32 %v704, %v725
        %v750 = vmul.f32 %v705, %v729
        %v751 = vmul.f32 %v706, %v733
        %v752 = vmul.f32 %v707, %v737
        %v753 = vmul.f32 %v708, %v741
        %v754 = vmul.f32 %v709, %v745
        %v764 = vrot.slane %v746, 1
        %v765 = vrot.slane %v747, 1
        %v766 = vrot.slane %v748, 1
        %v767 = vrot.slane %v749, 1
        %v768 = vrot.slane %v750, 1
        %v769 = vrot.slane %v751, 1
        %v770 = vrot.slane %v752, 1
        %v771 = vrot.slane %v753, 1
        %v772 = vrot.slane %v754, 1
        %v782 = vadd.f32 %v683, %v764
        %v783 = vadd.f32 %v684, %v765
        %v784 = vadd.f32 %v685, %v766
        %v785 = vadd.f32 %v686, %v767
        %v786 = vadd.f32 %v687, %v768
        %v787 = vadd.f32 %v688, %v769
        %v788 = vadd.f32 %v689, %v770
        %v789 = vadd.f32 %v690, %v771
        %v790 = vadd.f32 %v691, %v772
        %v791 = vadd.f32 %v692, %v764
        %v792 = vadd.f32 %v693, %v765
        %v793 = vadd.f32 %v694, %v766
        %v794 = vadd.f32 %v695, %v767
        %v795 = vadd.f32 %v696, %v768
        %v796 = vadd.f32 %v697, %v769
        %v797 = vadd.f32 %v698, %v770
        %v798 = vadd.f32 %v699, %v771
        %v799 = vadd.f32 %v700, %v772
        %v800 = vld [vmem:[#allocation2 + $0x48] sm:$0xfe]
        %v801 = vld [vmem:[#allocation2 + $0x50] sm:$0xfe]
        %v802 = vld [vmem:[#allocation2 + $0x58] sm:$0xfe]
        %v803 = vld [vmem:[#allocation2 + $0x60] sm:$0xfe]
        %v804 = vld [vmem:[#allocation2 + $0x68] sm:$0xfe]
        %v805 = vld [vmem:[#allocation2 + $0x70] sm:$0xfe]
        %v806 = vld [vmem:[#allocation2 + $0x78] sm:$0xfe]
        %v807 = vld [vmem:[#allocation2 + $0x80] sm:$0xfe]
        %v808 = vld [vmem:[#allocation2 + $0x88] sm:$0xfe]
        %v809 = vlaneseq
        %v810 = vshrl.u32 %v809, 7
        %v811 = vsub.s32 5, %v810
        %v812 = vrot.slane %v611, %v811
        %v813 = vlaneseq
        %v814 = vshrl.u32 %v813, 7
        %v815 = vsub.s32 5, %v814
        %v816 = vrot.slane %v612, %v815
        %v817 = vlaneseq
        %v818 = vshrl.u32 %v817, 7
        %v819 = vsub.s32 5, %v818
        %v820 = vrot.slane %v613, %v819
        %v821 = vlaneseq
        %v822 = vshrl.u32 %v821, 7
        %v823 = vsub.s32 5, %v822
        %v824 = vrot.slane %v614, %v823
        %v825 = vlaneseq
        %v826 = vshrl.u32 %v825, 7
        %v827 = vsub.s32 5, %v826
        %v828 = vrot.slane %v615, %v827
        %v829 = vlaneseq
        %v830 = vshrl.u32 %v829, 7
        %v831 = vsub.s32 5, %v830
        %v832 = vrot.slane %v616, %v831
        %v833 = vlaneseq
        %v834 = vshrl.u32 %v833, 7
        %v835 = vsub.s32 5, %v834
        %v836 = vrot.slane %v617, %v835
        %v837 = vlaneseq
        %v838 = vshrl.u32 %v837, 7
        %v839 = vsub.s32 5, %v838
        %v840 = vrot.slane %v618, %v839
        %v841 = vlaneseq
        %v842 = vshrl.u32 %v841, 7
        %v843 = vsub.s32 5, %v842
        %v844 = vrot.slane %v619, %v843
        %v845 = vmul.f32 %v800, %v812
        %v846 = vmul.f32 %v801, %v816
        %v847 = vmul.f32 %v802, %v820
        %v848 = vmul.f32 %v803, %v824
        %v849 = vmul.f32 %v804, %v828
        %v850 = vmul.f32 %v805, %v832
        %v851 = vmul.f32 %v806, %v836
        %v852 = vmul.f32 %v807, %v840
        %v853 = vmul.f32 %v808, %v844
        %v863 = vrot.slane %v845, 2
        %v864 = vrot.slane %v846, 2
        %v865 = vrot.slane %v847, 2
        %v866 = vrot.slane %v848, 2
        %v867 = vrot.slane %v849, 2
        %v868 = vrot.slane %v850, 2
        %v869 = vrot.slane %v851, 2
        %v870 = vrot.slane %v852, 2
        %v871 = vrot.slane %v853, 2
        %v881 = vadd.f32 %v782, %v863
        %v882 = vadd.f32 %v783, %v864
        %v883 = vadd.f32 %v784, %v865
        %v884 = vadd.f32 %v785, %v866
        %v885 = vadd.f32 %v786, %v867
        %v886 = vadd.f32 %v787, %v868
        %v887 = vadd.f32 %v788, %v869
        %v888 = vadd.f32 %v789, %v870
        %v889 = vadd.f32 %v790, %v871
        %v890 = vadd.f32 %v791, %v863
        %v891 = vadd.f32 %v792, %v864
        %v892 = vadd.f32 %v793, %v865
        %v893 = vadd.f32 %v794, %v866
        %v894 = vadd.f32 %v795, %v867
        %v895 = vadd.f32 %v796, %v868
        %v896 = vadd.f32 %v797, %v869
        %v897 = vadd.f32 %v798, %v870
        %v898 = vadd.f32 %v799, %v871
        %s899 = scalar_lea.vmem [#allocation2], 144
        %v900 = vld [vmem:[%s899] sm:$0x80]
        %v901 = vld [vmem:[%s899 + $0x8] sm:$0x80]
        %v902 = vld [vmem:[%s899 + $0x10] sm:$0x80]
        %v903 = vld [vmem:[%s899 + $0x18] sm:$0x80]
        %v904 = vld [vmem:[%s899 + $0x20] sm:$0x80]
        %v905 = vld [vmem:[%s899 + $0x28] sm:$0x80]
        %v906 = vld [vmem:[%s899 + $0x30] sm:$0x80]
        %v907 = vld [vmem:[%s899 + $0x38] sm:$0x80]
        %v908 = vld [vmem:[%s899 + $0x40] sm:$0x80]
        %v909 = vld [vmem:[%s899 + $0x48] sm:$0x3f]
        %v910 = vld [vmem:[%s899 + $0x50] sm:$0x3f]
        %v911 = vld [vmem:[%s899 + $0x58] sm:$0x3f]
        %v912 = vld [vmem:[%s899 + $0x60] sm:$0x3f]
        %v913 = vld [vmem:[%s899 + $0x68] sm:$0x3f]
        %v914 = vld [vmem:[%s899 + $0x70] sm:$0x3f]
        %v915 = vld [vmem:[%s899 + $0x78] sm:$0x3f]
        %v916 = vld [vmem:[%s899 + $0x80] sm:$0x3f]
        %v917 = vld [vmem:[%s899 + $0x88] sm:$0x3f]
        %v918 = vlaneseq
        %v919 = vshrl.u32 %v918, 7
        %v920 = vsub.s32 6, %v919
        %v921 = vrot.slane %v611, %v920
        %v922 = vlaneseq
        %v923 = vshrl.u32 %v922, 7
        %v924 = vsub.s32 6, %v923
        %v925 = vrot.slane %v612, %v924
        %v926 = vlaneseq
        %v927 = vshrl.u32 %v926, 7
        %v928 = vsub.s32 6, %v927
        %v929 = vrot.slane %v613, %v928
        %v930 = vlaneseq
        %v931 = vshrl.u32 %v930, 7
        %v932 = vsub.s32 6, %v931
        %v933 = vrot.slane %v614, %v932
        %v934 = vlaneseq
        %v935 = vshrl.u32 %v934, 7
        %v936 = vsub.s32 6, %v935
        %v937 = vrot.slane %v615, %v936
        %v938 = vlaneseq
        %v939 = vshrl.u32 %v938, 7
        %v940 = vsub.s32 6, %v939
        %v941 = vrot.slane %v616, %v940
        %v942 = vlaneseq
        %v943 = vshrl.u32 %v942, 7
        %v944 = vsub.s32 6, %v943
        %v945 = vrot.slane %v617, %v944
        %v946 = vlaneseq
        %v947 = vshrl.u32 %v946, 7
        %v948 = vsub.s32 6, %v947
        %v949 = vrot.slane %v618, %v948
        %v950 = vlaneseq
        %v951 = vshrl.u32 %v950, 7
        %v952 = vsub.s32 6, %v951
        %v953 = vrot.slane %v619, %v952
        %v954 = vmul.f32 %v900, %v921
        %v955 = vmul.f32 %v901, %v925
        %v956 = vmul.f32 %v902, %v929
        %v957 = vmul.f32 %v903, %v933
        %v958 = vmul.f32 %v904, %v937
        %v959 = vmul.f32 %v905, %v941
        %v960 = vmul.f32 %v906, %v945
        %v961 = vmul.f32 %v907, %v949
        %v962 = vmul.f32 %v908, %v953
        %v963 = vmul.f32 %v909, %v921
        %v964 = vmul.f32 %v910, %v925
        %v965 = vmul.f32 %v911, %v929
        %v966 = vmul.f32 %v912, %v933
        %v967 = vmul.f32 %v913, %v937
        %v968 = vmul.f32 %v914, %v941
        %v969 = vmul.f32 %v915, %v945
        %v970 = vmul.f32 %v916, %v949
        %v971 = vmul.f32 %v917, %v953
        %v972 = vadd.f32 %v881, %v954
        %v973 = vadd.f32 %v882, %v955
        %v974 = vadd.f32 %v883, %v956
        %v975 = vadd.f32 %v884, %v957
        %v976 = vadd.f32 %v885, %v958
        %v977 = vadd.f32 %v886, %v959
        %v978 = vadd.f32 %v887, %v960
        %v979 = vadd.f32 %v888, %v961
        %v980 = vadd.f32 %v889, %v962
        %v981 = vadd.f32 %v890, %v963
        %v982 = vadd.f32 %v891, %v964
        %v983 = vadd.f32 %v892, %v965
        %v984 = vadd.f32 %v893, %v966
        %v985 = vadd.f32 %v894, %v967
        %v986 = vadd.f32 %v895, %v968
        %v987 = vadd.f32 %v896, %v969
        %v988 = vadd.f32 %v897, %v970
        %v989 = vadd.f32 %v898, %v971
        %v990 = vld [vmem:[%s899 + $0x48] sm:$0x7f]
        %v991 = vld [vmem:[%s899 + $0x50] sm:$0x7f]
        %v992 = vld [vmem:[%s899 + $0x58] sm:$0x7f]
        %v993 = vld [vmem:[%s899 + $0x60] sm:$0x7f]
        %v994 = vld [vmem:[%s899 + $0x68] sm:$0x7f]
        %v995 = vld [vmem:[%s899 + $0x70] sm:$0x7f]
        %v996 = vld [vmem:[%s899 + $0x78] sm:$0x7f]
        %v997 = vld [vmem:[%s899 + $0x80] sm:$0x7f]
        %v998 = vld [vmem:[%s899 + $0x88] sm:$0x7f]
        %v999 = vlaneseq
        %v1000 = vshrl.u32 %v999, 7
        %v1001 = vsub.s32 7, %v1000
        %v1002 = vrot.slane %v611, %v1001
        %v1003 = vlaneseq
        %v1004 = vshrl.u32 %v1003, 7
        %v1005 = vsub.s32 7, %v1004
        %v1006 = vrot.slane %v612, %v1005
        %v1007 = vlaneseq
        %v1008 = vshrl.u32 %v1007, 7
        %v1009 = vsub.s32 7, %v1008
        %v1010 = vrot.slane %v613, %v1009
        %v1011 = vlaneseq
        %v1012 = vshrl.u32 %v1011, 7
        %v1013 = vsub.s32 7, %v1012
        %v1014 = vrot.slane %v614, %v1013
        %v1015 = vlaneseq
        %v1016 = vshrl.u32 %v1015, 7
        %v1017 = vsub.s32 7, %v1016
        %v1018 = vrot.slane %v615, %v1017
        %v1019 = vlaneseq
        %v1020 = vshrl.u32 %v1019, 7
        %v1021 = vsub.s32 7, %v1020
        %v1022 = vrot.slane %v616, %v1021
        %v1023 = vlaneseq
        %v1024 = vshrl.u32 %v1023, 7
        %v1025 = vsub.s32 7, %v1024
        %v1026 = vrot.slane %v617, %v1025
        %v1027 = vlaneseq
        %v1028 = vshrl.u32 %v1027, 7
        %v1029 = vsub.s32 7, %v1028
        %v1030 = vrot.slane %v618, %v1029
        %v1031 = vlaneseq
        %v1032 = vshrl.u32 %v1031, 7
        %v1033 = vsub.s32 7, %v1032
        %v1034 = vrot.slane %v619, %v1033
        %v1035 = vmul.f32 %v990, %v1002
        %v1036 = vmul.f32 %v991, %v1006
        %v1037 = vmul.f32 %v992, %v1010
        %v1038 = vmul.f32 %v993, %v1014
        %v1039 = vmul.f32 %v994, %v1018
        %v1040 = vmul.f32 %v995, %v1022
        %v1041 = vmul.f32 %v996, %v1026
        %v1042 = vmul.f32 %v997, %v1030
        %v1043 = vmul.f32 %v998, %v1034
        %v1053 = vrot.slane %v1035, 1
        %v1054 = vrot.slane %v1036, 1
        %v1055 = vrot.slane %v1037, 1
        %v1056 = vrot.slane %v1038, 1
        %v1057 = vrot.slane %v1039, 1
        %v1058 = vrot.slane %v1040, 1
        %v1059 = vrot.slane %v1041, 1
        %v1060 = vrot.slane %v1042, 1
        %v1061 = vrot.slane %v1043, 1
        %v1071 = vadd.f32 %v972, %v1053
        %v1072 = vadd.f32 %v973, %v1054
        %v1073 = vadd.f32 %v974, %v1055
        %v1074 = vadd.f32 %v975, %v1056
        %v1075 = vadd.f32 %v976, %v1057
        %v1076 = vadd.f32 %v977, %v1058
        %v1077 = vadd.f32 %v978, %v1059
        %v1078 = vadd.f32 %v979, %v1060
        %v1079 = vadd.f32 %v980, %v1061
        %v1080 = vadd.f32 %v981, %v1053
        %v1081 = vadd.f32 %v982, %v1054
        %v1082 = vadd.f32 %v983, %v1055
        %v1083 = vadd.f32 %v984, %v1056
        %v1084 = vadd.f32 %v985, %v1057
        %v1085 = vadd.f32 %v986, %v1058
        %v1086 = vadd.f32 %v987, %v1059
        %v1087 = vadd.f32 %v988, %v1060
        %v1088 = vadd.f32 %v989, %v1061
        %v1089 = vld [vmem:[%s899 + $0x48] sm:$0xfe]
        %v1090 = vld [vmem:[%s899 + $0x50] sm:$0xfe]
        %v1091 = vld [vmem:[%s899 + $0x58] sm:$0xfe]
        %v1092 = vld [vmem:[%s899 + $0x60] sm:$0xfe]
        %v1093 = vld [vmem:[%s899 + $0x68] sm:$0xfe]
        %v1094 = vld [vmem:[%s899 + $0x70] sm:$0xfe]
        %v1095 = vld [vmem:[%s899 + $0x78] sm:$0xfe]
        %v1096 = vld [vmem:[%s899 + $0x80] sm:$0xfe]
        %v1097 = vld [vmem:[%s899 + $0x88] sm:$0xfe]
        %v1098 = vlaneseq
        %v1099 = vshrl.u32 %v1098, 7
        %v1100 = vsub.s32 0, %v1099
        %v1101 = vrot.slane %v620, %v1100
        %v1102 = vlaneseq
        %v1103 = vshrl.u32 %v1102, 7
        %v1104 = vsub.s32 0, %v1103
        %v1105 = vrot.slane %v621, %v1104
        %v1106 = vlaneseq
        %v1107 = vshrl.u32 %v1106, 7
        %v1108 = vsub.s32 0, %v1107
        %v1109 = vrot.slane %v622, %v1108
        %v1110 = vlaneseq
        %v1111 = vshrl.u32 %v1110, 7
        %v1112 = vsub.s32 0, %v1111
        %v1113 = vrot.slane %v623, %v1112
        %v1114 = vlaneseq
        %v1115 = vshrl.u32 %v1114, 7
        %v1116 = vsub.s32 0, %v1115
        %v1117 = vrot.slane %v624, %v1116
        %v1118 = vlaneseq
        %v1119 = vshrl.u32 %v1118, 7
        %v1120 = vsub.s32 0, %v1119
        %v1121 = vrot.slane %v625, %v1120
        %v1122 = vlaneseq
        %v1123 = vshrl.u32 %v1122, 7
        %v1124 = vsub.s32 0, %v1123
        %v1125 = vrot.slane %v626, %v1124
        %v1126 = vlaneseq
        %v1127 = vshrl.u32 %v1126, 7
        %v1128 = vsub.s32 0, %v1127
        %v1129 = vrot.slane %v627, %v1128
        %v1130 = vlaneseq
        %v1131 = vshrl.u32 %v1130, 7
        %v1132 = vsub.s32 0, %v1131
        %v1133 = vrot.slane %v628, %v1132
        %v1134 = vmul.f32 %v1089, %v1101
        %v1135 = vmul.f32 %v1090, %v1105
        %v1136 = vmul.f32 %v1091, %v1109
        %v1137 = vmul.f32 %v1092, %v1113
        %v1138 = vmul.f32 %v1093, %v1117
        %v1139 = vmul.f32 %v1094, %v1121
        %v1140 = vmul.f32 %v1095, %v1125
        %v1141 = vmul.f32 %v1096, %v1129
        %v1142 = vmul.f32 %v1097, %v1133
        %v1152 = vrot.slane %v1134, 2
        %v1153 = vrot.slane %v1135, 2
        %v1154 = vrot.slane %v1136, 2
        %v1155 = vrot.slane %v1137, 2
        %v1156 = vrot.slane %v1138, 2
        %v1157 = vrot.slane %v1139, 2
        %v1158 = vrot.slane %v1140, 2
        %v1159 = vrot.slane %v1141, 2
        %v1160 = vrot.slane %v1142, 2
        %v1170 = vadd.f32 %v1071, %v1152
        %v1171 = vadd.f32 %v1072, %v1153
        %v1172 = vadd.f32 %v1073, %v1154
        %v1173 = vadd.f32 %v1074, %v1155
        %v1174 = vadd.f32 %v1075, %v1156
        %v1175 = vadd.f32 %v1076, %v1157
        %v1176 = vadd.f32 %v1077, %v1158
        %v1177 = vadd.f32 %v1078, %v1159
        %v1178 = vadd.f32 %v1079, %v1160
        %v1179 = vadd.f32 %v1080, %v1152
        %v1180 = vadd.f32 %v1081, %v1153
        %v1181 = vadd.f32 %v1082, %v1154
        %v1182 = vadd.f32 %v1083, %v1155
        %v1183 = vadd.f32 %v1084, %v1156
        %v1184 = vadd.f32 %v1085, %v1157
        %v1185 = vadd.f32 %v1086, %v1158
        %v1186 = vadd.f32 %v1087, %v1159
        %v1187 = vadd.f32 %v1088, %v1160
        %vm1206 = vcmask 1040384
        %v1207 = vrot.slane %v1170, 7
        %v1208 = vrot.slane %v1179, 7
        %v1209 = vsel %vm1206, %v1207, %v1208
        %v1210 = vrot.slane %v1171, 7
        %v1211 = vrot.slane %v1180, 7
        %v1212 = vsel %vm1206, %v1210, %v1211
        %v1213 = vrot.slane %v1172, 7
        %v1214 = vrot.slane %v1181, 7
        %v1215 = vsel %vm1206, %v1213, %v1214
        %v1216 = vrot.slane %v1173, 7
        %v1217 = vrot.slane %v1182, 7
        %v1218 = vsel %vm1206, %v1216, %v1217
        %v1219 = vrot.slane %v1174, 7
        %v1220 = vrot.slane %v1183, 7
        %v1221 = vsel %vm1206, %v1219, %v1220
        %v1222 = vrot.slane %v1175, 7
        %v1223 = vrot.slane %v1184, 7
        %v1224 = vsel %vm1206, %v1222, %v1223
        %v1225 = vrot.slane %v1176, 7
        %v1226 = vrot.slane %v1185, 7
        %v1227 = vsel %vm1206, %v1225, %v1226
        %v1228 = vrot.slane %v1177, 7
        %v1229 = vrot.slane %v1186, 7
        %v1230 = vsel %vm1206, %v1228, %v1229
        %v1231 = vrot.slane %v1178, 7
        %v1232 = vrot.slane %v1187, 7
        %v1233 = vsel %vm1206, %v1231, %v1232
        %1243 = vst [vmem:[%s355] sm:$0x7f] %v1209
        %1244 = vst [vmem:[%s355 + $0x8] sm:$0x7f] %v1212
        %1245 = vst [vmem:[%s355 + $0x10] sm:$0x7f] %v1215
        %1246 = vst [vmem:[%s355 + $0x18] sm:$0x7f] %v1218
        %1247 = vst [vmem:[%s355 + $0x20] sm:$0x7f] %v1221
        %1248 = vst [vmem:[%s355 + $0x28] sm:$0x7f] %v1224
        %1249 = vst [vmem:[%s355 + $0x30] sm:$0x7f] %v1227
        %1250 = vst [vmem:[%s355 + $0x38] sm:$0x7f] %v1230
        %1251 = vst [vmem:[%s355 + $0x40] sm:$0x7f] %v1233
        %v1252 = vld [vmem:[#allocation2] sm:$0x80]
        %v1253 = vld [vmem:[#allocation2 + $0x8] sm:$0x80]
        %v1254 = vld [vmem:[#allocation2 + $0x10] sm:$0x80]
        %v1255 = vld [vmem:[#allocation2 + $0x18] sm:$0x80]
        %v1256 = vld [vmem:[#allocation2 + $0x20] sm:$0x80]
        %v1257 = vld [vmem:[#allocation2 + $0x28] sm:$0x80]
        %v1258 = vld [vmem:[#allocation2 + $0x30] sm:$0x80]
        %v1259 = vld [vmem:[#allocation2 + $0x38] sm:$0x80]
        %v1260 = vld [vmem:[#allocation2 + $0x40] sm:$0x80]
        %v1261 = vld [vmem:[#allocation2 + $0x48] sm:$0x3f]
        %v1262 = vld [vmem:[#allocation2 + $0x50] sm:$0x3f]
        %v1263 = vld [vmem:[#allocation2 + $0x58] sm:$0x3f]
        %v1264 = vld [vmem:[#allocation2 + $0x60] sm:$0x3f]
        %v1265 = vld [vmem:[#allocation2 + $0x68] sm:$0x3f]
        %v1266 = vld [vmem:[#allocation2 + $0x70] sm:$0x3f]
        %v1267 = vld [vmem:[#allocation2 + $0x78] sm:$0x3f]
        %v1268 = vld [vmem:[#allocation2 + $0x80] sm:$0x3f]
        %v1269 = vld [vmem:[#allocation2 + $0x88] sm:$0x3f]
        %v1270 = vlaneseq
        %v1271 = vshrl.u32 %v1270, 7
        %v1272 = vsub.s32 0, %v1271
        %v1273 = vrot.slane %v611, %v1272
        %v1274 = vlaneseq
        %v1275 = vshrl.u32 %v1274, 7
        %v1276 = vsub.s32 0, %v1275
        %v1277 = vrot.slane %v612, %v1276
        %v1278 = vlaneseq
        %v1279 = vshrl.u32 %v1278, 7
        %v1280 = vsub.s32 0, %v1279
        %v1281 = vrot.slane %v613, %v1280
        %v1282 = vlaneseq
        %v1283 = vshrl.u32 %v1282, 7
        %v1284 = vsub.s32 0, %v1283
        %v1285 = vrot.slane %v614, %v1284
        %v1286 = vlaneseq
        %v1287 = vshrl.u32 %v1286, 7
        %v1288 = vsub.s32 0, %v1287
        %v1289 = vrot.slane %v615, %v1288
        %v1290 = vlaneseq
        %v1291 = vshrl.u32 %v1290, 7
        %v1292 = vsub.s32 0, %v1291
        %v1293 = vrot.slane %v616, %v1292
        %v1294 = vlaneseq
        %v1295 = vshrl.u32 %v1294, 7
        %v1296 = vsub.s32 0, %v1295
        %v1297 = vrot.slane %v617, %v1296
        %v1298 = vlaneseq
        %v1299 = vshrl.u32 %v1298, 7
        %v1300 = vsub.s32 0, %v1299
        %v1301 = vrot.slane %v618, %v1300
        %v1302 = vlaneseq
        %v1303 = vshrl.u32 %v1302, 7
        %v1304 = vsub.s32 0, %v1303
        %v1305 = vrot.slane %v619, %v1304
        %v1306 = vmul.f32 %v1252, %v1273
        %v1307 = vmul.f32 %v1253, %v1277
        %v1308 = vmul.f32 %v1254, %v1281
        %v1309 = vmul.f32 %v1255, %v1285
        %v1310 = vmul.f32 %v1256, %v1289
        %v1311 = vmul.f32 %v1257, %v1293
        %v1312 = vmul.f32 %v1258, %v1297
        %v1313 = vmul.f32 %v1259, %v1301
        %v1314 = vmul.f32 %v1260, %v1305
        %v1315 = vmul.f32 %v1261, %v1273
        %v1316 = vmul.f32 %v1262, %v1277
        %v1317 = vmul.f32 %v1263, %v1281
        %v1318 = vmul.f32 %v1264, %v1285
        %v1319 = vmul.f32 %v1265, %v1289
        %v1320 = vmul.f32 %v1266, %v1293
        %v1321 = vmul.f32 %v1267, %v1297
        %v1322 = vmul.f32 %v1268, %v1301
        %v1323 = vmul.f32 %v1269, %v1305
        %v1324 = vld [vmem:[#allocation2 + $0x48] sm:$0x7f]
        %v1325 = vld [vmem:[#allocation2 + $0x50] sm:$0x7f]
        %v1326 = vld [vmem:[#allocation2 + $0x58] sm:$0x7f]
        %v1327 = vld [vmem:[#allocation2 + $0x60] sm:$0x7f]
        %v1328 = vld [vmem:[#allocation2 + $0x68] sm:$0x7f]
        %v1329 = vld [vmem:[#allocation2 + $0x70] sm:$0x7f]
        %v1330 = vld [vmem:[#allocation2 + $0x78] sm:$0x7f]
        %v1331 = vld [vmem:[#allocation2 + $0x80] sm:$0x7f]
        %v1332 = vld [vmem:[#allocation2 + $0x88] sm:$0x7f]
        %v1333 = vlaneseq
        %v1334 = vshrl.u32 %v1333, 7
        %v1335 = vsub.s32 1, %v1334
        %v1336 = vrot.slane %v611, %v1335
        %v1337 = vlaneseq
        %v1338 = vshrl.u32 %v1337, 7
        %v1339 = vsub.s32 1, %v1338
        %v1340 = vrot.slane %v612, %v1339
        %v1341 = vlaneseq
        %v1342 = vshrl.u32 %v1341, 7
        %v1343 = vsub.s32 1, %v1342
        %v1344 = vrot.slane %v613, %v1343
        %v1345 = vlaneseq
        %v1346 = vshrl.u32 %v1345, 7
        %v1347 = vsub.s32 1, %v1346
        %v1348 = vrot.slane %v614, %v1347
        %v1349 = vlaneseq
        %v1350 = vshrl.u32 %v1349, 7
        %v1351 = vsub.s32 1, %v1350
        %v1352 = vrot.slane %v615, %v1351
        %v1353 = vlaneseq
        %v1354 = vshrl.u32 %v1353, 7
        %v1355 = vsub.s32 1, %v1354
        %v1356 = vrot.slane %v616, %v1355
        %v1357 = vlaneseq
        %v1358 = vshrl.u32 %v1357, 7
        %v1359 = vsub.s32 1, %v1358
        %v1360 = vrot.slane %v617, %v1359
        %v1361 = vlaneseq
        %v1362 = vshrl.u32 %v1361, 7
        %v1363 = vsub.s32 1, %v1362
        %v1364 = vrot.slane %v618, %v1363
        %v1365 = vlaneseq
        %v1366 = vshrl.u32 %v1365, 7
        %v1367 = vsub.s32 1, %v1366
        %v1368 = vrot.slane %v619, %v1367
        %v1369 = vmul.f32 %v1324, %v1336
        %v1370 = vmul.f32 %v1325, %v1340
        %v1371 = vmul.f32 %v1326, %v1344
        %v1372 = vmul.f32 %v1327, %v1348
        %v1373 = vmul.f32 %v1328, %v1352
        %v1374 = vmul.f32 %v1329, %v1356
        %v1375 = vmul.f32 %v1330, %v1360
        %v1376 = vmul.f32 %v1331, %v1364
        %v1377 = vmul.f32 %v1332, %v1368
        %v1387 = vrot.slane %v1369, 1
        %v1388 = vrot.slane %v1370, 1
        %v1389 = vrot.slane %v1371, 1
        %v1390 = vrot.slane %v1372, 1
        %v1391 = vrot.slane %v1373, 1
        %v1392 = vrot.slane %v1374, 1
        %v1393 = vrot.slane %v1375, 1
        %v1394 = vrot.slane %v1376, 1
        %v1395 = vrot.slane %v1377, 1
        %v1405 = vadd.f32 %v1306, %v1387
        %v1406 = vadd.f32 %v1307, %v1388
        %v1407 = vadd.f32 %v1308, %v1389
        %v1408 = vadd.f32 %v1309, %v1390
        %v1409 = vadd.f32 %v1310, %v1391
        %v1410 = vadd.f32 %v1311, %v1392
        %v1411 = vadd.f32 %v1312, %v1393
        %v1412 = vadd.f32 %v1313, %v1394
        %v1413 = vadd.f32 %v1314, %v1395
        %v1414 = vadd.f32 %v1315, %v1387
        %v1415 = vadd.f32 %v1316, %v1388
        %v1416 = vadd.f32 %v1317, %v1389
        %v1417 = vadd.f32 %v1318, %v1390
        %v1418 = vadd.f32 %v1319, %v1391
        %v1419 = vadd.f32 %v1320, %v1392
        %v1420 = vadd.f32 %v1321, %v1393
        %v1421 = vadd.f32 %v1322, %v1394
        %v1422 = vadd.f32 %v1323, %v1395
        %v1423 = vld [vmem:[#allocation2 + $0x48] sm:$0xfe]
        %v1424 = vld [vmem:[#allocation2 + $0x50] sm:$0xfe]
        %v1425 = vld [vmem:[#allocation2 + $0x58] sm:$0xfe]
        %v1426 = vld [vmem:[#allocation2 + $0x60] sm:$0xfe]
        %v1427 = vld [vmem:[#allocation2 + $0x68] sm:$0xfe]
        %v1428 = vld [vmem:[#allocation2 + $0x70] sm:$0xfe]
        %v1429 = vld [vmem:[#allocation2 + $0x78] sm:$0xfe]
        %v1430 = vld [vmem:[#allocation2 + $0x80] sm:$0xfe]
        %v1431 = vld [vmem:[#allocation2 + $0x88] sm:$0xfe]
        %v1432 = vlaneseq
        %v1433 = vshrl.u32 %v1432, 7
        %v1434 = vsub.s32 2, %v1433
        %v1435 = vrot.slane %v611, %v1434
        %v1436 = vlaneseq
        %v1437 = vshrl.u32 %v1436, 7
        %v1438 = vsub.s32 2, %v1437
        %v1439 = vrot.slane %v612, %v1438
        %v1440 = vlaneseq
        %v1441 = vshrl.u32 %v1440, 7
        %v1442 = vsub.s32 2, %v1441
        %v1443 = vrot.slane %v613, %v1442
        %v1444 = vlaneseq
        %v1445 = vshrl.u32 %v1444, 7
        %v1446 = vsub.s32 2, %v1445
        %v1447 = vrot.slane %v614, %v1446
        %v1448 = vlaneseq
        %v1449 = vshrl.u32 %v1448, 7
        %v1450 = vsub.s32 2, %v1449
        %v1451 = vrot.slane %v615, %v1450
        %v1452 = vlaneseq
        %v1453 = vshrl.u32 %v1452, 7
        %v1454 = vsub.s32 2, %v1453
        %v1455 = vrot.slane %v616, %v1454
        %v1456 = vlaneseq
        %v1457 = vshrl.u32 %v1456, 7
        %v1458 = vsub.s32 2, %v1457
        %v1459 = vrot.slane %v617, %v1458
        %v1460 = vlaneseq
        %v1461 = vshrl.u32 %v1460, 7
        %v1462 = vsub.s32 2, %v1461
        %v1463 = vrot.slane %v618, %v1462
        %v1464 = vlaneseq
        %v1465 = vshrl.u32 %v1464, 7
        %v1466 = vsub.s32 2, %v1465
        %v1467 = vrot.slane %v619, %v1466
        %v1468 = vmul.f32 %v1423, %v1435
        %v1469 = vmul.f32 %v1424, %v1439
        %v1470 = vmul.f32 %v1425, %v1443
        %v1471 = vmul.f32 %v1426, %v1447
        %v1472 = vmul.f32 %v1427, %v1451
        %v1473 = vmul.f32 %v1428, %v1455
        %v1474 = vmul.f32 %v1429, %v1459
        %v1475 = vmul.f32 %v1430, %v1463
        %v1476 = vmul.f32 %v1431, %v1467
        %v1486 = vrot.slane %v1468, 2
        %v1487 = vrot.slane %v1469, 2
        %v1488 = vrot.slane %v1470, 2
        %v1489 = vrot.slane %v1471, 2
        %v1490 = vrot.slane %v1472, 2
        %v1491 = vrot.slane %v1473, 2
        %v1492 = vrot.slane %v1474, 2
        %v1493 = vrot.slane %v1475, 2
        %v1494 = vrot.slane %v1476, 2
        %v1504 = vadd.f32 %v1405, %v1486
        %v1505 = vadd.f32 %v1406, %v1487
        %v1506 = vadd.f32 %v1407, %v1488
        %v1507 = vadd.f32 %v1408, %v1489
        %v1508 = vadd.f32 %v1409, %v1490
        %v1509 = vadd.f32 %v1410, %v1491
        %v1510 = vadd.f32 %v1411, %v1492
        %v1511 = vadd.f32 %v1412, %v1493
        %v1512 = vadd.f32 %v1413, %v1494
        %v1513 = vadd.f32 %v1414, %v1486
        %v1514 = vadd.f32 %v1415, %v1487
        %v1515 = vadd.f32 %v1416, %v1488
        %v1516 = vadd.f32 %v1417, %v1489
        %v1517 = vadd.f32 %v1418, %v1490
        %v1518 = vadd.f32 %v1419, %v1491
        %v1519 = vadd.f32 %v1420, %v1492
        %v1520 = vadd.f32 %v1421, %v1493
        %v1521 = vadd.f32 %v1422, %v1494
        %v1522 = vld [vmem:[%s899] sm:$0x80]
        %v1523 = vld [vmem:[%s899 + $0x8] sm:$0x80]
        %v1524 = vld [vmem:[%s899 + $0x10] sm:$0x80]
        %v1525 = vld [vmem:[%s899 + $0x18] sm:$0x80]
        %v1526 = vld [vmem:[%s899 + $0x20] sm:$0x80]
        %v1527 = vld [vmem:[%s899 + $0x28] sm:$0x80]
        %v1528 = vld [vmem:[%s899 + $0x30] sm:$0x80]
        %v1529 = vld [vmem:[%s899 + $0x38] sm:$0x80]
        %v1530 = vld [vmem:[%s899 + $0x40] sm:$0x80]
        %v1531 = vld [vmem:[%s899 + $0x48] sm:$0x3f]
        %v1532 = vld [vmem:[%s899 + $0x50] sm:$0x3f]
        %v1533 = vld [vmem:[%s899 + $0x58] sm:$0x3f]
        %v1534 = vld [vmem:[%s899 + $0x60] sm:$0x3f]
        %v1535 = vld [vmem:[%s899 + $0x68] sm:$0x3f]
        %v1536 = vld [vmem:[%s899 + $0x70] sm:$0x3f]
        %v1537 = vld [vmem:[%s899 + $0x78] sm:$0x3f]
        %v1538 = vld [vmem:[%s899 + $0x80] sm:$0x3f]
        %v1539 = vld [vmem:[%s899 + $0x88] sm:$0x3f]
        %v1540 = vmul.f32 %v1522, %v650
        %v1541 = vmul.f32 %v1523, %v654
        %v1542 = vmul.f32 %v1524, %v658
        %v1543 = vmul.f32 %v1525, %v662
        %v1544 = vmul.f32 %v1526, %v666
        %v1545 = vmul.f32 %v1527, %v670
        %v1546 = vmul.f32 %v1528, %v674
        %v1547 = vmul.f32 %v1529, %v678
        %v1548 = vmul.f32 %v1530, %v682
        %v1549 = vmul.f32 %v1531, %v650
        %v1550 = vmul.f32 %v1532, %v654
        %v1551 = vmul.f32 %v1533, %v658
        %v1552 = vmul.f32 %v1534, %v662
        %v1553 = vmul.f32 %v1535, %v666
        %v1554 = vmul.f32 %v1536, %v670
        %v1555 = vmul.f32 %v1537, %v674
        %v1556 = vmul.f32 %v1538, %v678
        %v1557 = vmul.f32 %v1539, %v682
        %v1558 = vadd.f32 %v1504, %v1540
        %v1559 = vadd.f32 %v1505, %v1541
        %v1560 = vadd.f32 %v1506, %v1542
        %v1561 = vadd.f32 %v1507, %v1543
        %v1562 = vadd.f32 %v1508, %v1544
        %v1563 = vadd.f32 %v1509, %v1545
        %v1564 = vadd.f32 %v1510, %v1546
        %v1565 = vadd.f32 %v1511, %v1547
        %v1566 = vadd.f32 %v1512, %v1548
        %v1567 = vadd.f32 %v1513, %v1549
        %v1568 = vadd.f32 %v1514, %v1550
        %v1569 = vadd.f32 %v1515, %v1551
        %v1570 = vadd.f32 %v1516, %v1552
        %v1571 = vadd.f32 %v1517, %v1553
        %v1572 = vadd.f32 %v1518, %v1554
        %v1573 = vadd.f32 %v1519, %v1555
        %v1574 = vadd.f32 %v1520, %v1556
        %v1575 = vadd.f32 %v1521, %v1557
        %v1576 = vld [vmem:[%s899 + $0x48] sm:$0x7f]
        %v1577 = vld [vmem:[%s899 + $0x50] sm:$0x7f]
        %v1578 = vld [vmem:[%s899 + $0x58] sm:$0x7f]
        %v1579 = vld [vmem:[%s899 + $0x60] sm:$0x7f]
        %v1580 = vld [vmem:[%s899 + $0x68] sm:$0x7f]
        %v1581 = vld [vmem:[%s899 + $0x70] sm:$0x7f]
        %v1582 = vld [vmem:[%s899 + $0x78] sm:$0x7f]
        %v1583 = vld [vmem:[%s899 + $0x80] sm:$0x7f]
        %v1584 = vld [vmem:[%s899 + $0x88] sm:$0x7f]
        %v1585 = vmul.f32 %v1576, %v713
        %v1586 = vmul.f32 %v1577, %v717
        %v1587 = vmul.f32 %v1578, %v721
        %v1588 = vmul.f32 %v1579, %v725
        %v1589 = vmul.f32 %v1580, %v729
        %v1590 = vmul.f32 %v1581, %v733
        %v1591 = vmul.f32 %v1582, %v737
        %v1592 = vmul.f32 %v1583, %v741
        %v1593 = vmul.f32 %v1584, %v745
        %v1603 = vrot.slane %v1585, 1
        %v1604 = vrot.slane %v1586, 1
        %v1605 = vrot.slane %v1587, 1
        %v1606 = vrot.slane %v1588, 1
        %v1607 = vrot.slane %v1589, 1
        %v1608 = vrot.slane %v1590, 1
        %v1609 = vrot.slane %v1591, 1
        %v1610 = vrot.slane %v1592, 1
        %v1611 = vrot.slane %v1593, 1
        %v1621 = vadd.f32 %v1558, %v1603
        %v1622 = vadd.f32 %v1559, %v1604
        %v1623 = vadd.f32 %v1560, %v1605
        %v1624 = vadd.f32 %v1561, %v1606
        %v1625 = vadd.f32 %v1562, %v1607
        %v1626 = vadd.f32 %v1563, %v1608
        %v1627 = vadd.f32 %v1564, %v1609
        %v1628 = vadd.f32 %v1565, %v1610
        %v1629 = vadd.f32 %v1566, %v1611
        %v1630 = vadd.f32 %v1567, %v1603
        %v1631 = vadd.f32 %v1568, %v1604
        %v1632 = vadd.f32 %v1569, %v1605
        %v1633 = vadd.f32 %v1570, %v1606
        %v1634 = vadd.f32 %v1571, %v1607
        %v1635 = vadd.f32 %v1572, %v1608
        %v1636 = vadd.f32 %v1573, %v1609
        %v1637 = vadd.f32 %v1574, %v1610
        %v1638 = vadd.f32 %v1575, %v1611
        %v1639 = vld [vmem:[%s899 + $0x48] sm:$0xfe]
        %v1640 = vld [vmem:[%s899 + $0x50] sm:$0xfe]
        %v1641 = vld [vmem:[%s899 + $0x58] sm:$0xfe]
        %v1642 = vld [vmem:[%s899 + $0x60] sm:$0xfe]
        %v1643 = vld [vmem:[%s899 + $0x68] sm:$0xfe]
        %v1644 = vld [vmem:[%s899 + $0x70] sm:$0xfe]
        %v1645 = vld [vmem:[%s899 + $0x78] sm:$0xfe]
        %v1646 = vld [vmem:[%s899 + $0x80] sm:$0xfe]
        %v1647 = vld [vmem:[%s899 + $0x88] sm:$0xfe]
        %v1648 = vmul.f32 %v1639, %v812
        %v1649 = vmul.f32 %v1640, %v816
        %v1650 = vmul.f32 %v1641, %v820
        %v1651 = vmul.f32 %v1642, %v824
        %v1652 = vmul.f32 %v1643, %v828
        %v1653 = vmul.f32 %v1644, %v832
        %v1654 = vmul.f32 %v1645, %v836
        %v1655 = vmul.f32 %v1646, %v840
        %v1656 = vmul.f32 %v1647, %v844
        %v1666 = vrot.slane %v1648, 2
        %v1667 = vrot.slane %v1649, 2
        %v1668 = vrot.slane %v1650, 2
        %v1669 = vrot.slane %v1651, 2
        %v1670 = vrot.slane %v1652, 2
        %v1671 = vrot.slane %v1653, 2
        %v1672 = vrot.slane %v1654, 2
        %v1673 = vrot.slane %v1655, 2
        %v1674 = vrot.slane %v1656, 2
        %v1684 = vadd.f32 %v1621, %v1666
        %v1685 = vadd.f32 %v1622, %v1667
        %v1686 = vadd.f32 %v1623, %v1668
        %v1687 = vadd.f32 %v1624, %v1669
        %v1688 = vadd.f32 %v1625, %v1670
        %v1689 = vadd.f32 %v1626, %v1671
        %v1690 = vadd.f32 %v1627, %v1672
        %v1691 = vadd.f32 %v1628, %v1673
        %v1692 = vadd.f32 %v1629, %v1674
        %v1693 = vadd.f32 %v1630, %v1666
        %v1694 = vadd.f32 %v1631, %v1667
        %v1695 = vadd.f32 %v1632, %v1668
        %v1696 = vadd.f32 %v1633, %v1669
        %v1697 = vadd.f32 %v1634, %v1670
        %v1698 = vadd.f32 %v1635, %v1671
        %v1699 = vadd.f32 %v1636, %v1672
        %v1700 = vadd.f32 %v1637, %v1673
        %v1701 = vadd.f32 %v1638, %v1674
        %s1702 = scalar_lea.vmem [#allocation2], 288
        %v1703 = vld [vmem:[%s1702] sm:$0x80]
        %v1704 = vld [vmem:[%s1702 + $0x8] sm:$0x80]
        %v1705 = vld [vmem:[%s1702 + $0x10] sm:$0x80]
        %v1706 = vld [vmem:[%s1702 + $0x18] sm:$0x80]
        %v1707 = vld [vmem:[%s1702 + $0x20] sm:$0x80]
        %v1708 = vld [vmem:[%s1702 + $0x28] sm:$0x80]
        %v1709 = vld [vmem:[%s1702 + $0x30] sm:$0x80]
        %v1710 = vld [vmem:[%s1702 + $0x38] sm:$0x80]
        %v1711 = vld [vmem:[%s1702 + $0x40] sm:$0x80]
        %v1712 = vld [vmem:[%s1702 + $0x48] sm:$0x3f]
        %v1713 = vld [vmem:[%s1702 + $0x50] sm:$0x3f]
        %v1714 = vld [vmem:[%s1702 + $0x58] sm:$0x3f]
        %v1715 = vld [vmem:[%s1702 + $0x60] sm:$0x3f]
        %v1716 = vld [vmem:[%s1702 + $0x68] sm:$0x3f]
        %v1717 = vld [vmem:[%s1702 + $0x70] sm:$0x3f]
        %v1718 = vld [vmem:[%s1702 + $0x78] sm:$0x3f]
        %v1719 = vld [vmem:[%s1702 + $0x80] sm:$0x3f]
        %v1720 = vld [vmem:[%s1702 + $0x88] sm:$0x3f]
        %v1721 = vmul.f32 %v1703, %v921
        %v1722 = vmul.f32 %v1704, %v925
        %v1723 = vmul.f32 %v1705, %v929
        %v1724 = vmul.f32 %v1706, %v933
        %v1725 = vmul.f32 %v1707, %v937
        %v1726 = vmul.f32 %v1708, %v941
        %v1727 = vmul.f32 %v1709, %v945
        %v1728 = vmul.f32 %v1710, %v949
        %v1729 = vmul.f32 %v1711, %v953
        %v1730 = vmul.f32 %v1712, %v921
        %v1731 = vmul.f32 %v1713, %v925
        %v1732 = vmul.f32 %v1714, %v929
        %v1733 = vmul.f32 %v1715, %v933
        %v1734 = vmul.f32 %v1716, %v937
        %v1735 = vmul.f32 %v1717, %v941
        %v1736 = vmul.f32 %v1718, %v945
        %v1737 = vmul.f32 %v1719, %v949
        %v1738 = vmul.f32 %v1720, %v953
        %v1739 = vadd.f32 %v1684, %v1721
        %v1740 = vadd.f32 %v1685, %v1722
        %v1741 = vadd.f32 %v1686, %v1723
        %v1742 = vadd.f32 %v1687, %v1724
        %v1743 = vadd.f32 %v1688, %v1725
        %v1744 = vadd.f32 %v1689, %v1726
        %v1745 = vadd.f32 %v1690, %v1727
        %v1746 = vadd.f32 %v1691, %v1728
        %v1747 = vadd.f32 %v1692, %v1729
        %v1748 = vadd.f32 %v1693, %v1730
        %v1749 = vadd.f32 %v1694, %v1731
        %v1750 = vadd.f32 %v1695, %v1732
        %v1751 = vadd.f32 %v1696, %v1733
        %v1752 = vadd.f32 %v1697, %v1734
        %v1753 = vadd.f32 %v1698, %v1735
        %v1754 = vadd.f32 %v1699, %v1736
        %v1755 = vadd.f32 %v1700, %v1737
        %v1756 = vadd.f32 %v1701, %v1738
        %v1757 = vld [vmem:[%s1702 + $0x48] sm:$0x7f]
        %v1758 = vld [vmem:[%s1702 + $0x50] sm:$0x7f]
        %v1759 = vld [vmem:[%s1702 + $0x58] sm:$0x7f]
        %v1760 = vld [vmem:[%s1702 + $0x60] sm:$0x7f]
        %v1761 = vld [vmem:[%s1702 + $0x68] sm:$0x7f]
        %v1762 = vld [vmem:[%s1702 + $0x70] sm:$0x7f]
        %v1763 = vld [vmem:[%s1702 + $0x78] sm:$0x7f]
        %v1764 = vld [vmem:[%s1702 + $0x80] sm:$0x7f]
        %v1765 = vld [vmem:[%s1702 + $0x88] sm:$0x7f]
        %v1766 = vmul.f32 %v1757, %v1002
        %v1767 = vmul.f32 %v1758, %v1006
        %v1768 = vmul.f32 %v1759, %v1010
        %v1769 = vmul.f32 %v1760, %v1014
        %v1770 = vmul.f32 %v1761, %v1018
        %v1771 = vmul.f32 %v1762, %v1022
        %v1772 = vmul.f32 %v1763, %v1026
        %v1773 = vmul.f32 %v1764, %v1030
        %v1774 = vmul.f32 %v1765, %v1034
        %v1784 = vrot.slane %v1766, 1
        %v1785 = vrot.slane %v1767, 1
        %v1786 = vrot.slane %v1768, 1
        %v1787 = vrot.slane %v1769, 1
        %v1788 = vrot.slane %v1770, 1
        %v1789 = vrot.slane %v1771, 1
        %v1790 = vrot.slane %v1772, 1
        %v1791 = vrot.slane %v1773, 1
        %v1792 = vrot.slane %v1774, 1
        %v1802 = vadd.f32 %v1739, %v1784
        %v1803 = vadd.f32 %v1740, %v1785
        %v1804 = vadd.f32 %v1741, %v1786
        %v1805 = vadd.f32 %v1742, %v1787
        %v1806 = vadd.f32 %v1743, %v1788
        %v1807 = vadd.f32 %v1744, %v1789
        %v1808 = vadd.f32 %v1745, %v1790
        %v1809 = vadd.f32 %v1746, %v1791
        %v1810 = vadd.f32 %v1747, %v1792
        %v1811 = vadd.f32 %v1748, %v1784
        %v1812 = vadd.f32 %v1749, %v1785
        %v1813 = vadd.f32 %v1750, %v1786
        %v1814 = vadd.f32 %v1751, %v1787
        %v1815 = vadd.f32 %v1752, %v1788
        %v1816 = vadd.f32 %v1753, %v1789
        %v1817 = vadd.f32 %v1754, %v1790
        %v1818 = vadd.f32 %v1755, %v1791
        %v1819 = vadd.f32 %v1756, %v1792
        %v1820 = vld [vmem:[%s1702 + $0x48] sm:$0xfe]
        %v1821 = vld [vmem:[%s1702 + $0x50] sm:$0xfe]
        %v1822 = vld [vmem:[%s1702 + $0x58] sm:$0xfe]
        %v1823 = vld [vmem:[%s1702 + $0x60] sm:$0xfe]
        %v1824 = vld [vmem:[%s1702 + $0x68] sm:$0xfe]
        %v1825 = vld [vmem:[%s1702 + $0x70] sm:$0xfe]
        %v1826 = vld [vmem:[%s1702 + $0x78] sm:$0xfe]
        %v1827 = vld [vmem:[%s1702 + $0x80] sm:$0xfe]
        %v1828 = vld [vmem:[%s1702 + $0x88] sm:$0xfe]
        %v1829 = vmul.f32 %v1820, %v1101
        %v1830 = vmul.f32 %v1821, %v1105
        %v1831 = vmul.f32 %v1822, %v1109
        %v1832 = vmul.f32 %v1823, %v1113
        %v1833 = vmul.f32 %v1824, %v1117
        %v1834 = vmul.f32 %v1825, %v1121
        %v1835 = vmul.f32 %v1826, %v1125
        %v1836 = vmul.f32 %v1827, %v1129
        %v1837 = vmul.f32 %v1828, %v1133
        %v1847 = vrot.slane %v1829, 2
        %v1848 = vrot.slane %v1830, 2
        %v1849 = vrot.slane %v1831, 2
        %v1850 = vrot.slane %v1832, 2
        %v1851 = vrot.slane %v1833, 2
        %v1852 = vrot.slane %v1834, 2
        %v1853 = vrot.slane %v1835, 2
        %v1854 = vrot.slane %v1836, 2
        %v1855 = vrot.slane %v1837, 2
        %v1865 = vadd.f32 %v1802, %v1847
        %v1866 = vadd.f32 %v1803, %v1848
        %v1867 = vadd.f32 %v1804, %v1849
        %v1868 = vadd.f32 %v1805, %v1850
        %v1869 = vadd.f32 %v1806, %v1851
        %v1870 = vadd.f32 %v1807, %v1852
        %v1871 = vadd.f32 %v1808, %v1853
        %v1872 = vadd.f32 %v1809, %v1854
        %v1873 = vadd.f32 %v1810, %v1855
        %v1874 = vadd.f32 %v1811, %v1847
        %v1875 = vadd.f32 %v1812, %v1848
        %v1876 = vadd.f32 %v1813, %v1849
        %v1877 = vadd.f32 %v1814, %v1850
        %v1878 = vadd.f32 %v1815, %v1851
        %v1879 = vadd.f32 %v1816, %v1852
        %v1880 = vadd.f32 %v1817, %v1853
        %v1881 = vadd.f32 %v1818, %v1854
        %v1882 = vadd.f32 %v1819, %v1855
        %v1901 = vrot.slane %v1865, 7
        %v1902 = vrot.slane %v1874, 7
        %v1903 = vsel %vm1206, %v1901, %v1902
        %v1904 = vrot.slane %v1866, 7
        %v1905 = vrot.slane %v1875, 7
        %v1906 = vsel %vm1206, %v1904, %v1905
        %v1907 = vrot.slane %v1867, 7
        %v1908 = vrot.slane %v1876, 7
        %v1909 = vsel %vm1206, %v1907, %v1908
        %v1910 = vrot.slane %v1868, 7
        %v1911 = vrot.slane %v1877, 7
        %v1912 = vsel %vm1206, %v1910, %v1911
        %v1913 = vrot.slane %v1869, 7
        %v1914 = vrot.slane %v1878, 7
        %v1915 = vsel %vm1206, %v1913, %v1914
        %v1916 = vrot.slane %v1870, 7
        %v1917 = vrot.slane %v1879, 7
        %v1918 = vsel %vm1206, %v1916, %v1917
        %v1919 = vrot.slane %v1871, 7
        %v1920 = vrot.slane %v1880, 7
        %v1921 = vsel %vm1206, %v1919, %v1920
        %v1922 = vrot.slane %v1872, 7
        %v1923 = vrot.slane %v1881, 7
        %v1924 = vsel %vm1206, %v1922, %v1923
        %v1925 = vrot.slane %v1873, 7
        %v1926 = vrot.slane %v1882, 7
        %v1927 = vsel %vm1206, %v1925, %v1926
        %s1937 = scalar_lea.vmem %s355, 72 [#allocation5]
        %1938 = vst [vmem:[%s1937] sm:$0x7f] %v1903
        %1939 = vst [vmem:[%s1937 + $0x8] sm:$0x7f] %v1906
        %1940 = vst [vmem:[%s1937 + $0x10] sm:$0x7f] %v1909
        %1941 = vst [vmem:[%s1937 + $0x18] sm:$0x7f] %v1912
        %1942 = vst [vmem:[%s1937 + $0x20] sm:$0x7f] %v1915
        %1943 = vst [vmem:[%s1937 + $0x28] sm:$0x7f] %v1918
        %1944 = vst [vmem:[%s1937 + $0x30] sm:$0x7f] %v1921
        %1945 = vst [vmem:[%s1937 + $0x38] sm:$0x7f] %v1924
        %1946 = vst [vmem:[%s1937 + $0x40] sm:$0x7f] %v1927
        %v1947 = vld [vmem:[%s899] sm:$0x80]
        %v1948 = vld [vmem:[%s899 + $0x8] sm:$0x80]
        %v1949 = vld [vmem:[%s899 + $0x10] sm:$0x80]
        %v1950 = vld [vmem:[%s899 + $0x18] sm:$0x80]
        %v1951 = vld [vmem:[%s899 + $0x20] sm:$0x80]
        %v1952 = vld [vmem:[%s899 + $0x28] sm:$0x80]
        %v1953 = vld [vmem:[%s899 + $0x30] sm:$0x80]
        %v1954 = vld [vmem:[%s899 + $0x38] sm:$0x80]
        %v1955 = vld [vmem:[%s899 + $0x40] sm:$0x80]
        %v1956 = vld [vmem:[%s899 + $0x48] sm:$0x3f]
        %v1957 = vld [vmem:[%s899 + $0x50] sm:$0x3f]
        %v1958 = vld [vmem:[%s899 + $0x58] sm:$0x3f]
        %v1959 = vld [vmem:[%s899 + $0x60] sm:$0x3f]
        %v1960 = vld [vmem:[%s899 + $0x68] sm:$0x3f]
        %v1961 = vld [vmem:[%s899 + $0x70] sm:$0x3f]
        %v1962 = vld [vmem:[%s899 + $0x78] sm:$0x3f]
        %v1963 = vld [vmem:[%s899 + $0x80] sm:$0x3f]
        %v1964 = vld [vmem:[%s899 + $0x88] sm:$0x3f]
        %v1965 = vmul.f32 %v1947, %v1273
        %v1966 = vmul.f32 %v1948, %v1277
        %v1967 = vmul.f32 %v1949, %v1281
        %v1968 = vmul.f32 %v1950, %v1285
        %v1969 = vmul.f32 %v1951, %v1289
        %v1970 = vmul.f32 %v1952, %v1293
        %v1971 = vmul.f32 %v1953, %v1297
        %v1972 = vmul.f32 %v1954, %v1301
        %v1973 = vmul.f32 %v1955, %v1305
        %v1974 = vmul.f32 %v1956, %v1273
        %v1975 = vmul.f32 %v1957, %v1277
        %v1976 = vmul.f32 %v1958, %v1281
        %v1977 = vmul.f32 %v1959, %v1285
        %v1978 = vmul.f32 %v1960, %v1289
        %v1979 = vmul.f32 %v1961, %v1293
        %v1980 = vmul.f32 %v1962, %v1297
        %v1981 = vmul.f32 %v1963, %v1301
        %v1982 = vmul.f32 %v1964, %v1305
        %v1983 = vld [vmem:[%s899 + $0x48] sm:$0x7f]
        %v1984 = vld [vmem:[%s899 + $0x50] sm:$0x7f]
        %v1985 = vld [vmem:[%s899 + $0x58] sm:$0x7f]
        %v1986 = vld [vmem:[%s899 + $0x60] sm:$0x7f]
        %v1987 = vld [vmem:[%s899 + $0x68] sm:$0x7f]
        %v1988 = vld [vmem:[%s899 + $0x70] sm:$0x7f]
        %v1989 = vld [vmem:[%s899 + $0x78] sm:$0x7f]
        %v1990 = vld [vmem:[%s899 + $0x80] sm:$0x7f]
        %v1991 = vld [vmem:[%s899 + $0x88] sm:$0x7f]
        %v1992 = vmul.f32 %v1983, %v1336
        %v1993 = vmul.f32 %v1984, %v1340
        %v1994 = vmul.f32 %v1985, %v1344
        %v1995 = vmul.f32 %v1986, %v1348
        %v1996 = vmul.f32 %v1987, %v1352
        %v1997 = vmul.f32 %v1988, %v1356
        %v1998 = vmul.f32 %v1989, %v1360
        %v1999 = vmul.f32 %v1990, %v1364
        %v2000 = vmul.f32 %v1991, %v1368
        %v2010 = vrot.slane %v1992, 1
        %v2011 = vrot.slane %v1993, 1
        %v2012 = vrot.slane %v1994, 1
        %v2013 = vrot.slane %v1995, 1
        %v2014 = vrot.slane %v1996, 1
        %v2015 = vrot.slane %v1997, 1
        %v2016 = vrot.slane %v1998, 1
        %v2017 = vrot.slane %v1999, 1
        %v2018 = vrot.slane %v2000, 1
        %v2028 = vadd.f32 %v1965, %v2010
        %v2029 = vadd.f32 %v1966, %v2011
        %v2030 = vadd.f32 %v1967, %v2012
        %v2031 = vadd.f32 %v1968, %v2013
        %v2032 = vadd.f32 %v1969, %v2014
        %v2033 = vadd.f32 %v1970, %v2015
        %v2034 = vadd.f32 %v1971, %v2016
        %v2035 = vadd.f32 %v1972, %v2017
        %v2036 = vadd.f32 %v1973, %v2018
        %v2037 = vadd.f32 %v1974, %v2010
        %v2038 = vadd.f32 %v1975, %v2011
        %v2039 = vadd.f32 %v1976, %v2012
        %v2040 = vadd.f32 %v1977, %v2013
        %v2041 = vadd.f32 %v1978, %v2014
        %v2042 = vadd.f32 %v1979, %v2015
        %v2043 = vadd.f32 %v1980, %v2016
        %v2044 = vadd.f32 %v1981, %v2017
        %v2045 = vadd.f32 %v1982, %v2018
        %v2046 = vld [vmem:[%s899 + $0x48] sm:$0xfe]
        %v2047 = vld [vmem:[%s899 + $0x50] sm:$0xfe]
        %v2048 = vld [vmem:[%s899 + $0x58] sm:$0xfe]
        %v2049 = vld [vmem:[%s899 + $0x60] sm:$0xfe]
        %v2050 = vld [vmem:[%s899 + $0x68] sm:$0xfe]
        %v2051 = vld [vmem:[%s899 + $0x70] sm:$0xfe]
        %v2052 = vld [vmem:[%s899 + $0x78] sm:$0xfe]
        %v2053 = vld [vmem:[%s899 + $0x80] sm:$0xfe]
        %v2054 = vld [vmem:[%s899 + $0x88] sm:$0xfe]
        %v2055 = vmul.f32 %v2046, %v1435
        %v2056 = vmul.f32 %v2047, %v1439
        %v2057 = vmul.f32 %v2048, %v1443
        %v2058 = vmul.f32 %v2049, %v1447
        %v2059 = vmul.f32 %v2050, %v1451
        %v2060 = vmul.f32 %v2051, %v1455
        %v2061 = vmul.f32 %v2052, %v1459
        %v2062 = vmul.f32 %v2053, %v1463
        %v2063 = vmul.f32 %v2054, %v1467
        %v2073 = vrot.slane %v2055, 2
        %v2074 = vrot.slane %v2056, 2
        %v2075 = vrot.slane %v2057, 2
        %v2076 = vrot.slane %v2058, 2
        %v2077 = vrot.slane %v2059, 2
        %v2078 = vrot.slane %v2060, 2
        %v2079 = vrot.slane %v2061, 2
        %v2080 = vrot.slane %v2062, 2
        %v2081 = vrot.slane %v2063, 2
        %v2091 = vadd.f32 %v2028, %v2073
        %v2092 = vadd.f32 %v2029, %v2074
        %v2093 = vadd.f32 %v2030, %v2075
        %v2094 = vadd.f32 %v2031, %v2076
        %v2095 = vadd.f32 %v2032, %v2077
        %v2096 = vadd.f32 %v2033, %v2078
        %v2097 = vadd.f32 %v2034, %v2079
        %v2098 = vadd.f32 %v2035, %v2080
        %v2099 = vadd.f32 %v2036, %v2081
        %v2100 = vadd.f32 %v2037, %v2073
        %v2101 = vadd.f32 %v2038, %v2074
        %v2102 = vadd.f32 %v2039, %v2075
        %v2103 = vadd.f32 %v2040, %v2076
        %v2104 = vadd.f32 %v2041, %v2077
        %v2105 = vadd.f32 %v2042, %v2078
        %v2106 = vadd.f32 %v2043, %v2079
        %v2107 = vadd.f32 %v2044, %v2080
        %v2108 = vadd.f32 %v2045, %v2081
        %v2109 = vld [vmem:[%s1702] sm:$0x80]
        %v2110 = vld [vmem:[%s1702 + $0x8] sm:$0x80]
        %v2111 = vld [vmem:[%s1702 + $0x10] sm:$0x80]
        %v2112 = vld [vmem:[%s1702 + $0x18] sm:$0x80]
        %v2113 = vld [vmem:[%s1702 + $0x20] sm:$0x80]
        %v2114 = vld [vmem:[%s1702 + $0x28] sm:$0x80]
        %v2115 = vld [vmem:[%s1702 + $0x30] sm:$0x80]
        %v2116 = vld [vmem:[%s1702 + $0x38] sm:$0x80]
        %v2117 = vld [vmem:[%s1702 + $0x40] sm:$0x80]
        %v2118 = vld [vmem:[%s1702 + $0x48] sm:$0x3f]
        %v2119 = vld [vmem:[%s1702 + $0x50] sm:$0x3f]
        %v2120 = vld [vmem:[%s1702 + $0x58] sm:$0x3f]
        %v2121 = vld [vmem:[%s1702 + $0x60] sm:$0x3f]
        %v2122 = vld [vmem:[%s1702 + $0x68] sm:$0x3f]
        %v2123 = vld [vmem:[%s1702 + $0x70] sm:$0x3f]
        %v2124 = vld [vmem:[%s1702 + $0x78] sm:$0x3f]
        %v2125 = vld [vmem:[%s1702 + $0x80] sm:$0x3f]
        %v2126 = vld [vmem:[%s1702 + $0x88] sm:$0x3f]
        %v2127 = vmul.f32 %v2109, %v650
        %v2128 = vmul.f32 %v2110, %v654
        %v2129 = vmul.f32 %v2111, %v658
        %v2130 = vmul.f32 %v2112, %v662
        %v2131 = vmul.f32 %v2113, %v666
        %v2132 = vmul.f32 %v2114, %v670
        %v2133 = vmul.f32 %v2115, %v674
        %v2134 = vmul.f32 %v2116, %v678
        %v2135 = vmul.f32 %v2117, %v682
        %v2136 = vmul.f32 %v2118, %v650
        %v2137 = vmul.f32 %v2119, %v654
        %v2138 = vmul.f32 %v2120, %v658
        %v2139 = vmul.f32 %v2121, %v662
        %v2140 = vmul.f32 %v2122, %v666
        %v2141 = vmul.f32 %v2123, %v670
        %v2142 = vmul.f32 %v2124, %v674
        %v2143 = vmul.f32 %v2125, %v678
        %v2144 = vmul.f32 %v2126, %v682
        %v2145 = vadd.f32 %v2091, %v2127
        %v2146 = vadd.f32 %v2092, %v2128
        %v2147 = vadd.f32 %v2093, %v2129
        %v2148 = vadd.f32 %v2094, %v2130
        %v2149 = vadd.f32 %v2095, %v2131
        %v2150 = vadd.f32 %v2096, %v2132
        %v2151 = vadd.f32 %v2097, %v2133
        %v2152 = vadd.f32 %v2098, %v2134
        %v2153 = vadd.f32 %v2099, %v2135
        %v2154 = vadd.f32 %v2100, %v2136
        %v2155 = vadd.f32 %v2101, %v2137
        %v2156 = vadd.f32 %v2102, %v2138
        %v2157 = vadd.f32 %v2103, %v2139
        %v2158 = vadd.f32 %v2104, %v2140
        %v2159 = vadd.f32 %v2105, %v2141
        %v2160 = vadd.f32 %v2106, %v2142
        %v2161 = vadd.f32 %v2107, %v2143
        %v2162 = vadd.f32 %v2108, %v2144
        %v2163 = vld [vmem:[%s1702 + $0x48] sm:$0x7f]
        %v2164 = vld [vmem:[%s1702 + $0x50] sm:$0x7f]
        %v2165 = vld [vmem:[%s1702 + $0x58] sm:$0x7f]
        %v2166 = vld [vmem:[%s1702 + $0x60] sm:$0x7f]
        %v2167 = vld [vmem:[%s1702 + $0x68] sm:$0x7f]
        %v2168 = vld [vmem:[%s1702 + $0x70] sm:$0x7f]
        %v2169 = vld [vmem:[%s1702 + $0x78] sm:$0x7f]
        %v2170 = vld [vmem:[%s1702 + $0x80] sm:$0x7f]
        %v2171 = vld [vmem:[%s1702 + $0x88] sm:$0x7f]
        %v2172 = vmul.f32 %v2163, %v713
        %v2173 = vmul.f32 %v2164, %v717
        %v2174 = vmul.f32 %v2165, %v721
        %v2175 = vmul.f32 %v2166, %v725
        %v2176 = vmul.f32 %v2167, %v729
        %v2177 = vmul.f32 %v2168, %v733
        %v2178 = vmul.f32 %v2169, %v737
        %v2179 = vmul.f32 %v2170, %v741
        %v2180 = vmul.f32 %v2171, %v745
        %v2190 = vrot.slane %v2172, 1
        %v2191 = vrot.slane %v2173, 1
        %v2192 = vrot.slane %v2174, 1
        %v2193 = vrot.slane %v2175, 1
        %v2194 = vrot.slane %v2176, 1
        %v2195 = vrot.slane %v2177, 1
        %v2196 = vrot.slane %v2178, 1
        %v2197 = vrot.slane %v2179, 1
        %v2198 = vrot.slane %v2180, 1
        %v2208 = vadd.f32 %v2145, %v2190
        %v2209 = vadd.f32 %v2146, %v2191
        %v2210 = vadd.f32 %v2147, %v2192
        %v2211 = vadd.f32 %v2148, %v2193
        %v2212 = vadd.f32 %v2149, %v2194
        %v2213 = vadd.f32 %v2150, %v2195
        %v2214 = vadd.f32 %v2151, %v2196
        %v2215 = vadd.f32 %v2152, %v2197
        %v2216 = vadd.f32 %v2153, %v2198
        %v2217 = vadd.f32 %v2154, %v2190
        %v2218 = vadd.f32 %v2155, %v2191
        %v2219 = vadd.f32 %v2156, %v2192
        %v2220 = vadd.f32 %v2157, %v2193
        %v2221 = vadd.f32 %v2158, %v2194
        %v2222 = vadd.f32 %v2159, %v2195
        %v2223 = vadd.f32 %v2160, %v2196
        %v2224 = vadd.f32 %v2161, %v2197
        %v2225 = vadd.f32 %v2162, %v2198
        %v2226 = vld [vmem:[%s1702 + $0x48] sm:$0xfe]
        %v2227 = vld [vmem:[%s1702 + $0x50] sm:$0xfe]
        %v2228 = vld [vmem:[%s1702 + $0x58] sm:$0xfe]
        %v2229 = vld [vmem:[%s1702 + $0x60] sm:$0xfe]
        %v2230 = vld [vmem:[%s1702 + $0x68] sm:$0xfe]
        %v2231 = vld [vmem:[%s1702 + $0x70] sm:$0xfe]
        %v2232 = vld [vmem:[%s1702 + $0x78] sm:$0xfe]
        %v2233 = vld [vmem:[%s1702 + $0x80] sm:$0xfe]
        %v2234 = vld [vmem:[%s1702 + $0x88] sm:$0xfe]
        %v2235 = vmul.f32 %v2226, %v812
        %v2236 = vmul.f32 %v2227, %v816
        %v2237 = vmul.f32 %v2228, %v820
        %v2238 = vmul.f32 %v2229, %v824
        %v2239 = vmul.f32 %v2230, %v828
        %v2240 = vmul.f32 %v2231, %v832
        %v2241 = vmul.f32 %v2232, %v836
        %v2242 = vmul.f32 %v2233, %v840
        %v2243 = vmul.f32 %v2234, %v844
        %v2253 = vrot.slane %v2235, 2
        %v2254 = vrot.slane %v2236, 2
        %v2255 = vrot.slane %v2237, 2
        %v2256 = vrot.slane %v2238, 2
        %v2257 = vrot.slane %v2239, 2
        %v2258 = vrot.slane %v2240, 2
        %v2259 = vrot.slane %v2241, 2
        %v2260 = vrot.slane %v2242, 2
        %v2261 = vrot.slane %v2243, 2
        %v2271 = vadd.f32 %v2208, %v2253
        %v2272 = vadd.f32 %v2209, %v2254
        %v2273 = vadd.f32 %v2210, %v2255
        %v2274 = vadd.f32 %v2211, %v2256
        %v2275 = vadd.f32 %v2212, %v2257
        %v2276 = vadd.f32 %v2213, %v2258
        %v2277 = vadd.f32 %v2214, %v2259
        %v2278 = vadd.f32 %v2215, %v2260
        %v2279 = vadd.f32 %v2216, %v2261
        %v2280 = vadd.f32 %v2217, %v2253
        %v2281 = vadd.f32 %v2218, %v2254
        %v2282 = vadd.f32 %v2219, %v2255
        %v2283 = vadd.f32 %v2220, %v2256
        %v2284 = vadd.f32 %v2221, %v2257
        %v2285 = vadd.f32 %v2222, %v2258
        %v2286 = vadd.f32 %v2223, %v2259
        %v2287 = vadd.f32 %v2224, %v2260
        %v2288 = vadd.f32 %v2225, %v2261
        %s2289 = scalar_lea.vmem [#allocation2], 432
        %v2290 = vld [vmem:[%s2289] sm:$0x80]
        %v2291 = vld [vmem:[%s2289 + $0x8] sm:$0x80]
        %v2292 = vld [vmem:[%s2289 + $0x10] sm:$0x80]
        %v2293 = vld [vmem:[%s2289 + $0x18] sm:$0x80]
        %v2294 = vld [vmem:[%s2289 + $0x20] sm:$0x80]
        %v2295 = vld [vmem:[%s2289 + $0x28] sm:$0x80]
        %v2296 = vld [vmem:[%s2289 + $0x30] sm:$0x80]
        %v2297 = vld [vmem:[%s2289 + $0x38] sm:$0x80]
        %v2298 = vld [vmem:[%s2289 + $0x40] sm:$0x80]
        %v2299 = vld [vmem:[%s2289 + $0x48] sm:$0x3f]
        %v2300 = vld [vmem:[%s2289 + $0x50] sm:$0x3f]
        %v2301 = vld [vmem:[%s2289 + $0x58] sm:$0x3f]
        %v2302 = vld [vmem:[%s2289 + $0x60] sm:$0x3f]
        %v2303 = vld [vmem:[%s2289 + $0x68] sm:$0x3f]
        %v2304 = vld [vmem:[%s2289 + $0x70] sm:$0x3f]
        %v2305 = vld [vmem:[%s2289 + $0x78] sm:$0x3f]
        %v2306 = vld [vmem:[%s2289 + $0x80] sm:$0x3f]
        %v2307 = vld [vmem:[%s2289 + $0x88] sm:$0x3f]
        %v2308 = vmul.f32 %v2290, %v921
        %v2309 = vmul.f32 %v2291, %v925
        %v2310 = vmul.f32 %v2292, %v929
        %v2311 = vmul.f32 %v2293, %v933
        %v2312 = vmul.f32 %v2294, %v937
        %v2313 = vmul.f32 %v2295, %v941
        %v2314 = vmul.f32 %v2296, %v945
        %v2315 = vmul.f32 %v2297, %v949
        %v2316 = vmul.f32 %v2298, %v953
        %v2317 = vmul.f32 %v2299, %v921
        %v2318 = vmul.f32 %v2300, %v925
        %v2319 = vmul.f32 %v2301, %v929
        %v2320 = vmul.f32 %v2302, %v933
        %v2321 = vmul.f32 %v2303, %v937
        %v2322 = vmul.f32 %v2304, %v941
        %v2323 = vmul.f32 %v2305, %v945
        %v2324 = vmul.f32 %v2306, %v949
        %v2325 = vmul.f32 %v2307, %v953
        %v2326 = vadd.f32 %v2271, %v2308
        %v2327 = vadd.f32 %v2272, %v2309
        %v2328 = vadd.f32 %v2273, %v2310
        %v2329 = vadd.f32 %v2274, %v2311
        %v2330 = vadd.f32 %v2275, %v2312
        %v2331 = vadd.f32 %v2276, %v2313
        %v2332 = vadd.f32 %v2277, %v2314
        %v2333 = vadd.f32 %v2278, %v2315
        %v2334 = vadd.f32 %v2279, %v2316
        %v2335 = vadd.f32 %v2280, %v2317
        %v2336 = vadd.f32 %v2281, %v2318
        %v2337 = vadd.f32 %v2282, %v2319
        %v2338 = vadd.f32 %v2283, %v2320
        %v2339 = vadd.f32 %v2284, %v2321
        %v2340 = vadd.f32 %v2285, %v2322
        %v2341 = vadd.f32 %v2286, %v2323
        %v2342 = vadd.f32 %v2287, %v2324
        %v2343 = vadd.f32 %v2288, %v2325
        %v2344 = vld [vmem:[%s2289 + $0x48] sm:$0x7f]
        %v2345 = vld [vmem:[%s2289 + $0x50] sm:$0x7f]
        %v2346 = vld [vmem:[%s2289 + $0x58] sm:$0x7f]
        %v2347 = vld [vmem:[%s2289 + $0x60] sm:$0x7f]
        %v2348 = vld [vmem:[%s2289 + $0x68] sm:$0x7f]
        %v2349 = vld [vmem:[%s2289 + $0x70] sm:$0x7f]
        %v2350 = vld [vmem:[%s2289 + $0x78] sm:$0x7f]
        %v2351 = vld [vmem:[%s2289 + $0x80] sm:$0x7f]
        %v2352 = vld [vmem:[%s2289 + $0x88] sm:$0x7f]
        %v2353 = vmul.f32 %v2344, %v1002
        %v2354 = vmul.f32 %v2345, %v1006
        %v2355 = vmul.f32 %v2346, %v1010
        %v2356 = vmul.f32 %v2347, %v1014
        %v2357 = vmul.f32 %v2348, %v1018
        %v2358 = vmul.f32 %v2349, %v1022
        %v2359 = vmul.f32 %v2350, %v1026
        %v2360 = vmul.f32 %v2351, %v1030
        %v2361 = vmul.f32 %v2352, %v1034
        %v2371 = vrot.slane %v2353, 1
        %v2372 = vrot.slane %v2354, 1
        %v2373 = vrot.slane %v2355, 1
        %v2374 = vrot.slane %v2356, 1
        %v2375 = vrot.slane %v2357, 1
        %v2376 = vrot.slane %v2358, 1
        %v2377 = vrot.slane %v2359, 1
        %v2378 = vrot.slane %v2360, 1
        %v2379 = vrot.slane %v2361, 1
        %v2389 = vadd.f32 %v2326, %v2371
        %v2390 = vadd.f32 %v2327, %v2372
        %v2391 = vadd.f32 %v2328, %v2373
        %v2392 = vadd.f32 %v2329, %v2374
        %v2393 = vadd.f32 %v2330, %v2375
        %v2394 = vadd.f32 %v2331, %v2376
        %v2395 = vadd.f32 %v2332, %v2377
        %v2396 = vadd.f32 %v2333, %v2378
        %v2397 = vadd.f32 %v2334, %v2379
        %v2398 = vadd.f32 %v2335, %v2371
        %v2399 = vadd.f32 %v2336, %v2372
        %v2400 = vadd.f32 %v2337, %v2373
        %v2401 = vadd.f32 %v2338, %v2374
        %v2402 = vadd.f32 %v2339, %v2375
        %v2403 = vadd.f32 %v2340, %v2376
        %v2404 = vadd.f32 %v2341, %v2377
        %v2405 = vadd.f32 %v2342, %v2378
        %v2406 = vadd.f32 %v2343, %v2379
        %v2407 = vld [vmem:[%s2289 + $0x48] sm:$0xfe]
        %v2408 = vld [vmem:[%s2289 + $0x50] sm:$0xfe]
        %v2409 = vld [vmem:[%s2289 + $0x58] sm:$0xfe]
        %v2410 = vld [vmem:[%s2289 + $0x60] sm:$0xfe]
        %v2411 = vld [vmem:[%s2289 + $0x68] sm:$0xfe]
        %v2412 = vld [vmem:[%s2289 + $0x70] sm:$0xfe]
        %v2413 = vld [vmem:[%s2289 + $0x78] sm:$0xfe]
        %v2414 = vld [vmem:[%s2289 + $0x80] sm:$0xfe]
        %v2415 = vld [vmem:[%s2289 + $0x88] sm:$0xfe]
        %v2416 = vmul.f32 %v2407, %v1101
        %v2417 = vmul.f32 %v2408, %v1105
        %v2418 = vmul.f32 %v2409, %v1109
        %v2419 = vmul.f32 %v2410, %v1113
        %v2420 = vmul.f32 %v2411, %v1117
        %v2421 = vmul.f32 %v2412, %v1121
        %v2422 = vmul.f32 %v2413, %v1125
        %v2423 = vmul.f32 %v2414, %v1129
        %v2424 = vmul.f32 %v2415, %v1133
        %v2434 = vrot.slane %v2416, 2
        %v2435 = vrot.slane %v2417, 2
        %v2436 = vrot.slane %v2418, 2
        %v2437 = vrot.slane %v2419, 2
        %v2438 = vrot.slane %v2420, 2
        %v2439 = vrot.slane %v2421, 2
        %v2440 = vrot.slane %v2422, 2
        %v2441 = vrot.slane %v2423, 2
        %v2442 = vrot.slane %v2424, 2
        %v2452 = vadd.f32 %v2389, %v2434
        %v2453 = vadd.f32 %v2390, %v2435
        %v2454 = vadd.f32 %v2391, %v2436
        %v2455 = vadd.f32 %v2392, %v2437
        %v2456 = vadd.f32 %v2393, %v2438
        %v2457 = vadd.f32 %v2394, %v2439
        %v2458 = vadd.f32 %v2395, %v2440
        %v2459 = vadd.f32 %v2396, %v2441
        %v2460 = vadd.f32 %v2397, %v2442
        %v2461 = vadd.f32 %v2398, %v2434
        %v2462 = vadd.f32 %v2399, %v2435
        %v2463 = vadd.f32 %v2400, %v2436
        %v2464 = vadd.f32 %v2401, %v2437
        %v2465 = vadd.f32 %v2402, %v2438
        %v2466 = vadd.f32 %v2403, %v2439
        %v2467 = vadd.f32 %v2404, %v2440
        %v2468 = vadd.f32 %v2405, %v2441
        %v2469 = vadd.f32 %v2406, %v2442
        %v2488 = vrot.slane %v2452, 7
        %v2489 = vrot.slane %v2461, 7
        %v2490 = vsel %vm1206, %v2488, %v2489
        %v2491 = vrot.slane %v2453, 7
        %v2492 = vrot.slane %v2462, 7
        %v2493 = vsel %vm1206, %v2491, %v2492
        %v2494 = vrot.slane %v2454, 7
        %v2495 = vrot.slane %v2463, 7
        %v2496 = vsel %vm1206, %v2494, %v2495
        %v2497 = vrot.slane %v2455, 7
        %v2498 = vrot.slane %v2464, 7
        %v2499 = vsel %vm1206, %v2497, %v2498
        %v2500 = vrot.slane %v2456, 7
        %v2501 = vrot.slane %v2465, 7
        %v2502 = vsel %vm1206, %v2500, %v2501
        %v2503 = vrot.slane %v2457, 7
        %v2504 = vrot.slane %v2466, 7
        %v2505 = vsel %vm1206, %v2503, %v2504
        %v2506 = vrot.slane %v2458, 7
        %v2507 = vrot.slane %v2467, 7
        %v2508 = vsel %vm1206, %v2506, %v2507
        %v2509 = vrot.slane %v2459, 7
        %v2510 = vrot.slane %v2468, 7
        %v2511 = vsel %vm1206, %v2509, %v2510
        %v2512 = vrot.slane %v2460, 7
        %v2513 = vrot.slane %v2469, 7
        %v2514 = vsel %vm1206, %v2512, %v2513
        %s2524 = scalar_lea.vmem %s355, 144 [#allocation5]
        %2525 = vst [vmem:[%s2524] sm:$0x7f] %v2490
        %2526 = vst [vmem:[%s2524 + $0x8] sm:$0x7f] %v2493
        %2527 = vst [vmem:[%s2524 + $0x10] sm:$0x7f] %v2496
        %2528 = vst [vmem:[%s2524 + $0x18] sm:$0x7f] %v2499
        %2529 = vst [vmem:[%s2524 + $0x20] sm:$0x7f] %v2502
        %2530 = vst [vmem:[%s2524 + $0x28] sm:$0x7f] %v2505
        %2531 = vst [vmem:[%s2524 + $0x30] sm:$0x7f] %v2508
        %2532 = vst [vmem:[%s2524 + $0x38] sm:$0x7f] %v2511
        %2533 = vst [vmem:[%s2524 + $0x40] sm:$0x7f] %v2514
        %v2534 = vld [vmem:[%s1702] sm:$0x80]
        %v2535 = vld [vmem:[%s1702 + $0x8] sm:$0x80]
        %v2536 = vld [vmem:[%s1702 + $0x10] sm:$0x80]
        %v2537 = vld [vmem:[%s1702 + $0x18] sm:$0x80]
        %v2538 = vld [vmem:[%s1702 + $0x20] sm:$0x80]
        %v2539 = vld [vmem:[%s1702 + $0x28] sm:$0x80]
        %v2540 = vld [vmem:[%s1702 + $0x30] sm:$0x80]
        %v2541 = vld [vmem:[%s1702 + $0x38] sm:$0x80]
        %v2542 = vld [vmem:[%s1702 + $0x40] sm:$0x80]
        %v2543 = vld [vmem:[%s1702 + $0x48] sm:$0x3f]
        %v2544 = vld [vmem:[%s1702 + $0x50] sm:$0x3f]
        %v2545 = vld [vmem:[%s1702 + $0x58] sm:$0x3f]
        %v2546 = vld [vmem:[%s1702 + $0x60] sm:$0x3f]
        %v2547 = vld [vmem:[%s1702 + $0x68] sm:$0x3f]
        %v2548 = vld [vmem:[%s1702 + $0x70] sm:$0x3f]
        %v2549 = vld [vmem:[%s1702 + $0x78] sm:$0x3f]
        %v2550 = vld [vmem:[%s1702 + $0x80] sm:$0x3f]
        %v2551 = vld [vmem:[%s1702 + $0x88] sm:$0x3f]
        %v2552 = vmul.f32 %v2534, %v1273
        %v2553 = vmul.f32 %v2535, %v1277
        %v2554 = vmul.f32 %v2536, %v1281
        %v2555 = vmul.f32 %v2537, %v1285
        %v2556 = vmul.f32 %v2538, %v1289
        %v2557 = vmul.f32 %v2539, %v1293
        %v2558 = vmul.f32 %v2540, %v1297
        %v2559 = vmul.f32 %v2541, %v1301
        %v2560 = vmul.f32 %v2542, %v1305
        %v2561 = vmul.f32 %v2543, %v1273
        %v2562 = vmul.f32 %v2544, %v1277
        %v2563 = vmul.f32 %v2545, %v1281
        %v2564 = vmul.f32 %v2546, %v1285
        %v2565 = vmul.f32 %v2547, %v1289
        %v2566 = vmul.f32 %v2548, %v1293
        %v2567 = vmul.f32 %v2549, %v1297
        %v2568 = vmul.f32 %v2550, %v1301
        %v2569 = vmul.f32 %v2551, %v1305
        %v2570 = vld [vmem:[%s1702 + $0x48] sm:$0x7f]
        %v2571 = vld [vmem:[%s1702 + $0x50] sm:$0x7f]
        %v2572 = vld [vmem:[%s1702 + $0x58] sm:$0x7f]
        %v2573 = vld [vmem:[%s1702 + $0x60] sm:$0x7f]
        %v2574 = vld [vmem:[%s1702 + $0x68] sm:$0x7f]
        %v2575 = vld [vmem:[%s1702 + $0x70] sm:$0x7f]
        %v2576 = vld [vmem:[%s1702 + $0x78] sm:$0x7f]
        %v2577 = vld [vmem:[%s1702 + $0x80] sm:$0x7f]
        %v2578 = vld [vmem:[%s1702 + $0x88] sm:$0x7f]
        %v2579 = vmul.f32 %v2570, %v1336
        %v2580 = vmul.f32 %v2571, %v1340
        %v2581 = vmul.f32 %v2572, %v1344
        %v2582 = vmul.f32 %v2573, %v1348
        %v2583 = vmul.f32 %v2574, %v1352
        %v2584 = vmul.f32 %v2575, %v1356
        %v2585 = vmul.f32 %v2576, %v1360
        %v2586 = vmul.f32 %v2577, %v1364
        %v2587 = vmul.f32 %v2578, %v1368
        %v2597 = vrot.slane %v2579, 1
        %v2598 = vrot.slane %v2580, 1
        %v2599 = vrot.slane %v2581, 1
        %v2600 = vrot.slane %v2582, 1
        %v2601 = vrot.slane %v2583, 1
        %v2602 = vrot.slane %v2584, 1
        %v2603 = vrot.slane %v2585, 1
        %v2604 = vrot.slane %v2586, 1
        %v2605 = vrot.slane %v2587, 1
        %v2615 = vadd.f32 %v2552, %v2597
        %v2616 = vadd.f32 %v2553, %v2598
        %v2617 = vadd.f32 %v2554, %v2599
        %v2618 = vadd.f32 %v2555, %v2600
        %v2619 = vadd.f32 %v2556, %v2601
        %v2620 = vadd.f32 %v2557, %v2602
        %v2621 = vadd.f32 %v2558, %v2603
        %v2622 = vadd.f32 %v2559, %v2604
        %v2623 = vadd.f32 %v2560, %v2605
        %v2624 = vadd.f32 %v2561, %v2597
        %v2625 = vadd.f32 %v2562, %v2598
        %v2626 = vadd.f32 %v2563, %v2599
        %v2627 = vadd.f32 %v2564, %v2600
        %v2628 = vadd.f32 %v2565, %v2601
        %v2629 = vadd.f32 %v2566, %v2602
        %v2630 = vadd.f32 %v2567, %v2603
        %v2631 = vadd.f32 %v2568, %v2604
        %v2632 = vadd.f32 %v2569, %v2605
        %v2633 = vld [vmem:[%s1702 + $0x48] sm:$0xfe]
        %v2634 = vld [vmem:[%s1702 + $0x50] sm:$0xfe]
        %v2635 = vld [vmem:[%s1702 + $0x58] sm:$0xfe]
        %v2636 = vld [vmem:[%s1702 + $0x60] sm:$0xfe]
        %v2637 = vld [vmem:[%s1702 + $0x68] sm:$0xfe]
        %v2638 = vld [vmem:[%s1702 + $0x70] sm:$0xfe]
        %v2639 = vld [vmem:[%s1702 + $0x78] sm:$0xfe]
        %v2640 = vld [vmem:[%s1702 + $0x80] sm:$0xfe]
        %v2641 = vld [vmem:[%s1702 + $0x88] sm:$0xfe]
        %v2642 = vmul.f32 %v2633, %v1435
        %v2643 = vmul.f32 %v2634, %v1439
        %v2644 = vmul.f32 %v2635, %v1443
        %v2645 = vmul.f32 %v2636, %v1447
        %v2646 = vmul.f32 %v2637, %v1451
        %v2647 = vmul.f32 %v2638, %v1455
        %v2648 = vmul.f32 %v2639, %v1459
        %v2649 = vmul.f32 %v2640, %v1463
        %v2650 = vmul.f32 %v2641, %v1467
        %v2660 = vrot.slane %v2642, 2
        %v2661 = vrot.slane %v2643, 2
        %v2662 = vrot.slane %v2644, 2
        %v2663 = vrot.slane %v2645, 2
        %v2664 = vrot.slane %v2646, 2
        %v2665 = vrot.slane %v2647, 2
        %v2666 = vrot.slane %v2648, 2
        %v2667 = vrot.slane %v2649, 2
        %v2668 = vrot.slane %v2650, 2
        %v2678 = vadd.f32 %v2615, %v2660
        %v2679 = vadd.f32 %v2616, %v2661
        %v2680 = vadd.f32 %v2617, %v2662
        %v2681 = vadd.f32 %v2618, %v2663
        %v2682 = vadd.f32 %v2619, %v2664
        %v2683 = vadd.f32 %v2620, %v2665
        %v2684 = vadd.f32 %v2621, %v2666
        %v2685 = vadd.f32 %v2622, %v2667
        %v2686 = vadd.f32 %v2623, %v2668
        %v2687 = vadd.f32 %v2624, %v2660
        %v2688 = vadd.f32 %v2625, %v2661
        %v2689 = vadd.f32 %v2626, %v2662
        %v2690 = vadd.f32 %v2627, %v2663
        %v2691 = vadd.f32 %v2628, %v2664
        %v2692 = vadd.f32 %v2629, %v2665
        %v2693 = vadd.f32 %v2630, %v2666
        %v2694 = vadd.f32 %v2631, %v2667
        %v2695 = vadd.f32 %v2632, %v2668
        %v2696 = vld [vmem:[%s2289] sm:$0x80]
        %v2697 = vld [vmem:[%s2289 + $0x8] sm:$0x80]
        %v2698 = vld [vmem:[%s2289 + $0x10] sm:$0x80]
        %v2699 = vld [vmem:[%s2289 + $0x18] sm:$0x80]
        %v2700 = vld [vmem:[%s2289 + $0x20] sm:$0x80]
        %v2701 = vld [vmem:[%s2289 + $0x28] sm:$0x80]
        %v2702 = vld [vmem:[%s2289 + $0x30] sm:$0x80]
        %v2703 = vld [vmem:[%s2289 + $0x38] sm:$0x80]
        %v2704 = vld [vmem:[%s2289 + $0x40] sm:$0x80]
        %v2705 = vld [vmem:[%s2289 + $0x48] sm:$0x3f]
        %v2706 = vld [vmem:[%s2289 + $0x50] sm:$0x3f]
        %v2707 = vld [vmem:[%s2289 + $0x58] sm:$0x3f]
        %v2708 = vld [vmem:[%s2289 + $0x60] sm:$0x3f]
        %v2709 = vld [vmem:[%s2289 + $0x68] sm:$0x3f]
        %v2710 = vld [vmem:[%s2289 + $0x70] sm:$0x3f]
        %v2711 = vld [vmem:[%s2289 + $0x78] sm:$0x3f]
        %v2712 = vld [vmem:[%s2289 + $0x80] sm:$0x3f]
        %v2713 = vld [vmem:[%s2289 + $0x88] sm:$0x3f]
        %v2714 = vmul.f32 %v2696, %v650
        %v2715 = vmul.f32 %v2697, %v654
        %v2716 = vmul.f32 %v2698, %v658
        %v2717 = vmul.f32 %v2699, %v662
        %v2718 = vmul.f32 %v2700, %v666
        %v2719 = vmul.f32 %v2701, %v670
        %v2720 = vmul.f32 %v2702, %v674
        %v2721 = vmul.f32 %v2703, %v678
        %v2722 = vmul.f32 %v2704, %v682
        %v2723 = vmul.f32 %v2705, %v650
        %v2724 = vmul.f32 %v2706, %v654
        %v2725 = vmul.f32 %v2707, %v658
        %v2726 = vmul.f32 %v2708, %v662
        %v2727 = vmul.f32 %v2709, %v666
        %v2728 = vmul.f32 %v2710, %v670
        %v2729 = vmul.f32 %v2711, %v674
        %v2730 = vmul.f32 %v2712, %v678
        %v2731 = vmul.f32 %v2713, %v682
        %v2732 = vadd.f32 %v2678, %v2714
        %v2733 = vadd.f32 %v2679, %v2715
        %v2734 = vadd.f32 %v2680, %v2716
        %v2735 = vadd.f32 %v2681, %v2717
        %v2736 = vadd.f32 %v2682, %v2718
        %v2737 = vadd.f32 %v2683, %v2719
        %v2738 = vadd.f32 %v2684, %v2720
        %v2739 = vadd.f32 %v2685, %v2721
        %v2740 = vadd.f32 %v2686, %v2722
        %v2741 = vadd.f32 %v2687, %v2723
        %v2742 = vadd.f32 %v2688, %v2724
        %v2743 = vadd.f32 %v2689, %v2725
        %v2744 = vadd.f32 %v2690, %v2726
        %v2745 = vadd.f32 %v2691, %v2727
        %v2746 = vadd.f32 %v2692, %v2728
        %v2747 = vadd.f32 %v2693, %v2729
        %v2748 = vadd.f32 %v2694, %v2730
        %v2749 = vadd.f32 %v2695, %v2731
        %v2750 = vld [vmem:[%s2289 + $0x48] sm:$0x7f]
        %v2751 = vld [vmem:[%s2289 + $0x50] sm:$0x7f]
        %v2752 = vld [vmem:[%s2289 + $0x58] sm:$0x7f]
        %v2753 = vld [vmem:[%s2289 + $0x60] sm:$0x7f]
        %v2754 = vld [vmem:[%s2289 + $0x68] sm:$0x7f]
        %v2755 = vld [vmem:[%s2289 + $0x70] sm:$0x7f]
        %v2756 = vld [vmem:[%s2289 + $0x78] sm:$0x7f]
        %v2757 = vld [vmem:[%s2289 + $0x80] sm:$0x7f]
        %v2758 = vld [vmem:[%s2289 + $0x88] sm:$0x7f]
        %v2759 = vmul.f32 %v2750, %v713
        %v2760 = vmul.f32 %v2751, %v717
        %v2761 = vmul.f32 %v2752, %v721
        %v2762 = vmul.f32 %v2753, %v725
        %v2763 = vmul.f32 %v2754, %v729
        %v2764 = vmul.f32 %v2755, %v733
        %v2765 = vmul.f32 %v2756, %v737
        %v2766 = vmul.f32 %v2757, %v741
        %v2767 = vmul.f32 %v2758, %v745
        %v2777 = vrot.slane %v2759, 1
        %v2778 = vrot.slane %v2760, 1
        %v2779 = vrot.slane %v2761, 1
        %v2780 = vrot.slane %v2762, 1
        %v2781 = vrot.slane %v2763, 1
        %v2782 = vrot.slane %v2764, 1
        %v2783 = vrot.slane %v2765, 1
        %v2784 = vrot.slane %v2766, 1
        %v2785 = vrot.slane %v2767, 1
        %v2795 = vadd.f32 %v2732, %v2777
        %v2796 = vadd.f32 %v2733, %v2778
        %v2797 = vadd.f32 %v2734, %v2779
        %v2798 = vadd.f32 %v2735, %v2780
        %v2799 = vadd.f32 %v2736, %v2781
        %v2800 = vadd.f32 %v2737, %v2782
        %v2801 = vadd.f32 %v2738, %v2783
        %v2802 = vadd.f32 %v2739, %v2784
        %v2803 = vadd.f32 %v2740, %v2785
        %v2804 = vadd.f32 %v2741, %v2777
        %v2805 = vadd.f32 %v2742, %v2778
        %v2806 = vadd.f32 %v2743, %v2779
        %v2807 = vadd.f32 %v2744, %v2780
        %v2808 = vadd.f32 %v2745, %v2781
        %v2809 = vadd.f32 %v2746, %v2782
        %v2810 = vadd.f32 %v2747, %v2783
        %v2811 = vadd.f32 %v2748, %v2784
        %v2812 = vadd.f32 %v2749, %v2785
        %v2813 = vld [vmem:[%s2289 + $0x48] sm:$0xfe]
        %v2814 = vld [vmem:[%s2289 + $0x50] sm:$0xfe]
        %v2815 = vld [vmem:[%s2289 + $0x58] sm:$0xfe]
        %v2816 = vld [vmem:[%s2289 + $0x60] sm:$0xfe]
        %v2817 = vld [vmem:[%s2289 + $0x68] sm:$0xfe]
        %v2818 = vld [vmem:[%s2289 + $0x70] sm:$0xfe]
        %v2819 = vld [vmem:[%s2289 + $0x78] sm:$0xfe]
        %v2820 = vld [vmem:[%s2289 + $0x80] sm:$0xfe]
        %v2821 = vld [vmem:[%s2289 + $0x88] sm:$0xfe]
        %v2822 = vmul.f32 %v2813, %v812
        %v2823 = vmul.f32 %v2814, %v816
        %v2824 = vmul.f32 %v2815, %v820
        %v2825 = vmul.f32 %v2816, %v824
        %v2826 = vmul.f32 %v2817, %v828
        %v2827 = vmul.f32 %v2818, %v832
        %v2828 = vmul.f32 %v2819, %v836
        %v2829 = vmul.f32 %v2820, %v840
        %v2830 = vmul.f32 %v2821, %v844
        %v2840 = vrot.slane %v2822, 2
        %v2841 = vrot.slane %v2823, 2
        %v2842 = vrot.slane %v2824, 2
        %v2843 = vrot.slane %v2825, 2
        %v2844 = vrot.slane %v2826, 2
        %v2845 = vrot.slane %v2827, 2
        %v2846 = vrot.slane %v2828, 2
        %v2847 = vrot.slane %v2829, 2
        %v2848 = vrot.slane %v2830, 2
        %v2858 = vadd.f32 %v2795, %v2840
        %v2859 = vadd.f32 %v2796, %v2841
        %v2860 = vadd.f32 %v2797, %v2842
        %v2861 = vadd.f32 %v2798, %v2843
        %v2862 = vadd.f32 %v2799, %v2844
        %v2863 = vadd.f32 %v2800, %v2845
        %v2864 = vadd.f32 %v2801, %v2846
        %v2865 = vadd.f32 %v2802, %v2847
        %v2866 = vadd.f32 %v2803, %v2848
        %v2867 = vadd.f32 %v2804, %v2840
        %v2868 = vadd.f32 %v2805, %v2841
        %v2869 = vadd.f32 %v2806, %v2842
        %v2870 = vadd.f32 %v2807, %v2843
        %v2871 = vadd.f32 %v2808, %v2844
        %v2872 = vadd.f32 %v2809, %v2845
        %v2873 = vadd.f32 %v2810, %v2846
        %v2874 = vadd.f32 %v2811, %v2847
        %v2875 = vadd.f32 %v2812, %v2848
        %s2876 = scalar_lea.vmem [#allocation2], 576
        %v2877 = vld [vmem:[%s2876] sm:$0x80]
        %v2878 = vld [vmem:[%s2876 + $0x8] sm:$0x80]
        %v2879 = vld [vmem:[%s2876 + $0x10] sm:$0x80]
        %v2880 = vld [vmem:[%s2876 + $0x18] sm:$0x80]
        %v2881 = vld [vmem:[%s2876 + $0x20] sm:$0x80]
        %v2882 = vld [vmem:[%s2876 + $0x28] sm:$0x80]
        %v2883 = vld [vmem:[%s2876 + $0x30] sm:$0x80]
        %v2884 = vld [vmem:[%s2876 + $0x38] sm:$0x80]
        %v2885 = vld [vmem:[%s2876 + $0x40] sm:$0x80]
        %v2886 = vld [vmem:[%s2876 + $0x48] sm:$0x3f]
        %v2887 = vld [vmem:[%s2876 + $0x50] sm:$0x3f]
        %v2888 = vld [vmem:[%s2876 + $0x58] sm:$0x3f]
        %v2889 = vld [vmem:[%s2876 + $0x60] sm:$0x3f]
        %v2890 = vld [vmem:[%s2876 + $0x68] sm:$0x3f]
        %v2891 = vld [vmem:[%s2876 + $0x70] sm:$0x3f]
        %v2892 = vld [vmem:[%s2876 + $0x78] sm:$0x3f]
        %v2893 = vld [vmem:[%s2876 + $0x80] sm:$0x3f]
        %v2894 = vld [vmem:[%s2876 + $0x88] sm:$0x3f]
        %v2895 = vmul.f32 %v2877, %v921
        %v2896 = vmul.f32 %v2878, %v925
        %v2897 = vmul.f32 %v2879, %v929
        %v2898 = vmul.f32 %v2880, %v933
        %v2899 = vmul.f32 %v2881, %v937
        %v2900 = vmul.f32 %v2882, %v941
        %v2901 = vmul.f32 %v2883, %v945
        %v2902 = vmul.f32 %v2884, %v949
        %v2903 = vmul.f32 %v2885, %v953
        %v2904 = vmul.f32 %v2886, %v921
        %v2905 = vmul.f32 %v2887, %v925
        %v2906 = vmul.f32 %v2888, %v929
        %v2907 = vmul.f32 %v2889, %v933
        %v2908 = vmul.f32 %v2890, %v937
        %v2909 = vmul.f32 %v2891, %v941
        %v2910 = vmul.f32 %v2892, %v945
        %v2911 = vmul.f32 %v2893, %v949
        %v2912 = vmul.f32 %v2894, %v953
        %v2913 = vadd.f32 %v2858, %v2895
        %v2914 = vadd.f32 %v2859, %v2896
        %v2915 = vadd.f32 %v2860, %v2897
        %v2916 = vadd.f32 %v2861, %v2898
        %v2917 = vadd.f32 %v2862, %v2899
        %v2918 = vadd.f32 %v2863, %v2900
        %v2919 = vadd.f32 %v2864, %v2901
        %v2920 = vadd.f32 %v2865, %v2902
        %v2921 = vadd.f32 %v2866, %v2903
        %v2922 = vadd.f32 %v2867, %v2904
        %v2923 = vadd.f32 %v2868, %v2905
        %v2924 = vadd.f32 %v2869, %v2906
        %v2925 = vadd.f32 %v2870, %v2907
        %v2926 = vadd.f32 %v2871, %v2908
        %v2927 = vadd.f32 %v2872, %v2909
        %v2928 = vadd.f32 %v2873, %v2910
        %v2929 = vadd.f32 %v2874, %v2911
        %v2930 = vadd.f32 %v2875, %v2912
        %v2931 = vld [vmem:[%s2876 + $0x48] sm:$0x7f]
        %v2932 = vld [vmem:[%s2876 + $0x50] sm:$0x7f]
        %v2933 = vld [vmem:[%s2876 + $0x58] sm:$0x7f]
        %v2934 = vld [vmem:[%s2876 + $0x60] sm:$0x7f]
        %v2935 = vld [vmem:[%s2876 + $0x68] sm:$0x7f]
        %v2936 = vld [vmem:[%s2876 + $0x70] sm:$0x7f]
        %v2937 = vld [vmem:[%s2876 + $0x78] sm:$0x7f]
        %v2938 = vld [vmem:[%s2876 + $0x80] sm:$0x7f]
        %v2939 = vld [vmem:[%s2876 + $0x88] sm:$0x7f]
        %v2940 = vmul.f32 %v2931, %v1002
        %v2941 = vmul.f32 %v2932, %v1006
        %v2942 = vmul.f32 %v2933, %v1010
        %v2943 = vmul.f32 %v2934, %v1014
        %v2944 = vmul.f32 %v2935, %v1018
        %v2945 = vmul.f32 %v2936, %v1022
        %v2946 = vmul.f32 %v2937, %v1026
        %v2947 = vmul.f32 %v2938, %v1030
        %v2948 = vmul.f32 %v2939, %v1034
        %v2958 = vrot.slane %v2940, 1
        %v2959 = vrot.slane %v2941, 1
        %v2960 = vrot.slane %v2942, 1
        %v2961 = vrot.slane %v2943, 1
        %v2962 = vrot.slane %v2944, 1
        %v2963 = vrot.slane %v2945, 1
        %v2964 = vrot.slane %v2946, 1
        %v2965 = vrot.slane %v2947, 1
        %v2966 = vrot.slane %v2948, 1
        %v2976 = vadd.f32 %v2913, %v2958
        %v2977 = vadd.f32 %v2914, %v2959
        %v2978 = vadd.f32 %v2915, %v2960
        %v2979 = vadd.f32 %v2916, %v2961
        %v2980 = vadd.f32 %v2917, %v2962
        %v2981 = vadd.f32 %v2918, %v2963
        %v2982 = vadd.f32 %v2919, %v2964
        %v2983 = vadd.f32 %v2920, %v2965
        %v2984 = vadd.f32 %v2921, %v2966
        %v2985 = vadd.f32 %v2922, %v2958
        %v2986 = vadd.f32 %v2923, %v2959
        %v2987 = vadd.f32 %v2924, %v2960
        %v2988 = vadd.f32 %v2925, %v2961
        %v2989 = vadd.f32 %v2926, %v2962
        %v2990 = vadd.f32 %v2927, %v2963
        %v2991 = vadd.f32 %v2928, %v2964
        %v2992 = vadd.f32 %v2929, %v2965
        %v2993 = vadd.f32 %v2930, %v2966
        %v2994 = vld [vmem:[%s2876 + $0x48] sm:$0xfe]
        %v2995 = vld [vmem:[%s2876 + $0x50] sm:$0xfe]
        %v2996 = vld [vmem:[%s2876 + $0x58] sm:$0xfe]
        %v2997 = vld [vmem:[%s2876 + $0x60] sm:$0xfe]
        %v2998 = vld [vmem:[%s2876 + $0x68] sm:$0xfe]
        %v2999 = vld [vmem:[%s2876 + $0x70] sm:$0xfe]
        %v3000 = vld [vmem:[%s2876 + $0x78] sm:$0xfe]
        %v3001 = vld [vmem:[%s2876 + $0x80] sm:$0xfe]
        %v3002 = vld [vmem:[%s2876 + $0x88] sm:$0xfe]
        %v3003 = vmul.f32 %v2994, %v1101
        %v3004 = vmul.f32 %v2995, %v1105
        %v3005 = vmul.f32 %v2996, %v1109
        %v3006 = vmul.f32 %v2997, %v1113
        %v3007 = vmul.f32 %v2998, %v1117
        %v3008 = vmul.f32 %v2999, %v1121
        %v3009 = vmul.f32 %v3000, %v1125
        %v3010 = vmul.f32 %v3001, %v1129
        %v3011 = vmul.f32 %v3002, %v1133
        %v3021 = vrot.slane %v3003, 2
        %v3022 = vrot.slane %v3004, 2
        %v3023 = vrot.slane %v3005, 2
        %v3024 = vrot.slane %v3006, 2
        %v3025 = vrot.slane %v3007, 2
        %v3026 = vrot.slane %v3008, 2
        %v3027 = vrot.slane %v3009, 2
        %v3028 = vrot.slane %v3010, 2
        %v3029 = vrot.slane %v3011, 2
        %v3039 = vadd.f32 %v2976, %v3021
        %v3040 = vadd.f32 %v2977, %v3022
        %v3041 = vadd.f32 %v2978, %v3023
        %v3042 = vadd.f32 %v2979, %v3024
        %v3043 = vadd.f32 %v2980, %v3025
        %v3044 = vadd.f32 %v2981, %v3026
        %v3045 = vadd.f32 %v2982, %v3027
        %v3046 = vadd.f32 %v2983, %v3028
        %v3047 = vadd.f32 %v2984, %v3029
        %v3048 = vadd.f32 %v2985, %v3021
        %v3049 = vadd.f32 %v2986, %v3022
        %v3050 = vadd.f32 %v2987, %v3023
        %v3051 = vadd.f32 %v2988, %v3024
        %v3052 = vadd.f32 %v2989, %v3025
        %v3053 = vadd.f32 %v2990, %v3026
        %v3054 = vadd.f32 %v2991, %v3027
        %v3055 = vadd.f32 %v2992, %v3028
        %v3056 = vadd.f32 %v2993, %v3029
        %v3075 = vrot.slane %v3039, 7
        %v3076 = vrot.slane %v3048, 7
        %v3077 = vsel %vm1206, %v3075, %v3076
        %v3078 = vrot.slane %v3040, 7
        %v3079 = vrot.slane %v3049, 7
        %v3080 = vsel %vm1206, %v3078, %v3079
        %v3081 = vrot.slane %v3041, 7
        %v3082 = vrot.slane %v3050, 7
        %v3083 = vsel %vm1206, %v3081, %v3082
        %v3084 = vrot.slane %v3042, 7
        %v3085 = vrot.slane %v3051, 7
        %v3086 = vsel %vm1206, %v3084, %v3085
        %v3087 = vrot.slane %v3043, 7
        %v3088 = vrot.slane %v3052, 7
        %v3089 = vsel %vm1206, %v3087, %v3088
        %v3090 = vrot.slane %v3044, 7
        %v3091 = vrot.slane %v3053, 7
        %v3092 = vsel %vm1206, %v3090, %v3091
        %v3093 = vrot.slane %v3045, 7
        %v3094 = vrot.slane %v3054, 7
        %v3095 = vsel %vm1206, %v3093, %v3094
        %v3096 = vrot.slane %v3046, 7
        %v3097 = vrot.slane %v3055, 7
        %v3098 = vsel %vm1206, %v3096, %v3097
        %v3099 = vrot.slane %v3047, 7
        %v3100 = vrot.slane %v3056, 7
        %v3101 = vsel %vm1206, %v3099, %v3100
        %s3111 = scalar_lea.vmem %s355, 216 [#allocation5]
        %3112 = vst [vmem:[%s3111] sm:$0x7f] %v3077
        %3113 = vst [vmem:[%s3111 + $0x8] sm:$0x7f] %v3080
        %3114 = vst [vmem:[%s3111 + $0x10] sm:$0x7f] %v3083
        %3115 = vst [vmem:[%s3111 + $0x18] sm:$0x7f] %v3086
        %3116 = vst [vmem:[%s3111 + $0x20] sm:$0x7f] %v3089
        %3117 = vst [vmem:[%s3111 + $0x28] sm:$0x7f] %v3092
        %3118 = vst [vmem:[%s3111 + $0x30] sm:$0x7f] %v3095
        %3119 = vst [vmem:[%s3111 + $0x38] sm:$0x7f] %v3098
        %3120 = vst [vmem:[%s3111 + $0x40] sm:$0x7f] %v3101
        %v3121 = vld [vmem:[%s2289] sm:$0x80]
        %v3122 = vld [vmem:[%s2289 + $0x8] sm:$0x80]
        %v3123 = vld [vmem:[%s2289 + $0x10] sm:$0x80]
        %v3124 = vld [vmem:[%s2289 + $0x18] sm:$0x80]
        %v3125 = vld [vmem:[%s2289 + $0x20] sm:$0x80]
        %v3126 = vld [vmem:[%s2289 + $0x28] sm:$0x80]
        %v3127 = vld [vmem:[%s2289 + $0x30] sm:$0x80]
        %v3128 = vld [vmem:[%s2289 + $0x38] sm:$0x80]
        %v3129 = vld [vmem:[%s2289 + $0x40] sm:$0x80]
        %v3130 = vld [vmem:[%s2289 + $0x48] sm:$0x3f]
        %v3131 = vld [vmem:[%s2289 + $0x50] sm:$0x3f]
        %v3132 = vld [vmem:[%s2289 + $0x58] sm:$0x3f]
        %v3133 = vld [vmem:[%s2289 + $0x60] sm:$0x3f]
        %v3134 = vld [vmem:[%s2289 + $0x68] sm:$0x3f]
        %v3135 = vld [vmem:[%s2289 + $0x70] sm:$0x3f]
        %v3136 = vld [vmem:[%s2289 + $0x78] sm:$0x3f]
        %v3137 = vld [vmem:[%s2289 + $0x80] sm:$0x3f]
        %v3138 = vld [vmem:[%s2289 + $0x88] sm:$0x3f]
        %v3139 = vmul.f32 %v3121, %v1273
        %v3140 = vmul.f32 %v3122, %v1277
        %v3141 = vmul.f32 %v3123, %v1281
        %v3142 = vmul.f32 %v3124, %v1285
        %v3143 = vmul.f32 %v3125, %v1289
        %v3144 = vmul.f32 %v3126, %v1293
        %v3145 = vmul.f32 %v3127, %v1297
        %v3146 = vmul.f32 %v3128, %v1301
        %v3147 = vmul.f32 %v3129, %v1305
        %v3148 = vmul.f32 %v3130, %v1273
        %v3149 = vmul.f32 %v3131, %v1277
        %v3150 = vmul.f32 %v3132, %v1281
        %v3151 = vmul.f32 %v3133, %v1285
        %v3152 = vmul.f32 %v3134, %v1289
        %v3153 = vmul.f32 %v3135, %v1293
        %v3154 = vmul.f32 %v3136, %v1297
        %v3155 = vmul.f32 %v3137, %v1301
        %v3156 = vmul.f32 %v3138, %v1305
        %v3157 = vld [vmem:[%s2289 + $0x48] sm:$0x7f]
        %v3158 = vld [vmem:[%s2289 + $0x50] sm:$0x7f]
        %v3159 = vld [vmem:[%s2289 + $0x58] sm:$0x7f]
        %v3160 = vld [vmem:[%s2289 + $0x60] sm:$0x7f]
        %v3161 = vld [vmem:[%s2289 + $0x68] sm:$0x7f]
        %v3162 = vld [vmem:[%s2289 + $0x70] sm:$0x7f]
        %v3163 = vld [vmem:[%s2289 + $0x78] sm:$0x7f]
        %v3164 = vld [vmem:[%s2289 + $0x80] sm:$0x7f]
        %v3165 = vld [vmem:[%s2289 + $0x88] sm:$0x7f]
        %v3166 = vmul.f32 %v3157, %v1336
        %v3167 = vmul.f32 %v3158, %v1340
        %v3168 = vmul.f32 %v3159, %v1344
        %v3169 = vmul.f32 %v3160, %v1348
        %v3170 = vmul.f32 %v3161, %v1352
        %v3171 = vmul.f32 %v3162, %v1356
        %v3172 = vmul.f32 %v3163, %v1360
        %v3173 = vmul.f32 %v3164, %v1364
        %v3174 = vmul.f32 %v3165, %v1368
        %v3184 = vrot.slane %v3166, 1
        %v3185 = vrot.slane %v3167, 1
        %v3186 = vrot.slane %v3168, 1
        %v3187 = vrot.slane %v3169, 1
        %v3188 = vrot.slane %v3170, 1
        %v3189 = vrot.slane %v3171, 1
        %v3190 = vrot.slane %v3172, 1
        %v3191 = vrot.slane %v3173, 1
        %v3192 = vrot.slane %v3174, 1
        %v3202 = vadd.f32 %v3139, %v3184
        %v3203 = vadd.f32 %v3140, %v3185
        %v3204 = vadd.f32 %v3141, %v3186
        %v3205 = vadd.f32 %v3142, %v3187
        %v3206 = vadd.f32 %v3143, %v3188
        %v3207 = vadd.f32 %v3144, %v3189
        %v3208 = vadd.f32 %v3145, %v3190
        %v3209 = vadd.f32 %v3146, %v3191
        %v3210 = vadd.f32 %v3147, %v3192
        %v3211 = vadd.f32 %v3148, %v3184
        %v3212 = vadd.f32 %v3149, %v3185
        %v3213 = vadd.f32 %v3150, %v3186
        %v3214 = vadd.f32 %v3151, %v3187
        %v3215 = vadd.f32 %v3152, %v3188
        %v3216 = vadd.f32 %v3153, %v3189
        %v3217 = vadd.f32 %v3154, %v3190
        %v3218 = vadd.f32 %v3155, %v3191
        %v3219 = vadd.f32 %v3156, %v3192
        %v3220 = vld [vmem:[%s2289 + $0x48] sm:$0xfe]
        %v3221 = vld [vmem:[%s2289 + $0x50] sm:$0xfe]
        %v3222 = vld [vmem:[%s2289 + $0x58] sm:$0xfe]
        %v3223 = vld [vmem:[%s2289 + $0x60] sm:$0xfe]
        %v3224 = vld [vmem:[%s2289 + $0x68] sm:$0xfe]
        %v3225 = vld [vmem:[%s2289 + $0x70] sm:$0xfe]
        %v3226 = vld [vmem:[%s2289 + $0x78] sm:$0xfe]
        %v3227 = vld [vmem:[%s2289 + $0x80] sm:$0xfe]
        %v3228 = vld [vmem:[%s2289 + $0x88] sm:$0xfe]
        %v3229 = vmul.f32 %v3220, %v1435
        %v3230 = vmul.f32 %v3221, %v1439
        %v3231 = vmul.f32 %v3222, %v1443
        %v3232 = vmul.f32 %v3223, %v1447
        %v3233 = vmul.f32 %v3224, %v1451
        %v3234 = vmul.f32 %v3225, %v1455
        %v3235 = vmul.f32 %v3226, %v1459
        %v3236 = vmul.f32 %v3227, %v1463
        %v3237 = vmul.f32 %v3228, %v1467
        %v3247 = vrot.slane %v3229, 2
        %v3248 = vrot.slane %v3230, 2
        %v3249 = vrot.slane %v3231, 2
        %v3250 = vrot.slane %v3232, 2
        %v3251 = vrot.slane %v3233, 2
        %v3252 = vrot.slane %v3234, 2
        %v3253 = vrot.slane %v3235, 2
        %v3254 = vrot.slane %v3236, 2
        %v3255 = vrot.slane %v3237, 2
        %v3265 = vadd.f32 %v3202, %v3247
        %v3266 = vadd.f32 %v3203, %v3248
        %v3267 = vadd.f32 %v3204, %v3249
        %v3268 = vadd.f32 %v3205, %v3250
        %v3269 = vadd.f32 %v3206, %v3251
        %v3270 = vadd.f32 %v3207, %v3252
        %v3271 = vadd.f32 %v3208, %v3253
        %v3272 = vadd.f32 %v3209, %v3254
        %v3273 = vadd.f32 %v3210, %v3255
        %v3274 = vadd.f32 %v3211, %v3247
        %v3275 = vadd.f32 %v3212, %v3248
        %v3276 = vadd.f32 %v3213, %v3249
        %v3277 = vadd.f32 %v3214, %v3250
        %v3278 = vadd.f32 %v3215, %v3251
        %v3279 = vadd.f32 %v3216, %v3252
        %v3280 = vadd.f32 %v3217, %v3253
        %v3281 = vadd.f32 %v3218, %v3254
        %v3282 = vadd.f32 %v3219, %v3255
        %v3283 = vld [vmem:[%s2876] sm:$0x80]
        %v3284 = vld [vmem:[%s2876 + $0x8] sm:$0x80]
        %v3285 = vld [vmem:[%s2876 + $0x10] sm:$0x80]
        %v3286 = vld [vmem:[%s2876 + $0x18] sm:$0x80]
        %v3287 = vld [vmem:[%s2876 + $0x20] sm:$0x80]
        %v3288 = vld [vmem:[%s2876 + $0x28] sm:$0x80]
        %v3289 = vld [vmem:[%s2876 + $0x30] sm:$0x80]
        %v3290 = vld [vmem:[%s2876 + $0x38] sm:$0x80]
        %v3291 = vld [vmem:[%s2876 + $0x40] sm:$0x80]
        %v3292 = vld [vmem:[%s2876 + $0x48] sm:$0x3f]
        %v3293 = vld [vmem:[%s2876 + $0x50] sm:$0x3f]
        %v3294 = vld [vmem:[%s2876 + $0x58] sm:$0x3f]
        %v3295 = vld [vmem:[%s2876 + $0x60] sm:$0x3f]
        %v3296 = vld [vmem:[%s2876 + $0x68] sm:$0x3f]
        %v3297 = vld [vmem:[%s2876 + $0x70] sm:$0x3f]
        %v3298 = vld [vmem:[%s2876 + $0x78] sm:$0x3f]
        %v3299 = vld [vmem:[%s2876 + $0x80] sm:$0x3f]
        %v3300 = vld [vmem:[%s2876 + $0x88] sm:$0x3f]
        %v3301 = vmul.f32 %v3283, %v650
        %v3302 = vmul.f32 %v3284, %v654
        %v3303 = vmul.f32 %v3285, %v658
        %v3304 = vmul.f32 %v3286, %v662
        %v3305 = vmul.f32 %v3287, %v666
        %v3306 = vmul.f32 %v3288, %v670
        %v3307 = vmul.f32 %v3289, %v674
        %v3308 = vmul.f32 %v3290, %v678
        %v3309 = vmul.f32 %v3291, %v682
        %v3310 = vmul.f32 %v3292, %v650
        %v3311 = vmul.f32 %v3293, %v654
        %v3312 = vmul.f32 %v3294, %v658
        %v3313 = vmul.f32 %v3295, %v662
        %v3314 = vmul.f32 %v3296, %v666
        %v3315 = vmul.f32 %v3297, %v670
        %v3316 = vmul.f32 %v3298, %v674
        %v3317 = vmul.f32 %v3299, %v678
        %v3318 = vmul.f32 %v3300, %v682
        %v3319 = vadd.f32 %v3265, %v3301
        %v3320 = vadd.f32 %v3266, %v3302
        %v3321 = vadd.f32 %v3267, %v3303
        %v3322 = vadd.f32 %v3268, %v3304
        %v3323 = vadd.f32 %v3269, %v3305
        %v3324 = vadd.f32 %v3270, %v3306
        %v3325 = vadd.f32 %v3271, %v3307
        %v3326 = vadd.f32 %v3272, %v3308
        %v3327 = vadd.f32 %v3273, %v3309
        %v3328 = vadd.f32 %v3274, %v3310
        %v3329 = vadd.f32 %v3275, %v3311
        %v3330 = vadd.f32 %v3276, %v3312
        %v3331 = vadd.f32 %v3277, %v3313
        %v3332 = vadd.f32 %v3278, %v3314
        %v3333 = vadd.f32 %v3279, %v3315
        %v3334 = vadd.f32 %v3280, %v3316
        %v3335 = vadd.f32 %v3281, %v3317
        %v3336 = vadd.f32 %v3282, %v3318
        %v3337 = vld [vmem:[%s2876 + $0x48] sm:$0x7f]
        %v3338 = vld [vmem:[%s2876 + $0x50] sm:$0x7f]
        %v3339 = vld [vmem:[%s2876 + $0x58] sm:$0x7f]
        %v3340 = vld [vmem:[%s2876 + $0x60] sm:$0x7f]
        %v3341 = vld [vmem:[%s2876 + $0x68] sm:$0x7f]
        %v3342 = vld [vmem:[%s2876 + $0x70] sm:$0x7f]
        %v3343 = vld [vmem:[%s2876 + $0x78] sm:$0x7f]
        %v3344 = vld [vmem:[%s2876 + $0x80] sm:$0x7f]
        %v3345 = vld [vmem:[%s2876 + $0x88] sm:$0x7f]
        %v3346 = vmul.f32 %v3337, %v713
        %v3347 = vmul.f32 %v3338, %v717
        %v3348 = vmul.f32 %v3339, %v721
        %v3349 = vmul.f32 %v3340, %v725
        %v3350 = vmul.f32 %v3341, %v729
        %v3351 = vmul.f32 %v3342, %v733
        %v3352 = vmul.f32 %v3343, %v737
        %v3353 = vmul.f32 %v3344, %v741
        %v3354 = vmul.f32 %v3345, %v745
        %v3364 = vrot.slane %v3346, 1
        %v3365 = vrot.slane %v3347, 1
        %v3366 = vrot.slane %v3348, 1
        %v3367 = vrot.slane %v3349, 1
        %v3368 = vrot.slane %v3350, 1
        %v3369 = vrot.slane %v3351, 1
        %v3370 = vrot.slane %v3352, 1
        %v3371 = vrot.slane %v3353, 1
        %v3372 = vrot.slane %v3354, 1
        %v3382 = vadd.f32 %v3319, %v3364
        %v3383 = vadd.f32 %v3320, %v3365
        %v3384 = vadd.f32 %v3321, %v3366
        %v3385 = vadd.f32 %v3322, %v3367
        %v3386 = vadd.f32 %v3323, %v3368
        %v3387 = vadd.f32 %v3324, %v3369
        %v3388 = vadd.f32 %v3325, %v3370
        %v3389 = vadd.f32 %v3326, %v3371
        %v3390 = vadd.f32 %v3327, %v3372
        %v3391 = vadd.f32 %v3328, %v3364
        %v3392 = vadd.f32 %v3329, %v3365
        %v3393 = vadd.f32 %v3330, %v3366
        %v3394 = vadd.f32 %v3331, %v3367
        %v3395 = vadd.f32 %v3332, %v3368
        %v3396 = vadd.f32 %v3333, %v3369
        %v3397 = vadd.f32 %v3334, %v3370
        %v3398 = vadd.f32 %v3335, %v3371
        %v3399 = vadd.f32 %v3336, %v3372
        %v3400 = vld [vmem:[%s2876 + $0x48] sm:$0xfe]
        %v3401 = vld [vmem:[%s2876 + $0x50] sm:$0xfe]
        %v3402 = vld [vmem:[%s2876 + $0x58] sm:$0xfe]
        %v3403 = vld [vmem:[%s2876 + $0x60] sm:$0xfe]
        %v3404 = vld [vmem:[%s2876 + $0x68] sm:$0xfe]
        %v3405 = vld [vmem:[%s2876 + $0x70] sm:$0xfe]
        %v3406 = vld [vmem:[%s2876 + $0x78] sm:$0xfe]
        %v3407 = vld [vmem:[%s2876 + $0x80] sm:$0xfe]
        %v3408 = vld [vmem:[%s2876 + $0x88] sm:$0xfe]
        %v3409 = vmul.f32 %v3400, %v812
        %v3410 = vmul.f32 %v3401, %v816
        %v3411 = vmul.f32 %v3402, %v820
        %v3412 = vmul.f32 %v3403, %v824
        %v3413 = vmul.f32 %v3404, %v828
        %v3414 = vmul.f32 %v3405, %v832
        %v3415 = vmul.f32 %v3406, %v836
        %v3416 = vmul.f32 %v3407, %v840
        %v3417 = vmul.f32 %v3408, %v844
        %v3427 = vrot.slane %v3409, 2
        %v3428 = vrot.slane %v3410, 2
        %v3429 = vrot.slane %v3411, 2
        %v3430 = vrot.slane %v3412, 2
        %v3431 = vrot.slane %v3413, 2
        %v3432 = vrot.slane %v3414, 2
        %v3433 = vrot.slane %v3415, 2
        %v3434 = vrot.slane %v3416, 2
        %v3435 = vrot.slane %v3417, 2
        %v3445 = vadd.f32 %v3382, %v3427
        %v3446 = vadd.f32 %v3383, %v3428
        %v3447 = vadd.f32 %v3384, %v3429
        %v3448 = vadd.f32 %v3385, %v3430
        %v3449 = vadd.f32 %v3386, %v3431
        %v3450 = vadd.f32 %v3387, %v3432
        %v3451 = vadd.f32 %v3388, %v3433
        %v3452 = vadd.f32 %v3389, %v3434
        %v3453 = vadd.f32 %v3390, %v3435
        %v3454 = vadd.f32 %v3391, %v3427
        %v3455 = vadd.f32 %v3392, %v3428
        %v3456 = vadd.f32 %v3393, %v3429
        %v3457 = vadd.f32 %v3394, %v3430
        %v3458 = vadd.f32 %v3395, %v3431
        %v3459 = vadd.f32 %v3396, %v3432
        %v3460 = vadd.f32 %v3397, %v3433
        %v3461 = vadd.f32 %v3398, %v3434
        %v3462 = vadd.f32 %v3399, %v3435
        %s3463 = scalar_lea.vmem [#allocation2], 720
        %v3464 = vld [vmem:[%s3463] sm:$0x80]
        %v3465 = vld [vmem:[%s3463 + $0x8] sm:$0x80]
        %v3466 = vld [vmem:[%s3463 + $0x10] sm:$0x80]
        %v3467 = vld [vmem:[%s3463 + $0x18] sm:$0x80]
        %v3468 = vld [vmem:[%s3463 + $0x20] sm:$0x80]
        %v3469 = vld [vmem:[%s3463 + $0x28] sm:$0x80]
        %v3470 = vld [vmem:[%s3463 + $0x30] sm:$0x80]
        %v3471 = vld [vmem:[%s3463 + $0x38] sm:$0x80]
        %v3472 = vld [vmem:[%s3463 + $0x40] sm:$0x80]
        %v3473 = vld [vmem:[%s3463 + $0x48] sm:$0x3f]
        %v3474 = vld [vmem:[%s3463 + $0x50] sm:$0x3f]
        %v3475 = vld [vmem:[%s3463 + $0x58] sm:$0x3f]
        %v3476 = vld [vmem:[%s3463 + $0x60] sm:$0x3f]
        %v3477 = vld [vmem:[%s3463 + $0x68] sm:$0x3f]
        %v3478 = vld [vmem:[%s3463 + $0x70] sm:$0x3f]
        %v3479 = vld [vmem:[%s3463 + $0x78] sm:$0x3f]
        %v3480 = vld [vmem:[%s3463 + $0x80] sm:$0x3f]
        %v3481 = vld [vmem:[%s3463 + $0x88] sm:$0x3f]
        %v3482 = vmul.f32 %v3464, %v921
        %v3483 = vmul.f32 %v3465, %v925
        %v3484 = vmul.f32 %v3466, %v929
        %v3485 = vmul.f32 %v3467, %v933
        %v3486 = vmul.f32 %v3468, %v937
        %v3487 = vmul.f32 %v3469, %v941
        %v3488 = vmul.f32 %v3470, %v945
        %v3489 = vmul.f32 %v3471, %v949
        %v3490 = vmul.f32 %v3472, %v953
        %v3491 = vmul.f32 %v3473, %v921
        %v3492 = vmul.f32 %v3474, %v925
        %v3493 = vmul.f32 %v3475, %v929
        %v3494 = vmul.f32 %v3476, %v933
        %v3495 = vmul.f32 %v3477, %v937
        %v3496 = vmul.f32 %v3478, %v941
        %v3497 = vmul.f32 %v3479, %v945
        %v3498 = vmul.f32 %v3480, %v949
        %v3499 = vmul.f32 %v3481, %v953
        %v3500 = vadd.f32 %v3445, %v3482
        %v3501 = vadd.f32 %v3446, %v3483
        %v3502 = vadd.f32 %v3447, %v3484
        %v3503 = vadd.f32 %v3448, %v3485
        %v3504 = vadd.f32 %v3449, %v3486
        %v3505 = vadd.f32 %v3450, %v3487
        %v3506 = vadd.f32 %v3451, %v3488
        %v3507 = vadd.f32 %v3452, %v3489
        %v3508 = vadd.f32 %v3453, %v3490
        %v3509 = vadd.f32 %v3454, %v3491
        %v3510 = vadd.f32 %v3455, %v3492
        %v3511 = vadd.f32 %v3456, %v3493
        %v3512 = vadd.f32 %v3457, %v3494
        %v3513 = vadd.f32 %v3458, %v3495
        %v3514 = vadd.f32 %v3459, %v3496
        %v3515 = vadd.f32 %v3460, %v3497
        %v3516 = vadd.f32 %v3461, %v3498
        %v3517 = vadd.f32 %v3462, %v3499
        %v3518 = vld [vmem:[%s3463 + $0x48] sm:$0x7f]
        %v3519 = vld [vmem:[%s3463 + $0x50] sm:$0x7f]
        %v3520 = vld [vmem:[%s3463 + $0x58] sm:$0x7f]
        %v3521 = vld [vmem:[%s3463 + $0x60] sm:$0x7f]
        %v3522 = vld [vmem:[%s3463 + $0x68] sm:$0x7f]
        %v3523 = vld [vmem:[%s3463 + $0x70] sm:$0x7f]
        %v3524 = vld [vmem:[%s3463 + $0x78] sm:$0x7f]
        %v3525 = vld [vmem:[%s3463 + $0x80] sm:$0x7f]
        %v3526 = vld [vmem:[%s3463 + $0x88] sm:$0x7f]
        %v3527 = vmul.f32 %v3518, %v1002
        %v3528 = vmul.f32 %v3519, %v1006
        %v3529 = vmul.f32 %v3520, %v1010
        %v3530 = vmul.f32 %v3521, %v1014
        %v3531 = vmul.f32 %v3522, %v1018
        %v3532 = vmul.f32 %v3523, %v1022
        %v3533 = vmul.f32 %v3524, %v1026
        %v3534 = vmul.f32 %v3525, %v1030
        %v3535 = vmul.f32 %v3526, %v1034
        %v3545 = vrot.slane %v3527, 1
        %v3546 = vrot.slane %v3528, 1
        %v3547 = vrot.slane %v3529, 1
        %v3548 = vrot.slane %v3530, 1
        %v3549 = vrot.slane %v3531, 1
        %v3550 = vrot.slane %v3532, 1
        %v3551 = vrot.slane %v3533, 1
        %v3552 = vrot.slane %v3534, 1
        %v3553 = vrot.slane %v3535, 1
        %v3563 = vadd.f32 %v3500, %v3545
        %v3564 = vadd.f32 %v3501, %v3546
        %v3565 = vadd.f32 %v3502, %v3547
        %v3566 = vadd.f32 %v3503, %v3548
        %v3567 = vadd.f32 %v3504, %v3549
        %v3568 = vadd.f32 %v3505, %v3550
        %v3569 = vadd.f32 %v3506, %v3551
        %v3570 = vadd.f32 %v3507, %v3552
        %v3571 = vadd.f32 %v3508, %v3553
        %v3572 = vadd.f32 %v3509, %v3545
        %v3573 = vadd.f32 %v3510, %v3546
        %v3574 = vadd.f32 %v3511, %v3547
        %v3575 = vadd.f32 %v3512, %v3548
        %v3576 = vadd.f32 %v3513, %v3549
        %v3577 = vadd.f32 %v3514, %v3550
        %v3578 = vadd.f32 %v3515, %v3551
        %v3579 = vadd.f32 %v3516, %v3552
        %v3580 = vadd.f32 %v3517, %v3553
        %v3581 = vld [vmem:[%s3463 + $0x48] sm:$0xfe]
        %v3582 = vld [vmem:[%s3463 + $0x50] sm:$0xfe]
        %v3583 = vld [vmem:[%s3463 + $0x58] sm:$0xfe]
        %v3584 = vld [vmem:[%s3463 + $0x60] sm:$0xfe]
        %v3585 = vld [vmem:[%s3463 + $0x68] sm:$0xfe]
        %v3586 = vld [vmem:[%s3463 + $0x70] sm:$0xfe]
        %v3587 = vld [vmem:[%s3463 + $0x78] sm:$0xfe]
        %v3588 = vld [vmem:[%s3463 + $0x80] sm:$0xfe]
        %v3589 = vld [vmem:[%s3463 + $0x88] sm:$0xfe]
        %v3590 = vmul.f32 %v3581, %v1101
        %v3591 = vmul.f32 %v3582, %v1105
        %v3592 = vmul.f32 %v3583, %v1109
        %v3593 = vmul.f32 %v3584, %v1113
        %v3594 = vmul.f32 %v3585, %v1117
        %v3595 = vmul.f32 %v3586, %v1121
        %v3596 = vmul.f32 %v3587, %v1125
        %v3597 = vmul.f32 %v3588, %v1129
        %v3598 = vmul.f32 %v3589, %v1133
        %v3608 = vrot.slane %v3590, 2
        %v3609 = vrot.slane %v3591, 2
        %v3610 = vrot.slane %v3592, 2
        %v3611 = vrot.slane %v3593, 2
        %v3612 = vrot.slane %v3594, 2
        %v3613 = vrot.slane %v3595, 2
        %v3614 = vrot.slane %v3596, 2
        %v3615 = vrot.slane %v3597, 2
        %v3616 = vrot.slane %v3598, 2
        %v3626 = vadd.f32 %v3563, %v3608
        %v3627 = vadd.f32 %v3564, %v3609
        %v3628 = vadd.f32 %v3565, %v3610
        %v3629 = vadd.f32 %v3566, %v3611
        %v3630 = vadd.f32 %v3567, %v3612
        %v3631 = vadd.f32 %v3568, %v3613
        %v3632 = vadd.f32 %v3569, %v3614
        %v3633 = vadd.f32 %v3570, %v3615
        %v3634 = vadd.f32 %v3571, %v3616
        %v3635 = vadd.f32 %v3572, %v3608
        %v3636 = vadd.f32 %v3573, %v3609
        %v3637 = vadd.f32 %v3574, %v3610
        %v3638 = vadd.f32 %v3575, %v3611
        %v3639 = vadd.f32 %v3576, %v3612
        %v3640 = vadd.f32 %v3577, %v3613
        %v3641 = vadd.f32 %v3578, %v3614
        %v3642 = vadd.f32 %v3579, %v3615
        %v3643 = vadd.f32 %v3580, %v3616
        %v3662 = vrot.slane %v3626, 7
        %v3663 = vrot.slane %v3635, 7
        %v3664 = vsel %vm1206, %v3662, %v3663
        %v3665 = vrot.slane %v3627, 7
        %v3666 = vrot.slane %v3636, 7
        %v3667 = vsel %vm1206, %v3665, %v3666
        %v3668 = vrot.slane %v3628, 7
        %v3669 = vrot.slane %v3637, 7
        %v3670 = vsel %vm1206, %v3668, %v3669
        %v3671 = vrot.slane %v3629, 7
        %v3672 = vrot.slane %v3638, 7
        %v3673 = vsel %vm1206, %v3671, %v3672
        %v3674 = vrot.slane %v3630, 7
        %v3675 = vrot.slane %v3639, 7
        %v3676 = vsel %vm1206, %v3674, %v3675
        %v3677 = vrot.slane %v3631, 7
        %v3678 = vrot.slane %v3640, 7
        %v3679 = vsel %vm1206, %v3677, %v3678
        %v3680 = vrot.slane %v3632, 7
        %v3681 = vrot.slane %v3641, 7
        %v3682 = vsel %vm1206, %v3680, %v3681
        %v3683 = vrot.slane %v3633, 7
        %v3684 = vrot.slane %v3642, 7
        %v3685 = vsel %vm1206, %v3683, %v3684
        %v3686 = vrot.slane %v3634, 7
        %v3687 = vrot.slane %v3643, 7
        %v3688 = vsel %vm1206, %v3686, %v3687
        %s3698 = scalar_lea.vmem %s355, 288 [#allocation5]
        %3699 = vst [vmem:[%s3698] sm:$0x7f] %v3664
        %3700 = vst [vmem:[%s3698 + $0x8] sm:$0x7f] %v3667
        %3701 = vst [vmem:[%s3698 + $0x10] sm:$0x7f] %v3670
        %3702 = vst [vmem:[%s3698 + $0x18] sm:$0x7f] %v3673
        %3703 = vst [vmem:[%s3698 + $0x20] sm:$0x7f] %v3676
        %3704 = vst [vmem:[%s3698 + $0x28] sm:$0x7f] %v3679
        %3705 = vst [vmem:[%s3698 + $0x30] sm:$0x7f] %v3682
        %3706 = vst [vmem:[%s3698 + $0x38] sm:$0x7f] %v3685
        %3707 = vst [vmem:[%s3698 + $0x40] sm:$0x7f] %v3688
        %v3708 = vld [vmem:[%s2876] sm:$0x80]
        %v3709 = vld [vmem:[%s2876 + $0x8] sm:$0x80]
        %v3710 = vld [vmem:[%s2876 + $0x10] sm:$0x80]
        %v3711 = vld [vmem:[%s2876 + $0x18] sm:$0x80]
        %v3712 = vld [vmem:[%s2876 + $0x20] sm:$0x80]
        %v3713 = vld [vmem:[%s2876 + $0x28] sm:$0x80]
        %v3714 = vld [vmem:[%s2876 + $0x30] sm:$0x80]
        %v3715 = vld [vmem:[%s2876 + $0x38] sm:$0x80]
        %v3716 = vld [vmem:[%s2876 + $0x40] sm:$0x80]
        %v3717 = vld [vmem:[%s2876 + $0x48] sm:$0x3f]
        %v3718 = vld [vmem:[%s2876 + $0x50] sm:$0x3f]
        %v3719 = vld [vmem:[%s2876 + $0x58] sm:$0x3f]
        %v3720 = vld [vmem:[%s2876 + $0x60] sm:$0x3f]
        %v3721 = vld [vmem:[%s2876 + $0x68] sm:$0x3f]
        %v3722 = vld [vmem:[%s2876 + $0x70] sm:$0x3f]
        %v3723 = vld [vmem:[%s2876 + $0x78] sm:$0x3f]
        %v3724 = vld [vmem:[%s2876 + $0x80] sm:$0x3f]
        %v3725 = vld [vmem:[%s2876 + $0x88] sm:$0x3f]
        %v3726 = vmul.f32 %v3708, %v1273
        %v3727 = vmul.f32 %v3709, %v1277
        %v3728 = vmul.f32 %v3710, %v1281
        %v3729 = vmul.f32 %v3711, %v1285
        %v3730 = vmul.f32 %v3712, %v1289
        %v3731 = vmul.f32 %v3713, %v1293
        %v3732 = vmul.f32 %v3714, %v1297
        %v3733 = vmul.f32 %v3715, %v1301
        %v3734 = vmul.f32 %v3716, %v1305
        %v3735 = vmul.f32 %v3717, %v1273
        %v3736 = vmul.f32 %v3718, %v1277
        %v3737 = vmul.f32 %v3719, %v1281
        %v3738 = vmul.f32 %v3720, %v1285
        %v3739 = vmul.f32 %v3721, %v1289
        %v3740 = vmul.f32 %v3722, %v1293
        %v3741 = vmul.f32 %v3723, %v1297
        %v3742 = vmul.f32 %v3724, %v1301
        %v3743 = vmul.f32 %v3725, %v1305
        %v3744 = vld [vmem:[%s2876 + $0x48] sm:$0x7f]
        %v3745 = vld [vmem:[%s2876 + $0x50] sm:$0x7f]
        %v3746 = vld [vmem:[%s2876 + $0x58] sm:$0x7f]
        %v3747 = vld [vmem:[%s2876 + $0x60] sm:$0x7f]
        %v3748 = vld [vmem:[%s2876 + $0x68] sm:$0x7f]
        %v3749 = vld [vmem:[%s2876 + $0x70] sm:$0x7f]
        %v3750 = vld [vmem:[%s2876 + $0x78] sm:$0x7f]
        %v3751 = vld [vmem:[%s2876 + $0x80] sm:$0x7f]
        %v3752 = vld [vmem:[%s2876 + $0x88] sm:$0x7f]
        %v3753 = vmul.f32 %v3744, %v1336
        %v3754 = vmul.f32 %v3745, %v1340
        %v3755 = vmul.f32 %v3746, %v1344
        %v3756 = vmul.f32 %v3747, %v1348
        %v3757 = vmul.f32 %v3748, %v1352
        %v3758 = vmul.f32 %v3749, %v1356
        %v3759 = vmul.f32 %v3750, %v1360
        %v3760 = vmul.f32 %v3751, %v1364
        %v3761 = vmul.f32 %v3752, %v1368
        %v3771 = vrot.slane %v3753, 1
        %v3772 = vrot.slane %v3754, 1
        %v3773 = vrot.slane %v3755, 1
        %v3774 = vrot.slane %v3756, 1
        %v3775 = vrot.slane %v3757, 1
        %v3776 = vrot.slane %v3758, 1
        %v3777 = vrot.slane %v3759, 1
        %v3778 = vrot.slane %v3760, 1
        %v3779 = vrot.slane %v3761, 1
        %v3789 = vadd.f32 %v3726, %v3771
        %v3790 = vadd.f32 %v3727, %v3772
        %v3791 = vadd.f32 %v3728, %v3773
        %v3792 = vadd.f32 %v3729, %v3774
        %v3793 = vadd.f32 %v3730, %v3775
        %v3794 = vadd.f32 %v3731, %v3776
        %v3795 = vadd.f32 %v3732, %v3777
        %v3796 = vadd.f32 %v3733, %v3778
        %v3797 = vadd.f32 %v3734, %v3779
        %v3798 = vadd.f32 %v3735, %v3771
        %v3799 = vadd.f32 %v3736, %v3772
        %v3800 = vadd.f32 %v3737, %v3773
        %v3801 = vadd.f32 %v3738, %v3774
        %v3802 = vadd.f32 %v3739, %v3775
        %v3803 = vadd.f32 %v3740, %v3776
        %v3804 = vadd.f32 %v3741, %v3777
        %v3805 = vadd.f32 %v3742, %v3778
        %v3806 = vadd.f32 %v3743, %v3779
        %v3807 = vld [vmem:[%s2876 + $0x48] sm:$0xfe]
        %v3808 = vld [vmem:[%s2876 + $0x50] sm:$0xfe]
        %v3809 = vld [vmem:[%s2876 + $0x58] sm:$0xfe]
        %v3810 = vld [vmem:[%s2876 + $0x60] sm:$0xfe]
        %v3811 = vld [vmem:[%s2876 + $0x68] sm:$0xfe]
        %v3812 = vld [vmem:[%s2876 + $0x70] sm:$0xfe]
        %v3813 = vld [vmem:[%s2876 + $0x78] sm:$0xfe]
        %v3814 = vld [vmem:[%s2876 + $0x80] sm:$0xfe]
        %v3815 = vld [vmem:[%s2876 + $0x88] sm:$0xfe]
        %v3816 = vmul.f32 %v3807, %v1435
        %v3817 = vmul.f32 %v3808, %v1439
        %v3818 = vmul.f32 %v3809, %v1443
        %v3819 = vmul.f32 %v3810, %v1447
        %v3820 = vmul.f32 %v3811, %v1451
        %v3821 = vmul.f32 %v3812, %v1455
        %v3822 = vmul.f32 %v3813, %v1459
        %v3823 = vmul.f32 %v3814, %v1463
        %v3824 = vmul.f32 %v3815, %v1467
        %v3834 = vrot.slane %v3816, 2
        %v3835 = vrot.slane %v3817, 2
        %v3836 = vrot.slane %v3818, 2
        %v3837 = vrot.slane %v3819, 2
        %v3838 = vrot.slane %v3820, 2
        %v3839 = vrot.slane %v3821, 2
        %v3840 = vrot.slane %v3822, 2
        %v3841 = vrot.slane %v3823, 2
        %v3842 = vrot.slane %v3824, 2
        %v3852 = vadd.f32 %v3789, %v3834
        %v3853 = vadd.f32 %v3790, %v3835
        %v3854 = vadd.f32 %v3791, %v3836
        %v3855 = vadd.f32 %v3792, %v3837
        %v3856 = vadd.f32 %v3793, %v3838
        %v3857 = vadd.f32 %v3794, %v3839
        %v3858 = vadd.f32 %v3795, %v3840
        %v3859 = vadd.f32 %v3796, %v3841
        %v3860 = vadd.f32 %v3797, %v3842
        %v3861 = vadd.f32 %v3798, %v3834
        %v3862 = vadd.f32 %v3799, %v3835
        %v3863 = vadd.f32 %v3800, %v3836
        %v3864 = vadd.f32 %v3801, %v3837
        %v3865 = vadd.f32 %v3802, %v3838
        %v3866 = vadd.f32 %v3803, %v3839
        %v3867 = vadd.f32 %v3804, %v3840
        %v3868 = vadd.f32 %v3805, %v3841
        %v3869 = vadd.f32 %v3806, %v3842
        %v3870 = vld [vmem:[%s3463] sm:$0x80]
        %v3871 = vld [vmem:[%s3463 + $0x8] sm:$0x80]
        %v3872 = vld [vmem:[%s3463 + $0x10] sm:$0x80]
        %v3873 = vld [vmem:[%s3463 + $0x18] sm:$0x80]
        %v3874 = vld [vmem:[%s3463 + $0x20] sm:$0x80]
        %v3875 = vld [vmem:[%s3463 + $0x28] sm:$0x80]
        %v3876 = vld [vmem:[%s3463 + $0x30] sm:$0x80]
        %v3877 = vld [vmem:[%s3463 + $0x38] sm:$0x80]
        %v3878 = vld [vmem:[%s3463 + $0x40] sm:$0x80]
        %v3879 = vld [vmem:[%s3463 + $0x48] sm:$0x3f]
        %v3880 = vld [vmem:[%s3463 + $0x50] sm:$0x3f]
        %v3881 = vld [vmem:[%s3463 + $0x58] sm:$0x3f]
        %v3882 = vld [vmem:[%s3463 + $0x60] sm:$0x3f]
        %v3883 = vld [vmem:[%s3463 + $0x68] sm:$0x3f]
        %v3884 = vld [vmem:[%s3463 + $0x70] sm:$0x3f]
        %v3885 = vld [vmem:[%s3463 + $0x78] sm:$0x3f]
        %v3886 = vld [vmem:[%s3463 + $0x80] sm:$0x3f]
        %v3887 = vld [vmem:[%s3463 + $0x88] sm:$0x3f]
        %v3888 = vmul.f32 %v3870, %v650
        %v3889 = vmul.f32 %v3871, %v654
        %v3890 = vmul.f32 %v3872, %v658
        %v3891 = vmul.f32 %v3873, %v662
        %v3892 = vmul.f32 %v3874, %v666
        %v3893 = vmul.f32 %v3875, %v670
        %v3894 = vmul.f32 %v3876, %v674
        %v3895 = vmul.f32 %v3877, %v678
        %v3896 = vmul.f32 %v3878, %v682
        %v3897 = vmul.f32 %v3879, %v650
        %v3898 = vmul.f32 %v3880, %v654
        %v3899 = vmul.f32 %v3881, %v658
        %v3900 = vmul.f32 %v3882, %v662
        %v3901 = vmul.f32 %v3883, %v666
        %v3902 = vmul.f32 %v3884, %v670
        %v3903 = vmul.f32 %v3885, %v674
        %v3904 = vmul.f32 %v3886, %v678
        %v3905 = vmul.f32 %v3887, %v682
        %v3906 = vadd.f32 %v3852, %v3888
        %v3907 = vadd.f32 %v3853, %v3889
        %v3908 = vadd.f32 %v3854, %v3890
        %v3909 = vadd.f32 %v3855, %v3891
        %v3910 = vadd.f32 %v3856, %v3892
        %v3911 = vadd.f32 %v3857, %v3893
        %v3912 = vadd.f32 %v3858, %v3894
        %v3913 = vadd.f32 %v3859, %v3895
        %v3914 = vadd.f32 %v3860, %v3896
        %v3915 = vadd.f32 %v3861, %v3897
        %v3916 = vadd.f32 %v3862, %v3898
        %v3917 = vadd.f32 %v3863, %v3899
        %v3918 = vadd.f32 %v3864, %v3900
        %v3919 = vadd.f32 %v3865, %v3901
        %v3920 = vadd.f32 %v3866, %v3902
        %v3921 = vadd.f32 %v3867, %v3903
        %v3922 = vadd.f32 %v3868, %v3904
        %v3923 = vadd.f32 %v3869, %v3905
        %v3924 = vld [vmem:[%s3463 + $0x48] sm:$0x7f]
        %v3925 = vld [vmem:[%s3463 + $0x50] sm:$0x7f]
        %v3926 = vld [vmem:[%s3463 + $0x58] sm:$0x7f]
        %v3927 = vld [vmem:[%s3463 + $0x60] sm:$0x7f]
        %v3928 = vld [vmem:[%s3463 + $0x68] sm:$0x7f]
        %v3929 = vld [vmem:[%s3463 + $0x70] sm:$0x7f]
        %v3930 = vld [vmem:[%s3463 + $0x78] sm:$0x7f]
        %v3931 = vld [vmem:[%s3463 + $0x80] sm:$0x7f]
        %v3932 = vld [vmem:[%s3463 + $0x88] sm:$0x7f]
        %v3933 = vmul.f32 %v3924, %v713
        %v3934 = vmul.f32 %v3925, %v717
        %v3935 = vmul.f32 %v3926, %v721
        %v3936 = vmul.f32 %v3927, %v725
        %v3937 = vmul.f32 %v3928, %v729
        %v3938 = vmul.f32 %v3929, %v733
        %v3939 = vmul.f32 %v3930, %v737
        %v3940 = vmul.f32 %v3931, %v741
        %v3941 = vmul.f32 %v3932, %v745
        %v3951 = vrot.slane %v3933, 1
        %v3952 = vrot.slane %v3934, 1
        %v3953 = vrot.slane %v3935, 1
        %v3954 = vrot.slane %v3936, 1
        %v3955 = vrot.slane %v3937, 1
        %v3956 = vrot.slane %v3938, 1
        %v3957 = vrot.slane %v3939, 1
        %v3958 = vrot.slane %v3940, 1
        %v3959 = vrot.slane %v3941, 1
        %v3969 = vadd.f32 %v3906, %v3951
        %v3970 = vadd.f32 %v3907, %v3952
        %v3971 = vadd.f32 %v3908, %v3953
        %v3972 = vadd.f32 %v3909, %v3954
        %v3973 = vadd.f32 %v3910, %v3955
        %v3974 = vadd.f32 %v3911, %v3956
        %v3975 = vadd.f32 %v3912, %v3957
        %v3976 = vadd.f32 %v3913, %v3958
        %v3977 = vadd.f32 %v3914, %v3959
        %v3978 = vadd.f32 %v3915, %v3951
        %v3979 = vadd.f32 %v3916, %v3952
        %v3980 = vadd.f32 %v3917, %v3953
        %v3981 = vadd.f32 %v3918, %v3954
        %v3982 = vadd.f32 %v3919, %v3955
        %v3983 = vadd.f32 %v3920, %v3956
        %v3984 = vadd.f32 %v3921, %v3957
        %v3985 = vadd.f32 %v3922, %v3958
        %v3986 = vadd.f32 %v3923, %v3959
        %v3987 = vld [vmem:[%s3463 + $0x48] sm:$0xfe]
        %v3988 = vld [vmem:[%s3463 + $0x50] sm:$0xfe]
        %v3989 = vld [vmem:[%s3463 + $0x58] sm:$0xfe]
        %v3990 = vld [vmem:[%s3463 + $0x60] sm:$0xfe]
        %v3991 = vld [vmem:[%s3463 + $0x68] sm:$0xfe]
        %v3992 = vld [vmem:[%s3463 + $0x70] sm:$0xfe]
        %v3993 = vld [vmem:[%s3463 + $0x78] sm:$0xfe]
        %v3994 = vld [vmem:[%s3463 + $0x80] sm:$0xfe]
        %v3995 = vld [vmem:[%s3463 + $0x88] sm:$0xfe]
        %v3996 = vmul.f32 %v3987, %v812
        %v3997 = vmul.f32 %v3988, %v816
        %v3998 = vmul.f32 %v3989, %v820
        %v3999 = vmul.f32 %v3990, %v824
        %v4000 = vmul.f32 %v3991, %v828
        %v4001 = vmul.f32 %v3992, %v832
        %v4002 = vmul.f32 %v3993, %v836
        %v4003 = vmul.f32 %v3994, %v840
        %v4004 = vmul.f32 %v3995, %v844
        %v4014 = vrot.slane %v3996, 2
        %v4015 = vrot.slane %v3997, 2
        %v4016 = vrot.slane %v3998, 2
        %v4017 = vrot.slane %v3999, 2
        %v4018 = vrot.slane %v4000, 2
        %v4019 = vrot.slane %v4001, 2
        %v4020 = vrot.slane %v4002, 2
        %v4021 = vrot.slane %v4003, 2
        %v4022 = vrot.slane %v4004, 2
        %v4032 = vadd.f32 %v3969, %v4014
        %v4033 = vadd.f32 %v3970, %v4015
        %v4034 = vadd.f32 %v3971, %v4016
        %v4035 = vadd.f32 %v3972, %v4017
        %v4036 = vadd.f32 %v3973, %v4018
        %v4037 = vadd.f32 %v3974, %v4019
        %v4038 = vadd.f32 %v3975, %v4020
        %v4039 = vadd.f32 %v3976, %v4021
        %v4040 = vadd.f32 %v3977, %v4022
        %v4041 = vadd.f32 %v3978, %v4014
        %v4042 = vadd.f32 %v3979, %v4015
        %v4043 = vadd.f32 %v3980, %v4016
        %v4044 = vadd.f32 %v3981, %v4017
        %v4045 = vadd.f32 %v3982, %v4018
        %v4046 = vadd.f32 %v3983, %v4019
        %v4047 = vadd.f32 %v3984, %v4020
        %v4048 = vadd.f32 %v3985, %v4021
        %v4049 = vadd.f32 %v3986, %v4022
        %s4050 = scalar_lea.vmem [#allocation2], 864
        %v4051 = vld [vmem:[%s4050] sm:$0x80]
        %v4052 = vld [vmem:[%s4050 + $0x8] sm:$0x80]
        %v4053 = vld [vmem:[%s4050 + $0x10] sm:$0x80]
        %v4054 = vld [vmem:[%s4050 + $0x18] sm:$0x80]
        %v4055 = vld [vmem:[%s4050 + $0x20] sm:$0x80]
        %v4056 = vld [vmem:[%s4050 + $0x28] sm:$0x80]
        %v4057 = vld [vmem:[%s4050 + $0x30] sm:$0x80]
        %v4058 = vld [vmem:[%s4050 + $0x38] sm:$0x80]
        %v4059 = vld [vmem:[%s4050 + $0x40] sm:$0x80]
        %v4060 = vld [vmem:[%s4050 + $0x48] sm:$0x3f]
        %v4061 = vld [vmem:[%s4050 + $0x50] sm:$0x3f]
        %v4062 = vld [vmem:[%s4050 + $0x58] sm:$0x3f]
        %v4063 = vld [vmem:[%s4050 + $0x60] sm:$0x3f]
        %v4064 = vld [vmem:[%s4050 + $0x68] sm:$0x3f]
        %v4065 = vld [vmem:[%s4050 + $0x70] sm:$0x3f]
        %v4066 = vld [vmem:[%s4050 + $0x78] sm:$0x3f]
        %v4067 = vld [vmem:[%s4050 + $0x80] sm:$0x3f]
        %v4068 = vld [vmem:[%s4050 + $0x88] sm:$0x3f]
        %v4069 = vmul.f32 %v4051, %v921
        %v4070 = vmul.f32 %v4052, %v925
        %v4071 = vmul.f32 %v4053, %v929
        %v4072 = vmul.f32 %v4054, %v933
        %v4073 = vmul.f32 %v4055, %v937
        %v4074 = vmul.f32 %v4056, %v941
        %v4075 = vmul.f32 %v4057, %v945
        %v4076 = vmul.f32 %v4058, %v949
        %v4077 = vmul.f32 %v4059, %v953
        %v4078 = vmul.f32 %v4060, %v921
        %v4079 = vmul.f32 %v4061, %v925
        %v4080 = vmul.f32 %v4062, %v929
        %v4081 = vmul.f32 %v4063, %v933
        %v4082 = vmul.f32 %v4064, %v937
        %v4083 = vmul.f32 %v4065, %v941
        %v4084 = vmul.f32 %v4066, %v945
        %v4085 = vmul.f32 %v4067, %v949
        %v4086 = vmul.f32 %v4068, %v953
        %v4087 = vadd.f32 %v4032, %v4069
        %v4088 = vadd.f32 %v4033, %v4070
        %v4089 = vadd.f32 %v4034, %v4071
        %v4090 = vadd.f32 %v4035, %v4072
        %v4091 = vadd.f32 %v4036, %v4073
        %v4092 = vadd.f32 %v4037, %v4074
        %v4093 = vadd.f32 %v4038, %v4075
        %v4094 = vadd.f32 %v4039, %v4076
        %v4095 = vadd.f32 %v4040, %v4077
        %v4096 = vadd.f32 %v4041, %v4078
        %v4097 = vadd.f32 %v4042, %v4079
        %v4098 = vadd.f32 %v4043, %v4080
        %v4099 = vadd.f32 %v4044, %v4081
        %v4100 = vadd.f32 %v4045, %v4082
        %v4101 = vadd.f32 %v4046, %v4083
        %v4102 = vadd.f32 %v4047, %v4084
        %v4103 = vadd.f32 %v4048, %v4085
        %v4104 = vadd.f32 %v4049, %v4086
        %v4105 = vld [vmem:[%s4050 + $0x48] sm:$0x7f]
        %v4106 = vld [vmem:[%s4050 + $0x50] sm:$0x7f]
        %v4107 = vld [vmem:[%s4050 + $0x58] sm:$0x7f]
        %v4108 = vld [vmem:[%s4050 + $0x60] sm:$0x7f]
        %v4109 = vld [vmem:[%s4050 + $0x68] sm:$0x7f]
        %v4110 = vld [vmem:[%s4050 + $0x70] sm:$0x7f]
        %v4111 = vld [vmem:[%s4050 + $0x78] sm:$0x7f]
        %v4112 = vld [vmem:[%s4050 + $0x80] sm:$0x7f]
        %v4113 = vld [vmem:[%s4050 + $0x88] sm:$0x7f]
        %v4114 = vmul.f32 %v4105, %v1002
        %v4115 = vmul.f32 %v4106, %v1006
        %v4116 = vmul.f32 %v4107, %v1010
        %v4117 = vmul.f32 %v4108, %v1014
        %v4118 = vmul.f32 %v4109, %v1018
        %v4119 = vmul.f32 %v4110, %v1022
        %v4120 = vmul.f32 %v4111, %v1026
        %v4121 = vmul.f32 %v4112, %v1030
        %v4122 = vmul.f32 %v4113, %v1034
        %v4132 = vrot.slane %v4114, 1
        %v4133 = vrot.slane %v4115, 1
        %v4134 = vrot.slane %v4116, 1
        %v4135 = vrot.slane %v4117, 1
        %v4136 = vrot.slane %v4118, 1
        %v4137 = vrot.slane %v4119, 1
        %v4138 = vrot.slane %v4120, 1
        %v4139 = vrot.slane %v4121, 1
        %v4140 = vrot.slane %v4122, 1
        %v4150 = vadd.f32 %v4087, %v4132
        %v4151 = vadd.f32 %v4088, %v4133
        %v4152 = vadd.f32 %v4089, %v4134
        %v4153 = vadd.f32 %v4090, %v4135
        %v4154 = vadd.f32 %v4091, %v4136
        %v4155 = vadd.f32 %v4092, %v4137
        %v4156 = vadd.f32 %v4093, %v4138
        %v4157 = vadd.f32 %v4094, %v4139
        %v4158 = vadd.f32 %v4095, %v4140
        %v4159 = vadd.f32 %v4096, %v4132
        %v4160 = vadd.f32 %v4097, %v4133
        %v4161 = vadd.f32 %v4098, %v4134
        %v4162 = vadd.f32 %v4099, %v4135
        %v4163 = vadd.f32 %v4100, %v4136
        %v4164 = vadd.f32 %v4101, %v4137
        %v4165 = vadd.f32 %v4102, %v4138
        %v4166 = vadd.f32 %v4103, %v4139
        %v4167 = vadd.f32 %v4104, %v4140
        %v4168 = vld [vmem:[%s4050 + $0x48] sm:$0xfe]
        %v4169 = vld [vmem:[%s4050 + $0x50] sm:$0xfe]
        %v4170 = vld [vmem:[%s4050 + $0x58] sm:$0xfe]
        %v4171 = vld [vmem:[%s4050 + $0x60] sm:$0xfe]
        %v4172 = vld [vmem:[%s4050 + $0x68] sm:$0xfe]
        %v4173 = vld [vmem:[%s4050 + $0x70] sm:$0xfe]
        %v4174 = vld [vmem:[%s4050 + $0x78] sm:$0xfe]
        %v4175 = vld [vmem:[%s4050 + $0x80] sm:$0xfe]
        %v4176 = vld [vmem:[%s4050 + $0x88] sm:$0xfe]
        %v4177 = vmul.f32 %v4168, %v1101
        %v4178 = vmul.f32 %v4169, %v1105
        %v4179 = vmul.f32 %v4170, %v1109
        %v4180 = vmul.f32 %v4171, %v1113
        %v4181 = vmul.f32 %v4172, %v1117
        %v4182 = vmul.f32 %v4173, %v1121
        %v4183 = vmul.f32 %v4174, %v1125
        %v4184 = vmul.f32 %v4175, %v1129
        %v4185 = vmul.f32 %v4176, %v1133
        %v4195 = vrot.slane %v4177, 2
        %v4196 = vrot.slane %v4178, 2
        %v4197 = vrot.slane %v4179, 2
        %v4198 = vrot.slane %v4180, 2
        %v4199 = vrot.slane %v4181, 2
        %v4200 = vrot.slane %v4182, 2
        %v4201 = vrot.slane %v4183, 2
        %v4202 = vrot.slane %v4184, 2
        %v4203 = vrot.slane %v4185, 2
        %v4213 = vadd.f32 %v4150, %v4195
        %v4214 = vadd.f32 %v4151, %v4196
        %v4215 = vadd.f32 %v4152, %v4197
        %v4216 = vadd.f32 %v4153, %v4198
        %v4217 = vadd.f32 %v4154, %v4199
        %v4218 = vadd.f32 %v4155, %v4200
        %v4219 = vadd.f32 %v4156, %v4201
        %v4220 = vadd.f32 %v4157, %v4202
        %v4221 = vadd.f32 %v4158, %v4203
        %v4222 = vadd.f32 %v4159, %v4195
        %v4223 = vadd.f32 %v4160, %v4196
        %v4224 = vadd.f32 %v4161, %v4197
        %v4225 = vadd.f32 %v4162, %v4198
        %v4226 = vadd.f32 %v4163, %v4199
        %v4227 = vadd.f32 %v4164, %v4200
        %v4228 = vadd.f32 %v4165, %v4201
        %v4229 = vadd.f32 %v4166, %v4202
        %v4230 = vadd.f32 %v4167, %v4203
        %v4249 = vrot.slane %v4213, 7
        %v4250 = vrot.slane %v4222, 7
        %v4251 = vsel %vm1206, %v4249, %v4250
        %v4252 = vrot.slane %v4214, 7
        %v4253 = vrot.slane %v4223, 7
        %v4254 = vsel %vm1206, %v4252, %v4253
        %v4255 = vrot.slane %v4215, 7
        %v4256 = vrot.slane %v4224, 7
        %v4257 = vsel %vm1206, %v4255, %v4256
        %v4258 = vrot.slane %v4216, 7
        %v4259 = vrot.slane %v4225, 7
        %v4260 = vsel %vm1206, %v4258, %v4259
        %v4261 = vrot.slane %v4217, 7
        %v4262 = vrot.slane %v4226, 7
        %v4263 = vsel %vm1206, %v4261, %v4262
        %v4264 = vrot.slane %v4218, 7
        %v4265 = vrot.slane %v4227, 7
        %v4266 = vsel %vm1206, %v4264, %v4265
        %v4267 = vrot.slane %v4219, 7
        %v4268 = vrot.slane %v4228, 7
        %v4269 = vsel %vm1206, %v4267, %v4268
        %v4270 = vrot.slane %v4220, 7
        %v4271 = vrot.slane %v4229, 7
        %v4272 = vsel %vm1206, %v4270, %v4271
        %v4273 = vrot.slane %v4221, 7
        %v4274 = vrot.slane %v4230, 7
        %v4275 = vsel %vm1206, %v4273, %v4274
        %s4285 = scalar_lea.vmem %s355, 360 [#allocation5]
        %4286 = vst [vmem:[%s4285] sm:$0x7f] %v4251
        %4287 = vst [vmem:[%s4285 + $0x8] sm:$0x7f] %v4254
        %4288 = vst [vmem:[%s4285 + $0x10] sm:$0x7f] %v4257
        %4289 = vst [vmem:[%s4285 + $0x18] sm:$0x7f] %v4260
        %4290 = vst [vmem:[%s4285 + $0x20] sm:$0x7f] %v4263
        %4291 = vst [vmem:[%s4285 + $0x28] sm:$0x7f] %v4266
        %4292 = vst [vmem:[%s4285 + $0x30] sm:$0x7f] %v4269
        %4293 = vst [vmem:[%s4285 + $0x38] sm:$0x7f] %v4272
        %4294 = vst [vmem:[%s4285 + $0x40] sm:$0x7f] %v4275
        %v4295 = vld [vmem:[%s3463] sm:$0x80]
        %v4296 = vld [vmem:[%s3463 + $0x8] sm:$0x80]
        %v4297 = vld [vmem:[%s3463 + $0x10] sm:$0x80]
        %v4298 = vld [vmem:[%s3463 + $0x18] sm:$0x80]
        %v4299 = vld [vmem:[%s3463 + $0x20] sm:$0x80]
        %v4300 = vld [vmem:[%s3463 + $0x28] sm:$0x80]
        %v4301 = vld [vmem:[%s3463 + $0x30] sm:$0x80]
        %v4302 = vld [vmem:[%s3463 + $0x38] sm:$0x80]
        %v4303 = vld [vmem:[%s3463 + $0x40] sm:$0x80]
        %v4304 = vld [vmem:[%s3463 + $0x48] sm:$0x3f]
        %v4305 = vld [vmem:[%s3463 + $0x50] sm:$0x3f]
        %v4306 = vld [vmem:[%s3463 + $0x58] sm:$0x3f]
        %v4307 = vld [vmem:[%s3463 + $0x60] sm:$0x3f]
        %v4308 = vld [vmem:[%s3463 + $0x68] sm:$0x3f]
        %v4309 = vld [vmem:[%s3463 + $0x70] sm:$0x3f]
        %v4310 = vld [vmem:[%s3463 + $0x78] sm:$0x3f]
        %v4311 = vld [vmem:[%s3463 + $0x80] sm:$0x3f]
        %v4312 = vld [vmem:[%s3463 + $0x88] sm:$0x3f]
        %v4313 = vmul.f32 %v4295, %v1273
        %v4314 = vmul.f32 %v4296, %v1277
        %v4315 = vmul.f32 %v4297, %v1281
        %v4316 = vmul.f32 %v4298, %v1285
        %v4317 = vmul.f32 %v4299, %v1289
        %v4318 = vmul.f32 %v4300, %v1293
        %v4319 = vmul.f32 %v4301, %v1297
        %v4320 = vmul.f32 %v4302, %v1301
        %v4321 = vmul.f32 %v4303, %v1305
        %v4322 = vmul.f32 %v4304, %v1273
        %v4323 = vmul.f32 %v4305, %v1277
        %v4324 = vmul.f32 %v4306, %v1281
        %v4325 = vmul.f32 %v4307, %v1285
        %v4326 = vmul.f32 %v4308, %v1289
        %v4327 = vmul.f32 %v4309, %v1293
        %v4328 = vmul.f32 %v4310, %v1297
        %v4329 = vmul.f32 %v4311, %v1301
        %v4330 = vmul.f32 %v4312, %v1305
        %v4331 = vld [vmem:[%s3463 + $0x48] sm:$0x7f]
        %v4332 = vld [vmem:[%s3463 + $0x50] sm:$0x7f]
        %v4333 = vld [vmem:[%s3463 + $0x58] sm:$0x7f]
        %v4334 = vld [vmem:[%s3463 + $0x60] sm:$0x7f]
        %v4335 = vld [vmem:[%s3463 + $0x68] sm:$0x7f]
        %v4336 = vld [vmem:[%s3463 + $0x70] sm:$0x7f]
        %v4337 = vld [vmem:[%s3463 + $0x78] sm:$0x7f]
        %v4338 = vld [vmem:[%s3463 + $0x80] sm:$0x7f]
        %v4339 = vld [vmem:[%s3463 + $0x88] sm:$0x7f]
        %v4340 = vmul.f32 %v4331, %v1336
        %v4341 = vmul.f32 %v4332, %v1340
        %v4342 = vmul.f32 %v4333, %v1344
        %v4343 = vmul.f32 %v4334, %v1348
        %v4344 = vmul.f32 %v4335, %v1352
        %v4345 = vmul.f32 %v4336, %v1356
        %v4346 = vmul.f32 %v4337, %v1360
        %v4347 = vmul.f32 %v4338, %v1364
        %v4348 = vmul.f32 %v4339, %v1368
        %v4358 = vrot.slane %v4340, 1
        %v4359 = vrot.slane %v4341, 1
        %v4360 = vrot.slane %v4342, 1
        %v4361 = vrot.slane %v4343, 1
        %v4362 = vrot.slane %v4344, 1
        %v4363 = vrot.slane %v4345, 1
        %v4364 = vrot.slane %v4346, 1
        %v4365 = vrot.slane %v4347, 1
        %v4366 = vrot.slane %v4348, 1
        %v4376 = vadd.f32 %v4313, %v4358
        %v4377 = vadd.f32 %v4314, %v4359
        %v4378 = vadd.f32 %v4315, %v4360
        %v4379 = vadd.f32 %v4316, %v4361
        %v4380 = vadd.f32 %v4317, %v4362
        %v4381 = vadd.f32 %v4318, %v4363
        %v4382 = vadd.f32 %v4319, %v4364
        %v4383 = vadd.f32 %v4320, %v4365
        %v4384 = vadd.f32 %v4321, %v4366
        %v4385 = vadd.f32 %v4322, %v4358
        %v4386 = vadd.f32 %v4323, %v4359
        %v4387 = vadd.f32 %v4324, %v4360
        %v4388 = vadd.f32 %v4325, %v4361
        %v4389 = vadd.f32 %v4326, %v4362
        %v4390 = vadd.f32 %v4327, %v4363
        %v4391 = vadd.f32 %v4328, %v4364
        %v4392 = vadd.f32 %v4329, %v4365
        %v4393 = vadd.f32 %v4330, %v4366
        %v4394 = vld [vmem:[%s3463 + $0x48] sm:$0xfe]
        %v4395 = vld [vmem:[%s3463 + $0x50] sm:$0xfe]
        %v4396 = vld [vmem:[%s3463 + $0x58] sm:$0xfe]
        %v4397 = vld [vmem:[%s3463 + $0x60] sm:$0xfe]
        %v4398 = vld [vmem:[%s3463 + $0x68] sm:$0xfe]
        %v4399 = vld [vmem:[%s3463 + $0x70] sm:$0xfe]
        %v4400 = vld [vmem:[%s3463 + $0x78] sm:$0xfe]
        %v4401 = vld [vmem:[%s3463 + $0x80] sm:$0xfe]
        %v4402 = vld [vmem:[%s3463 + $0x88] sm:$0xfe]
        %v4403 = vmul.f32 %v4394, %v1435
        %v4404 = vmul.f32 %v4395, %v1439
        %v4405 = vmul.f32 %v4396, %v1443
        %v4406 = vmul.f32 %v4397, %v1447
        %v4407 = vmul.f32 %v4398, %v1451
        %v4408 = vmul.f32 %v4399, %v1455
        %v4409 = vmul.f32 %v4400, %v1459
        %v4410 = vmul.f32 %v4401, %v1463
        %v4411 = vmul.f32 %v4402, %v1467
        %v4421 = vrot.slane %v4403, 2
        %v4422 = vrot.slane %v4404, 2
        %v4423 = vrot.slane %v4405, 2
        %v4424 = vrot.slane %v4406, 2
        %v4425 = vrot.slane %v4407, 2
        %v4426 = vrot.slane %v4408, 2
        %v4427 = vrot.slane %v4409, 2
        %v4428 = vrot.slane %v4410, 2
        %v4429 = vrot.slane %v4411, 2
        %v4439 = vadd.f32 %v4376, %v4421
        %v4440 = vadd.f32 %v4377, %v4422
        %v4441 = vadd.f32 %v4378, %v4423
        %v4442 = vadd.f32 %v4379, %v4424
        %v4443 = vadd.f32 %v4380, %v4425
        %v4444 = vadd.f32 %v4381, %v4426
        %v4445 = vadd.f32 %v4382, %v4427
        %v4446 = vadd.f32 %v4383, %v4428
        %v4447 = vadd.f32 %v4384, %v4429
        %v4448 = vadd.f32 %v4385, %v4421
        %v4449 = vadd.f32 %v4386, %v4422
        %v4450 = vadd.f32 %v4387, %v4423
        %v4451 = vadd.f32 %v4388, %v4424
        %v4452 = vadd.f32 %v4389, %v4425
        %v4453 = vadd.f32 %v4390, %v4426
        %v4454 = vadd.f32 %v4391, %v4427
        %v4455 = vadd.f32 %v4392, %v4428
        %v4456 = vadd.f32 %v4393, %v4429
        %v4457 = vld [vmem:[%s4050] sm:$0x80]
        %v4458 = vld [vmem:[%s4050 + $0x8] sm:$0x80]
        %v4459 = vld [vmem:[%s4050 + $0x10] sm:$0x80]
        %v4460 = vld [vmem:[%s4050 + $0x18] sm:$0x80]
        %v4461 = vld [vmem:[%s4050 + $0x20] sm:$0x80]
        %v4462 = vld [vmem:[%s4050 + $0x28] sm:$0x80]
        %v4463 = vld [vmem:[%s4050 + $0x30] sm:$0x80]
        %v4464 = vld [vmem:[%s4050 + $0x38] sm:$0x80]
        %v4465 = vld [vmem:[%s4050 + $0x40] sm:$0x80]
        %v4466 = vld [vmem:[%s4050 + $0x48] sm:$0x3f]
        %v4467 = vld [vmem:[%s4050 + $0x50] sm:$0x3f]
        %v4468 = vld [vmem:[%s4050 + $0x58] sm:$0x3f]
        %v4469 = vld [vmem:[%s4050 + $0x60] sm:$0x3f]
        %v4470 = vld [vmem:[%s4050 + $0x68] sm:$0x3f]
        %v4471 = vld [vmem:[%s4050 + $0x70] sm:$0x3f]
        %v4472 = vld [vmem:[%s4050 + $0x78] sm:$0x3f]
        %v4473 = vld [vmem:[%s4050 + $0x80] sm:$0x3f]
        %v4474 = vld [vmem:[%s4050 + $0x88] sm:$0x3f]
        %v4475 = vmul.f32 %v4457, %v650
        %v4476 = vmul.f32 %v4458, %v654
        %v4477 = vmul.f32 %v4459, %v658
        %v4478 = vmul.f32 %v4460, %v662
        %v4479 = vmul.f32 %v4461, %v666
        %v4480 = vmul.f32 %v4462, %v670
        %v4481 = vmul.f32 %v4463, %v674
        %v4482 = vmul.f32 %v4464, %v678
        %v4483 = vmul.f32 %v4465, %v682
        %v4484 = vmul.f32 %v4466, %v650
        %v4485 = vmul.f32 %v4467, %v654
        %v4486 = vmul.f32 %v4468, %v658
        %v4487 = vmul.f32 %v4469, %v662
        %v4488 = vmul.f32 %v4470, %v666
        %v4489 = vmul.f32 %v4471, %v670
        %v4490 = vmul.f32 %v4472, %v674
        %v4491 = vmul.f32 %v4473, %v678
        %v4492 = vmul.f32 %v4474, %v682
        %v4493 = vadd.f32 %v4439, %v4475
        %v4494 = vadd.f32 %v4440, %v4476
        %v4495 = vadd.f32 %v4441, %v4477
        %v4496 = vadd.f32 %v4442, %v4478
        %v4497 = vadd.f32 %v4443, %v4479
        %v4498 = vadd.f32 %v4444, %v4480
        %v4499 = vadd.f32 %v4445, %v4481
        %v4500 = vadd.f32 %v4446, %v4482
        %v4501 = vadd.f32 %v4447, %v4483
        %v4502 = vadd.f32 %v4448, %v4484
        %v4503 = vadd.f32 %v4449, %v4485
        %v4504 = vadd.f32 %v4450, %v4486
        %v4505 = vadd.f32 %v4451, %v4487
        %v4506 = vadd.f32 %v4452, %v4488
        %v4507 = vadd.f32 %v4453, %v4489
        %v4508 = vadd.f32 %v4454, %v4490
        %v4509 = vadd.f32 %v4455, %v4491
        %v4510 = vadd.f32 %v4456, %v4492
        %v4511 = vld [vmem:[%s4050 + $0x48] sm:$0x7f]
        %v4512 = vld [vmem:[%s4050 + $0x50] sm:$0x7f]
        %v4513 = vld [vmem:[%s4050 + $0x58] sm:$0x7f]
        %v4514 = vld [vmem:[%s4050 + $0x60] sm:$0x7f]
        %v4515 = vld [vmem:[%s4050 + $0x68] sm:$0x7f]
        %v4516 = vld [vmem:[%s4050 + $0x70] sm:$0x7f]
        %v4517 = vld [vmem:[%s4050 + $0x78] sm:$0x7f]
        %v4518 = vld [vmem:[%s4050 + $0x80] sm:$0x7f]
        %v4519 = vld [vmem:[%s4050 + $0x88] sm:$0x7f]
        %v4520 = vmul.f32 %v4511, %v713
        %v4521 = vmul.f32 %v4512, %v717
        %v4522 = vmul.f32 %v4513, %v721
        %v4523 = vmul.f32 %v4514, %v725
        %v4524 = vmul.f32 %v4515, %v729
        %v4525 = vmul.f32 %v4516, %v733
        %v4526 = vmul.f32 %v4517, %v737
        %v4527 = vmul.f32 %v4518, %v741
        %v4528 = vmul.f32 %v4519, %v745
        %v4538 = vrot.slane %v4520, 1
        %v4539 = vrot.slane %v4521, 1
        %v4540 = vrot.slane %v4522, 1
        %v4541 = vrot.slane %v4523, 1
        %v4542 = vrot.slane %v4524, 1
        %v4543 = vrot.slane %v4525, 1
        %v4544 = vrot.slane %v4526, 1
        %v4545 = vrot.slane %v4527, 1
        %v4546 = vrot.slane %v4528, 1
        %v4556 = vadd.f32 %v4493, %v4538
        %v4557 = vadd.f32 %v4494, %v4539
        %v4558 = vadd.f32 %v4495, %v4540
        %v4559 = vadd.f32 %v4496, %v4541
        %v4560 = vadd.f32 %v4497, %v4542
        %v4561 = vadd.f32 %v4498, %v4543
        %v4562 = vadd.f32 %v4499, %v4544
        %v4563 = vadd.f32 %v4500, %v4545
        %v4564 = vadd.f32 %v4501, %v4546
        %v4565 = vadd.f32 %v4502, %v4538
        %v4566 = vadd.f32 %v4503, %v4539
        %v4567 = vadd.f32 %v4504, %v4540
        %v4568 = vadd.f32 %v4505, %v4541
        %v4569 = vadd.f32 %v4506, %v4542
        %v4570 = vadd.f32 %v4507, %v4543
        %v4571 = vadd.f32 %v4508, %v4544
        %v4572 = vadd.f32 %v4509, %v4545
        %v4573 = vadd.f32 %v4510, %v4546
        %v4574 = vld [vmem:[%s4050 + $0x48] sm:$0xfe]
        %v4575 = vld [vmem:[%s4050 + $0x50] sm:$0xfe]
        %v4576 = vld [vmem:[%s4050 + $0x58] sm:$0xfe]
        %v4577 = vld [vmem:[%s4050 + $0x60] sm:$0xfe]
        %v4578 = vld [vmem:[%s4050 + $0x68] sm:$0xfe]
        %v4579 = vld [vmem:[%s4050 + $0x70] sm:$0xfe]
        %v4580 = vld [vmem:[%s4050 + $0x78] sm:$0xfe]
        %v4581 = vld [vmem:[%s4050 + $0x80] sm:$0xfe]
        %v4582 = vld [vmem:[%s4050 + $0x88] sm:$0xfe]
        %v4583 = vmul.f32 %v4574, %v812
        %v4584 = vmul.f32 %v4575, %v816
        %v4585 = vmul.f32 %v4576, %v820
        %v4586 = vmul.f32 %v4577, %v824
        %v4587 = vmul.f32 %v4578, %v828
        %v4588 = vmul.f32 %v4579, %v832
        %v4589 = vmul.f32 %v4580, %v836
        %v4590 = vmul.f32 %v4581, %v840
        %v4591 = vmul.f32 %v4582, %v844
        %v4601 = vrot.slane %v4583, 2
        %v4602 = vrot.slane %v4584, 2
        %v4603 = vrot.slane %v4585, 2
        %v4604 = vrot.slane %v4586, 2
        %v4605 = vrot.slane %v4587, 2
        %v4606 = vrot.slane %v4588, 2
        %v4607 = vrot.slane %v4589, 2
        %v4608 = vrot.slane %v4590, 2
        %v4609 = vrot.slane %v4591, 2
        %v4619 = vadd.f32 %v4556, %v4601
        %v4620 = vadd.f32 %v4557, %v4602
        %v4621 = vadd.f32 %v4558, %v4603
        %v4622 = vadd.f32 %v4559, %v4604
        %v4623 = vadd.f32 %v4560, %v4605
        %v4624 = vadd.f32 %v4561, %v4606
        %v4625 = vadd.f32 %v4562, %v4607
        %v4626 = vadd.f32 %v4563, %v4608
        %v4627 = vadd.f32 %v4564, %v4609
        %v4628 = vadd.f32 %v4565, %v4601
        %v4629 = vadd.f32 %v4566, %v4602
        %v4630 = vadd.f32 %v4567, %v4603
        %v4631 = vadd.f32 %v4568, %v4604
        %v4632 = vadd.f32 %v4569, %v4605
        %v4633 = vadd.f32 %v4570, %v4606
        %v4634 = vadd.f32 %v4571, %v4607
        %v4635 = vadd.f32 %v4572, %v4608
        %v4636 = vadd.f32 %v4573, %v4609
        %v4655 = vrot.slane %v4619, 7
        %v4656 = vrot.slane %v4628, 7
        %v4657 = vsel %vm1206, %v4655, %v4656
        %v4658 = vrot.slane %v4620, 7
        %v4659 = vrot.slane %v4629, 7
        %v4660 = vsel %vm1206, %v4658, %v4659
        %v4661 = vrot.slane %v4621, 7
        %v4662 = vrot.slane %v4630, 7
        %v4663 = vsel %vm1206, %v4661, %v4662
        %v4664 = vrot.slane %v4622, 7
        %v4665 = vrot.slane %v4631, 7
        %v4666 = vsel %vm1206, %v4664, %v4665
        %v4667 = vrot.slane %v4623, 7
        %v4668 = vrot.slane %v4632, 7
        %v4669 = vsel %vm1206, %v4667, %v4668
        %v4670 = vrot.slane %v4624, 7
        %v4671 = vrot.slane %v4633, 7
        %v4672 = vsel %vm1206, %v4670, %v4671
        %v4673 = vrot.slane %v4625, 7
        %v4674 = vrot.slane %v4634, 7
        %v4675 = vsel %vm1206, %v4673, %v4674
        %v4676 = vrot.slane %v4626, 7
        %v4677 = vrot.slane %v4635, 7
        %v4678 = vsel %vm1206, %v4676, %v4677
        %v4679 = vrot.slane %v4627, 7
        %v4680 = vrot.slane %v4636, 7
        %v4681 = vsel %vm1206, %v4679, %v4680
        %s4691 = scalar_lea.vmem %s355, 432 [#allocation5]
        %4692 = vst [vmem:[%s4691] sm:$0x7f] %v4657
        %4693 = vst [vmem:[%s4691 + $0x8] sm:$0x7f] %v4660
        %4694 = vst [vmem:[%s4691 + $0x10] sm:$0x7f] %v4663
        %4695 = vst [vmem:[%s4691 + $0x18] sm:$0x7f] %v4666
        %4696 = vst [vmem:[%s4691 + $0x20] sm:$0x7f] %v4669
        %4697 = vst [vmem:[%s4691 + $0x28] sm:$0x7f] %v4672
        %4698 = vst [vmem:[%s4691 + $0x30] sm:$0x7f] %v4675
        %4699 = vst [vmem:[%s4691 + $0x38] sm:$0x7f] %v4678
        %4700 = vst [vmem:[%s4691 + $0x40] sm:$0x7f] %v4681
        %s4701 = sand.u32 %s73, 1
        %s4702 = sand.u32 %s73, 1
        %s4703 = smul.addr %s4702, 504
        %s4704 = scalar_lea.vmem [#allocation5], %s4703
        // Predicated region
        $region75: #{depthwise_conv3x3.1} parent=65 // pred_check
          %p4705 = pneg %p83
        $region76: #{depthwise_conv3x3.1} parent=65 // pred_check_branch
          %4707 = sbr.rel (%p4705) target = $region78
        $region77: #{depthwise_conv3x3.1} parent=65 // pred_region
          %s4708 = smul.u32 9, %s13
          %s4709 = smul.addr %s4708, 8
          %s4710 = scalar_lea.vmem %s2, %s4709
          // Predicated region
          $region79: #{depthwise_conv3x3.1} parent=77 // pred_check
            _
          $region80: #{depthwise_conv3x3.1} parent=77 // pred_check_branch
            %4712 = sbr.rel (0) target = $region82
          $region81: #{depthwise_conv3x3.1} parent=77 // pred_region
            // Predicated region
            $region83: #{depthwise_conv3x3.1} parent=81 // pred_check
              _
            $region84: #{depthwise_conv3x3.1} parent=81 // pred_check_branch
              %4714 = sbr.rel (0) target = $region86
            $region85: #{depthwise_conv3x3.1} parent=81 // pred_region
              loop: start=0, step=1, limit=1
              $region87: #{depthwise_conv3x3.1} parent=85 // loop_pre_header
                _
              $region88: #{depthwise_conv3x3.1} parent=85 // loop_header
                %s4716 = sphi 0, %s4720
                %p4717 = scmp.ge.s32.totalorder %s4716, 1
                %s4721 = sphi %s4704, %s4704
                %s4722 = sphi %s4710, %s4710
              $region89: #{depthwise_conv3x3.1} parent=85 // loop_header_branch
                %4719 = sbr.rel (%p4717) target = $region93
              $region90: #{depthwise_conv3x3.1} parent=85 // loop_body
                %v4723 = vld [vmem:[%s4721] sm:$0xff]
                %4724 = vst [vmem:[%s4722] sm:$0xff] %v4723
                %v4725 = vld [vmem:[%s4721 + $0x8] sm:$0xff]
                %4726 = vst [vmem:[%s4722 + $0x8] sm:$0xff] %v4725
                %v4727 = vld [vmem:[%s4721 + $0x10] sm:$0xff]
                %4728 = vst [vmem:[%s4722 + $0x10] sm:$0xff] %v4727
                %v4729 = vld [vmem:[%s4721 + $0x18] sm:$0xff]
                %4730 = vst [vmem:[%s4722 + $0x18] sm:$0xff] %v4729
                %v4731 = vld [vmem:[%s4721 + $0x20] sm:$0xff]
                %4732 = vst [vmem:[%s4722 + $0x20] sm:$0xff] %v4731
                %v4733 = vld [vmem:[%s4721 + $0x28] sm:$0xff]
                %4734 = vst [vmem:[%s4722 + $0x28] sm:$0xff] %v4733
                %v4735 = vld [vmem:[%s4721 + $0x30] sm:$0xff]
                %4736 = vst [vmem:[%s4722 + $0x30] sm:$0xff] %v4735
                %v4737 = vld [vmem:[%s4721 + $0x38] sm:$0xff]
                %4738 = vst [vmem:[%s4722 + $0x38] sm:$0xff] %v4737
                %v4739 = vld [vmem:[%s4721 + $0x40] sm:$0xff]
                %4740 = vst [vmem:[%s4722 + $0x40] sm:$0xff] %v4739
                %v4741 = vld [vmem:[%s4721 + $0x48] sm:$0xff]
                %4742 = vst [vmem:[%s4722 + $0x90] sm:$0xff] %v4741
                %v4743 = vld [vmem:[%s4721 + $0x50] sm:$0xff]
                %4744 = vst [vmem:[%s4722 + $0x98] sm:$0xff] %v4743
                %v4745 = vld [vmem:[%s4721 + $0x58] sm:$0xff]
                %4746 = vst [vmem:[%s4722 + $0xa0] sm:$0xff] %v4745
                %v4747 = vld [vmem:[%s4721 + $0x60] sm:$0xff]
                %4748 = vst [vmem:[%s4722 + $0xa8] sm:$0xff] %v4747
                %v4749 = vld [vmem:[%s4721 + $0x68] sm:$0xff]
                %4750 = vst [vmem:[%s4722 + $0xb0] sm:$0xff] %v4749
                %v4751 = vld [vmem:[%s4721 + $0x70] sm:$0xff]
                %4752 = vst [vmem:[%s4722 + $0xb8] sm:$0xff] %v4751
                %v4753 = vld [vmem:[%s4721 + $0x78] sm:$0xff]
                %4754 = vst [vmem:[%s4722 + $0xc0] sm:$0xff] %v4753
                %v4755 = vld [vmem:[%s4721 + $0x80] sm:$0xff]
                %4756 = vst [vmem:[%s4722 + $0xc8] sm:$0xff] %v4755
                %v4757 = vld [vmem:[%s4721 + $0x88] sm:$0xff]
                %4758 = vst [vmem:[%s4722 + $0xd0] sm:$0xff] %v4757
                %v4759 = vld [vmem:[%s4721 + $0x90] sm:$0xff]
                %4760 = vst [vmem:[%s4722 + $0x120] sm:$0xff] %v4759
                %v4761 = vld [vmem:[%s4721 + $0x98] sm:$0xff]
                %4762 = vst [vmem:[%s4722 + $0x128] sm:$0xff] %v4761
                %v4763 = vld [vmem:[%s4721 + $0xa0] sm:$0xff]
                %4764 = vst [vmem:[%s4722 + $0x130] sm:$0xff] %v4763
                %v4765 = vld [vmem:[%s4721 + $0xa8] sm:$0xff]
                %4766 = vst [vmem:[%s4722 + $0x138] sm:$0xff] %v4765
                %v4767 = vld [vmem:[%s4721 + $0xb0] sm:$0xff]
                %4768 = vst [vmem:[%s4722 + $0x140] sm:$0xff] %v4767
                %v4769 = vld [vmem:[%s4721 + $0xb8] sm:$0xff]
                %4770 = vst [vmem:[%s4722 + $0x148] sm:$0xff] %v4769
                %v4771 = vld [vmem:[%s4721 + $0xc0] sm:$0xff]
                %4772 = vst [vmem:[%s4722 + $0x150] sm:$0xff] %v4771
                %v4773 = vld [vmem:[%s4721 + $0xc8] sm:$0xff]
                %4774 = vst [vmem:[%s4722 + $0x158] sm:$0xff] %v4773
                %v4775 = vld [vmem:[%s4721 + $0xd0] sm:$0xff]
                %4776 = vst [vmem:[%s4722 + $0x160] sm:$0xff] %v4775
                %v4777 = vld [vmem:[%s4721 + $0xd8] sm:$0xff]
                %4778 = vst [vmem:[%s4722 + $0x1b0] sm:$0xff] %v4777
                %v4779 = vld [vmem:[%s4721 + $0xe0] sm:$0xff]
                %4780 = vst [vmem:[%s4722 + $0x1b8] sm:$0xff] %v4779
                %v4781 = vld [vmem:[%s4721 + $0xe8] sm:$0xff]
                %4782 = vst [vmem:[%s4722 + $0x1c0] sm:$0xff] %v4781
                %v4783 = vld [vmem:[%s4721 + $0xf0] sm:$0xff]
                %4784 = vst [vmem:[%s4722 + $0x1c8] sm:$0xff] %v4783
                %v4785 = vld [vmem:[%s4721 + $0xf8] sm:$0xff]
                %4786 = vst [vmem:[%s4722 + $0x1d0] sm:$0xff] %v4785
                %v4787 = vld [vmem:[%s4721 + $0x100] sm:$0xff]
                %4788 = vst [vmem:[%s4722 + $0x1d8] sm:$0xff] %v4787
                %v4789 = vld [vmem:[%s4721 + $0x108] sm:$0xff]
                %4790 = vst [vmem:[%s4722 + $0x1e0] sm:$0xff] %v4789
                %v4791 = vld [vmem:[%s4721 + $0x110] sm:$0xff]
                %4792 = vst [vmem:[%s4722 + $0x1e8] sm:$0xff] %v4791
                %v4793 = vld [vmem:[%s4721 + $0x118] sm:$0xff]
                %4794 = vst [vmem:[%s4722 + $0x1f0] sm:$0xff] %v4793
                %v4795 = vld [vmem:[%s4721 + $0x120] sm:$0xff]
                %4796 = vst [vmem:[%s4722 + $0x240] sm:$0xff] %v4795
                %v4797 = vld [vmem:[%s4721 + $0x128] sm:$0xff]
                %4798 = vst [vmem:[%s4722 + $0x248] sm:$0xff] %v4797
                %v4799 = vld [vmem:[%s4721 + $0x130] sm:$0xff]
                %4800 = vst [vmem:[%s4722 + $0x250] sm:$0xff] %v4799
                %v4801 = vld [vmem:[%s4721 + $0x138] sm:$0xff]
                %4802 = vst [vmem:[%s4722 + $0x258] sm:$0xff] %v4801
                %v4803 = vld [vmem:[%s4721 + $0x140] sm:$0xff]
                %4804 = vst [vmem:[%s4722 + $0x260] sm:$0xff] %v4803
                %v4805 = vld [vmem:[%s4721 + $0x148] sm:$0xff]
                %4806 = vst [vmem:[%s4722 + $0x268] sm:$0xff] %v4805
                %v4807 = vld [vmem:[%s4721 + $0x150] sm:$0xff]
                %4808 = vst [vmem:[%s4722 + $0x270] sm:$0xff] %v4807
                %v4809 = vld [vmem:[%s4721 + $0x158] sm:$0xff]
                %4810 = vst [vmem:[%s4722 + $0x278] sm:$0xff] %v4809
                %v4811 = vld [vmem:[%s4721 + $0x160] sm:$0xff]
                %4812 = vst [vmem:[%s4722 + $0x280] sm:$0xff] %v4811
                %v4813 = vld [vmem:[%s4721 + $0x168] sm:$0xff]
                %4814 = vst [vmem:[%s4722 + $0x2d0] sm:$0xff] %v4813
                %v4815 = vld [vmem:[%s4721 + $0x170] sm:$0xff]
                %4816 = vst [vmem:[%s4722 + $0x2d8] sm:$0xff] %v4815
                %v4817 = vld [vmem:[%s4721 + $0x178] sm:$0xff]
                %4818 = vst [vmem:[%s4722 + $0x2e0] sm:$0xff] %v4817
                %v4819 = vld [vmem:[%s4721 + $0x180] sm:$0xff]
                %4820 = vst [vmem:[%s4722 + $0x2e8] sm:$0xff] %v4819
                %v4821 = vld [vmem:[%s4721 + $0x188] sm:$0xff]
                %4822 = vst [vmem:[%s4722 + $0x2f0] sm:$0xff] %v4821
                %v4823 = vld [vmem:[%s4721 + $0x190] sm:$0xff]
                %4824 = vst [vmem:[%s4722 + $0x2f8] sm:$0xff] %v4823
                %v4825 = vld [vmem:[%s4721 + $0x198] sm:$0xff]
                %4826 = vst [vmem:[%s4722 + $0x300] sm:$0xff] %v4825
                %v4827 = vld [vmem:[%s4721 + $0x1a0] sm:$0xff]
                %4828 = vst [vmem:[%s4722 + $0x308] sm:$0xff] %v4827
                %v4829 = vld [vmem:[%s4721 + $0x1a8] sm:$0xff]
                %4830 = vst [vmem:[%s4722 + $0x310] sm:$0xff] %v4829
                %v4831 = vld [vmem:[%s4721 + $0x1b0] sm:$0xff]
                %4832 = vst [vmem:[%s4722 + $0x360] sm:$0xff] %v4831
                %v4833 = vld [vmem:[%s4721 + $0x1b8] sm:$0xff]
                %4834 = vst [vmem:[%s4722 + $0x368] sm:$0xff] %v4833
                %v4835 = vld [vmem:[%s4721 + $0x1c0] sm:$0xff]
                %4836 = vst [vmem:[%s4722 + $0x370] sm:$0xff] %v4835
                %v4837 = vld [vmem:[%s4721 + $0x1c8] sm:$0xff]
                %4838 = vst [vmem:[%s4722 + $0x378] sm:$0xff] %v4837
                %v4839 = vld [vmem:[%s4721 + $0x1d0] sm:$0xff]
                %4840 = vst [vmem:[%s4722 + $0x380] sm:$0xff] %v4839
                %v4841 = vld [vmem:[%s4721 + $0x1d8] sm:$0xff]
                %4842 = vst [vmem:[%s4722 + $0x388] sm:$0xff] %v4841
                %v4843 = vld [vmem:[%s4721 + $0x1e0] sm:$0xff]
                %4844 = vst [vmem:[%s4722 + $0x390] sm:$0xff] %v4843
                %v4845 = vld [vmem:[%s4721 + $0x1e8] sm:$0xff]
                %4846 = vst [vmem:[%s4722 + $0x398] sm:$0xff] %v4845
                %v4847 = vld [vmem:[%s4721 + $0x1f0] sm:$0xff]
                %4848 = vst [vmem:[%s4722 + $0x3a0] sm:$0xff] %v4847
              $region91: #{depthwise_conv3x3.1} parent=85 // loop_footer
                %s4720 = sadd.s32 1, %s4716
              $region92: #{depthwise_conv3x3.1} parent=85 // loop_footer_branch
                %4715 = sbr.rel target = $region88
              $region93: #{depthwise_conv3x3.1} parent=85 // loop_exit
                _
            $region86: #{depthwise_conv3x3.1} parent=81 // pred_fallthru
              _
            // Predicated region
            $region94: #{depthwise_conv3x3.1} parent=81 // pred_check
              _
            $region95: #{depthwise_conv3x3.1} parent=81 // pred_check_branch
              %4850 = sbr.rel target = $region97
            $region96: #{depthwise_conv3x3.1} parent=81 // pred_region
              _
            $region97: #{depthwise_conv3x3.1} parent=81 // pred_fallthru
              _
          $region82: #{depthwise_conv3x3.1} parent=77 // pred_fallthru
            _
          %4851 = vnop
        $region78: #{depthwise_conv3x3.1} parent=65 // pred_fallthru
          _
      $region66: #{depthwise_conv3x3.1} parent=5 // pred_fallthru
        _
      %p4852 = scmp.le.s32.totalorder 2, %s8
      // Predicated region
      $region98: #{depthwise_conv3x3.1} parent=5 // pred_check
        %p4853 = pneg %p4852
      $region99: #{depthwise_conv3x3.1} parent=5 // pred_check_branch
        %4855 = sbr.rel (%p4853) target = $region101
      $region100: #{depthwise_conv3x3.1} parent=5 // pred_region
        %s4856 = ssub.s32 %s8, 2
        // Predicated region
        $region102: #{depthwise_conv3x3.1} parent=100 // pred_check
          %p4857 = pneg %p89
        $region103: #{depthwise_conv3x3.1} parent=100 // pred_check_branch
          %4859 = sbr.rel (%p4857) target = $region105
        $region104: #{depthwise_conv3x3.1} parent=100 // pred_region
          %s4860 = sand.u32 %s74, 1
          %s4861 = sand.u32 %s74, 1
          %s4862 = smul.addr %s4861, 504
          %s4863 = scalar_lea.vmem [#allocation5], %s4862
        $region105: #{depthwise_conv3x3.1} parent=100 // pred_fallthru
          _
      $region101: #{depthwise_conv3x3.1} parent=5 // pred_fallthru
        _
    $region6: #{depthwise_conv3x3.1} parent=1 // loop_footer
      %s12 = sadd.s32 1, %s8
    $region7: #{depthwise_conv3x3.1} parent=1 // loop_footer_branch
      %7 = sbr.rel target = $region3
    $region8: #{depthwise_conv3x3.1} parent=1 // loop_exit
      _

</llo_original>
